<compile_context>
chip_gen: v7x
topology: tpu7x:2x2x1
jax: 0.10.0
libtpu: 0.0.40
codegen_flags: <defaults>
</compile_context>

<pallas_src>
import math
from functools import partial

import jax
import jax.numpy as jnp
from jax import lax
from jax.experimental import pallas as pl
from jax.experimental.pallas import tpu as pltpu


def _round_up(x, m):
    return -(-x // m) * m


def _tpu_generation():
    try:
        kind = jax.devices()[0].device_kind.lower()
    except Exception:
        return None
    for tag in ("v5", "v6", "v7"):
        if tag in kind:
            return tag
    return None


def _default_vmem_limit_bytes():
    # v5e / v6e have 128 MiB of VMEM per core; v7x only 64 MiB per TensorCore.
    gen = _tpu_generation()
    if gen in ("v5", "v6"):
        return 96 * 1024 * 1024
    return 48 * 1024 * 1024


def _default_attn_tiles():
    # Bigger K/V tiles on v5e/v6e (plenty of VMEM, fewer K/V refetches and grid steps);
    # conservative tiles that fit v7x's 64 MiB per-core VMEM otherwise.
    gen = _tpu_generation()
    if gen in ("v5", "v6"):
        return 512, 1024
    return 256, 512


def _pick_tile(n, target, align):
    """Full extent if it fits the target, else the largest align-multiple divisor."""
    if n <= target:
        return n
    t = (target // align) * align
    while t >= align:
        if n % t == 0:
            return t
        t -= align
    return (target // align) * align   # no divisor: caller pads n up to a multiple


# ----------------------------------------------------------------------------
# Tiled matmul + bias (qkv projection and output projection)
# ----------------------------------------------------------------------------
def _matmul_bias_kernel(x_ref, w_ref, b_ref, o_ref, acc_ref):
    @pl.when(pl.program_id(2) == 0)
    def _():
        acc_ref[...] = jnp.zeros(acc_ref.shape, acc_ref.dtype)

    # bf16 MXU feed (native MXU rate on v5e/v6e/v7x), f32 accumulation.
    acc_ref[...] += jnp.dot(x_ref[...].astype(jnp.bfloat16),
                            w_ref[...].astype(jnp.bfloat16),
                            preferred_element_type=jnp.float32)

    @pl.when(pl.program_id(2) == pl.num_programs(2) - 1)
    def _():
        o_ref[...] = (acc_ref[...] + b_ref[...].astype(jnp.float32)).astype(o_ref.dtype)


def linear_pallas(x, w, b, *, out_dtype=None, tm=512, tn=512, tk=512):
    """x: (M, K), w: (K, N), b: (N,)  ->  (M, N) = x @ w + b  (tiled + pipelined)."""
    M, K = x.shape
    N = w.shape[1]
    out_dtype = out_dtype or x.dtype
    tm = _pick_tile(M, tm, 8)
    tn = _pick_tile(N, tn, 128)
    tk = _pick_tile(K, tk, 128)
    Mp, Kp, Np = _round_up(M, tm), _round_up(K, tk), _round_up(N, tn)

    # Only pads when no aligned divisor exists (avoids extra HBM passes in the
    # common aligned case).
    xp = x if (Mp, Kp) == (M, K) else jnp.pad(x, ((0, Mp - M), (0, Kp - K)))
    wp = w if (Kp, Np) == (K, N) else jnp.pad(w, ((0, Kp - K), (0, Np - N)))
    bp = (b if Np == N else jnp.pad(b, (0, Np - N))).reshape(1, Np)

    grid = (Mp // tm, Np // tn, Kp // tk)
    out = pl.pallas_call(
        _matmul_bias_kernel,
        out_shape=jax.ShapeDtypeStruct((Mp, Np), out_dtype),
        grid_spec=pltpu.PrefetchScalarGridSpec(
            num_scalar_prefetch=0,
            grid=grid,
            in_specs=[
                pl.BlockSpec((tm, tk), lambda i, j, k: (i, k)),
                pl.BlockSpec((tk, tn), lambda i, j, k: (k, j)),
                pl.BlockSpec((1, tn), lambda i, j, k: (0, j)),
            ],
            out_specs=pl.BlockSpec((tm, tn), lambda i, j, k: (i, j)),
            scratch_shapes=[pltpu.VMEM((tm, tn), jnp.float32)],
        ),
        compiler_params=pltpu.CompilerParams(
            dimension_semantics=("parallel", "parallel", "arbitrary"),
            vmem_limit_bytes=_default_vmem_limit_bytes(),
        ),
        cost_estimate=pl.CostEstimate(
            flops=2 * M * K * N,
            transcendentals=0,
            bytes_accessed=int(x.dtype.itemsize * M * K + w.dtype.itemsize * K * N
                               + jnp.dtype(out_dtype).itemsize * M * N),
        ),
    )(xp, wp, bp)
    if (Mp, Np) != (M, N):
        out = out[:M, :N]
    return out


# ----------------------------------------------------------------------------
# Flash-style attention reading channel-packed q/k/v tiles (heads split in VMEM).
# ----------------------------------------------------------------------------
def _flash_attn_kernel(q_ref, k_ref, v_ref, o_ref, m_sc, l_sc, acc_sc, *,
                       num_heads, sk_valid, block_k, mask_keys):
    ki = pl.program_id(2)

    @pl.when(ki == 0)
    def _():
        m_sc[...] = jnp.full(m_sc.shape, -jnp.inf, m_sc.dtype)
        l_sc[...] = jnp.zeros(l_sc.shape, l_sc.dtype)
        acc_sc[...] = jnp.zeros(acc_sc.shape, acc_sc.dtype)

    # bf16 MXU operands; all accumulation stays in f32.
    q = q_ref[0].astype(jnp.bfloat16)          # (tq, nh*hd), 1/sqrt(hd) already folded in
    k = k_ref[0].astype(jnp.bfloat16)          # (tk, nh*hd)
    v = v_ref[0].astype(jnp.bfloat16)          # (tk, nh*hd)
    tq = q.shape[0]
    hd = q.shape[-1] // num_heads

    if mask_keys:
        key_idx = ki * block_k + lax.broadcasted_iota(jnp.int32, (tq, block_k), 1)
        key_ok = key_idx < sk_valid

    # Per-head loop keeps the s/p intermediates at (tq, tk) only (VMEM-friendly on v7x).
    for h in range(num_heads):
        q_h = q[:, h * hd:(h + 1) * hd]        # lane slices of the channel-packed tiles
        k_h = k[:, h * hd:(h + 1) * hd]
        v_h = v[:, h * hd:(h + 1) * hd]

        # TODO(synk): feed K with head_dim on the sublane axis ((hd, tk) RHS) to skip
        # the implicit RHS transpose in the contraction below.
        s = lax.dot_general(q_h, k_h, (((1,), (1,)), ((), ())),
                            preferred_element_type=jnp.float32)       # (tq, tk) f32
        if mask_keys:
            s = jnp.where(key_ok, s, -1e30)

        m_prev = m_sc[h]                                              # (tq, 1)
        m_new = jnp.maximum(m_prev, jnp.max(s, axis=-1, keepdims=True))
        alpha = jnp.exp(m_prev - m_new)
        p = jnp.exp(s - m_new)                                        # (tq, tk) f32
        l_sc[h] = alpha * l_sc[h] + jnp.sum(p, axis=-1, keepdims=True)
        acc_sc[h] = alpha * acc_sc[h] + lax.dot_general(
            p.astype(jnp.bfloat16), v_h, (((1,), (0,)), ((), ())),
            preferred_element_type=jnp.float32)                       # (tq, hd)
        m_sc[h] = m_new

    @pl.when(ki == pl.num_programs(2) - 1)
    def _():
        # Normalize per head, pack all heads along lanes, single dense HBM store.
        parts = []
        for h in range(num_heads):
            inv_l = pl.reciprocal(l_sc[h], approx=True)
            parts.append(acc_sc[h] * inv_l)
        o_ref[0] = jnp.concatenate(parts, axis=-1).astype(o_ref.dtype)


def _q_block_map(blk):
    def index_map(b, qi, ki):
        return (b, qi, blk)
    return index_map


def _kv_block_map(blk):
    def index_map(b, qi, ki):
        return (b, ki, blk)
    return index_map


def attention_pallas(q, k, v, *, num_heads, dim_out, q_blk=0, k_blk=0, v_blk=0,
                     tq=None, tk=None, out_dtype=None):
    """q: (B, Sq, Cq), k/v: (B, Sk, Ckv); channel block {q,k,v}_blk of width dim_out
    holds the respective channel-packed heads.  Returns (B, Sq, dim_out)."""
    B, Sq, _ = q.shape
    Sk = k.shape[1]
    head_dim = dim_out // num_heads
    out_dtype = out_dtype or q.dtype

    d_tq, d_tk = _default_attn_tiles()
    tq = tq or d_tq
    tk = tk or d_tk
    if Sq <= tq:
        tq = _round_up(Sq, 8)
    if Sk <= tk:
        tk = _round_up(Sk, 8)
    Sq_p, Sk_p = _round_up(Sq, tq), _round_up(Sk, tk)
    if Sq_p != Sq:
        q = jnp.pad(q, ((0, 0), (0, Sq_p - Sq), (0, 0)))
    if Sk_p != Sk:
        k = jnp.pad(k, ((0, 0), (0, Sk_p - Sk), (0, 0)))
        v = jnp.pad(v, ((0, 0), (0, Sk_p - Sk), (0, 0)))
    mask_keys = Sk_p != Sk

    grid = (B, Sq_p // tq, Sk_p // tk)
    kernel = partial(_flash_attn_kernel, num_heads=num_heads,
                     sk_valid=Sk, block_k=tk, mask_keys=mask_keys)

    out = pl.pallas_call(
        kernel,
        out_shape=jax.ShapeDtypeStruct((B, Sq_p, dim_out), out_dtype),
        grid_spec=pltpu.PrefetchScalarGridSpec(
            num_scalar_prefetch=0,
            grid=grid,
            in_specs=[
                pl.BlockSpec((1, tq, dim_out), _q_block_map(q_blk)),
                pl.BlockSpec((1, tk, dim_out), _kv_block_map(k_blk)),
                pl.BlockSpec((1, tk, dim_out), _kv_block_map(v_blk)),
            ],
            out_specs=pl.BlockSpec((1, tq, dim_out), _q_block_map(0)),
            scratch_shapes=[
                pltpu.VMEM((num_heads, tq, 1), jnp.float32),          # running max m
                pltpu.VMEM((num_heads, tq, 1), jnp.float32),          # running sum l
                pltpu.VMEM((num_heads, tq, head_dim), jnp.float32),   # output accumulator
            ],
        ),
        compiler_params=pltpu.CompilerParams(
            dimension_semantics=("parallel", "parallel", "arbitrary"),
            vmem_limit_bytes=_default_vmem_limit_bytes(),
        ),
        cost_estimate=pl.CostEstimate(
            flops=4 * B * num_heads * Sq_p * Sk_p * head_dim,
            transcendentals=B * num_heads * Sq_p * Sk_p,
            bytes_accessed=int(q.dtype.itemsize
                               * (2 * B * Sq_p * dim_out + 2 * B * Sk_p * dim_out)),
        ),
    )(q, k, v)
    if Sq_p != Sq:
        out = out[:, :Sq, :]
    return out


# ----------------------------------------------------------------------------
# Module wrapper (glue in plain JAX)
# ----------------------------------------------------------------------------
def init_params(key, dim, dim_out):
    """Deterministic init mirroring nn.Linear shapes (weights stored as W^T)."""
    k1, k2, k3, k4 = jax.random.split(key, 4)
    return dict(
        w_qkv=jax.random.normal(k1, (dim, 3 * dim_out), jnp.float32) * 0.02,
        b_qkv=jax.random.normal(k2, (3 * dim_out,), jnp.float32) * 0.02,
        w_proj=jax.random.normal(k3, (dim_out, dim_out), jnp.float32) * 0.02,
        b_proj=jax.random.normal(k4, (dim_out,), jnp.float32) * 0.02,
    )


def max_pool_2x2(x):
    """do_pool with nn.MaxPool2d(kernel_size=2, stride=2) on NHWC input."""
    # TODO(synk): tiny glue op kept as lax.reduce_window rather than a Pallas kernel.
    return lax.reduce_window(x, -jnp.inf, lax.max,
                             window_dimensions=(1, 2, 2, 1),
                             window_strides=(1, 2, 2, 1),
                             padding="VALID")


@partial(jax.jit, static_argnames=("num_heads", "use_q_pool"))
def multi_scale_attention(x, params, num_heads, use_q_pool=False):
    """Forward pass of MultiScaleAttention.  x: (B, H, W, dim) float32."""
    B, H, W, dim = x.shape
    dim_out = params["b_proj"].shape[0]
    assert dim_out % num_heads == 0
    head_dim = dim_out // num_heads
    scale = 1.0 / math.sqrt(head_dim)

    # Fold the SDPA 1/sqrt(head_dim) scale into the q columns of the qkv projection
    # (free; commutes with the optional max-pool since the scale is positive).
    col_scale = jnp.concatenate([
        jnp.full((dim_out,), scale, dtype=params["w_qkv"].dtype),
        jnp.ones((2 * dim_out,), dtype=params["w_qkv"].dtype)])
    w_qkv = (params["w_qkv"] * col_scale).astype(jnp.bfloat16)   # bf16 weights for the MXU
    b_qkv = params["b_qkv"] * col_scale
    w_proj = params["w_proj"].astype(jnp.bfloat16)
    b_proj = params["b_proj"]

    S = H * W
    qkv = linear_pallas(x.reshape(B * S, dim), w_qkv, b_qkv, out_dtype=x.dtype)
    qkv = qkv.reshape(B, S, 3 * dim_out)   # channels: [q heads | k heads | v heads]
    # TODO(synk): optionally keep the qkv/attention slabs in bf16 in HBM to halve DMA bytes.

    # Channel-blocked reads of the slab need a 128-lane-aligned block width.
    aligned = dim_out % 128 == 0

    Hq, Wq = H, W
    if use_q_pool:
        q_img = qkv[:, :, :dim_out].reshape(B, H, W, dim_out)
        q_img = max_pool_2x2(q_img)
        Hq, Wq = q_img.shape[1], q_img.shape[2]
        q_arr, q_blk = q_img.reshape(B, Hq * Wq, dim_out), 0
    elif aligned:
        q_arr, q_blk = qkv, 0              # read q tiles straight out of the fused slab
    else:
        q_arr, q_blk = qkv[:, :, :dim_out], 0

    if aligned:
        k_arr, k_blk = qkv, 1              # read k/v tiles straight out of the fused slab
        v_arr, v_blk = qkv, 2
    else:
        # TODO(synk): unaligned dim_out falls back to XLA channel slices (still no head transposes).
        k_arr, k_blk = qkv[:, :, dim_out:2 * dim_out], 0
        v_arr, v_blk = qkv[:, :, 2 * dim_out:], 0

    o = attention_pallas(q_arr, k_arr, v_arr, num_heads=num_heads, dim_out=dim_out,
                         q_blk=q_blk, k_blk=k_blk, v_blk=v_blk)       # (B, Sq, dim_out)
    out = linear_pallas(o.reshape(B * Hq * Wq, dim_out), w_proj, b_proj, out_dtype=x.dtype)
    return out.reshape(B, Hq, Wq, dim_out)


def reference_forward(x, params, num_heads, use_q_pool=False):
    """Plain-JAX f32 reference mirroring the PyTorch module."""
    B, H, W, dim = x.shape
    dim_out = params["b_proj"].shape[0]
    hd = dim_out // num_heads
    qkv = x.reshape(B, H * W, dim) @ params["w_qkv"] + params["b_qkv"]
    qkv = qkv.reshape(B, H * W, 3, num_heads, hd)
    q, k, v = qkv[:, :, 0], qkv[:, :, 1], qkv[:, :, 2]
    if use_q_pool:
        q = max_pool_2x2(q.reshape(B, H, W, dim_out))
        H, W = q.shape[1], q.shape[2]
        q = q.reshape(B, H * W, num_heads, hd)
    qh = jnp.transpose(q, (0, 2, 1, 3))
    kh = jnp.transpose(k, (0, 2, 1, 3))
    vh = jnp.transpose(v, (0, 2, 1, 3))
    s = jnp.einsum("bhqd,bhkd->bhqk", qh, kh) * (1.0 / math.sqrt(hd))
    p = jax.nn.softmax(s, axis=-1)
    o = jnp.einsum("bhqk,bhkd->bhqd", p, vh)
    o = jnp.transpose(o, (0, 2, 1, 3)).reshape(B * H * W, dim_out)
    out = o @ params["w_proj"] + params["b_proj"]
    return out.reshape(B, H, W, dim_out)


# ----------------------------------------------------------------------------
if __name__ == "__main__":
    def check(B, H, W, dim, dim_out, num_heads, use_q_pool):
        key = jax.random.PRNGKey(0)
        kx, kp = jax.random.split(key)
        x = jax.random.normal(kx, (B, H, W, dim), jnp.float32)
        params = init_params(kp, dim, dim_out)
        out = multi_scale_attention(x, params, num_heads, use_q_pool=use_q_pool)
        out = jax.block_until_ready(out)
        Hq, Wq = (H // 2, W // 2) if use_q_pool else (H, W)
        assert out.shape == (B, Hq, Wq, dim_out), out.shape
        ref = reference_forward(x, params, num_heads, use_q_pool=use_q_pool)
        err = float(jnp.max(jnp.abs(out - ref)))
        # bf16 MXU operands (f32 accumulation) vs. an all-f32 reference.
        assert jnp.allclose(out, ref, atol=5e-3, rtol=2e-2), err

    # 128-aligned dim_out: attention reads q/k/v tiles directly from the fused qkv slab.
    check(2, 8, 8, 128, 128, 2, use_q_pool=False)
    # q_pool = MaxPool2d(2, 2) path.
    check(2, 8, 8, 128, 128, 2, use_q_pool=True)
    # Unaligned dim_out fallback path (channel slices, still no head transposes).
    check(2, 8, 8, 96, 96, 3, use_q_pool=False)

    print("KERNEL_OK")
</pallas_src>

<mosaic_0001>
module attributes {stable_mosaic.version = 11 : i64} {
  func.func @_matmul_bias_kernel(%arg0: i32, %arg1: i32, %arg2: i32, %arg3: memref<128x128xf32, #tpu.memory_space<vmem>>, %arg4: memref<128x384xbf16, #tpu.memory_space<vmem>>, %arg5: memref<1x384xf32, #tpu.memory_space<vmem>>, %arg6: memref<128x384xf32, #tpu.memory_space<vmem>>, %arg7: memref<128x384xf32, #tpu.memory_space<vmem>>) attributes {dimension_semantics = [#tpu.dimension_semantics<parallel>, #tpu.dimension_semantics<parallel>, #tpu.dimension_semantics<arbitrary>], iteration_bounds = array<i64: 1, 1, 1>, scalar_prefetch = 0 : i64, scratch_operands = 1 : i64, tpu.core_type = #tpu.core_type<tc>, window_params = [{transform_indices = @transform_0, window_bounds = array<i64: 128, 128>}, {transform_indices = @transform_1, window_bounds = array<i64: 128, 384>}, {transform_indices = @transform_2, window_bounds = array<i64: 1, 384>}, {transform_indices = @transform_3, window_bounds = array<i64: 128, 384>}]} {
    %c0_i32 = arith.constant 0 : i32
    %0 = arith.cmpi eq, %arg2, %c0_i32 : i32
    %1 = arith.extui %0 : i1 to i32
    %c0_i32_0 = arith.constant 0 : i32
    %2 = arith.cmpi ne, %1, %c0_i32_0 : i32
    scf.if %2 {
      %cst_10 = arith.constant 0.000000e+00 : f32
      %13 = vector.broadcast %cst_10 : f32 to vector<128x384xf32>
      %c0_11 = arith.constant 0 : index
      %c0_12 = arith.constant 0 : index
      %14 = vector.load %arg7[%c0_11, %c0_12] : memref<128x384xf32, #tpu.memory_space<vmem>>, vector<128x384xf32>
      tpu.vector_store %arg7[%c0_11, %c0_12], %13 {strides = array<i32>} : memref<128x384xf32, #tpu.memory_space<vmem>>, vector<128x384xf32>,
    } else {
    }
    %c0 = arith.constant 0 : index
    %c0_1 = arith.constant 0 : index
    %3 = vector.load %arg7[%c0, %c0_1] : memref<128x384xf32, #tpu.memory_space<vmem>>, vector<128x384xf32>
    %c0_2 = arith.constant 0 : index
    %c0_3 = arith.constant 0 : index
    %4 = vector.load %arg3[%c0_2, %c0_3] : memref<128x128xf32, #tpu.memory_space<vmem>>, vector<128x128xf32>
    %5 = arith.truncf %4 : vector<128x128xf32> to vector<128x128xbf16>
    %c0_4 = arith.constant 0 : index
    %c0_5 = arith.constant 0 : index
    %6 = vector.load %arg4[%c0_4, %c0_5] : memref<128x384xbf16, #tpu.memory_space<vmem>>, vector<128x384xbf16>
    %cst = arith.constant dense<0.000000e+00> : vector<128x384xf32>
    %7 = tpu.matmul %5, %6, %cst {dimension_numbers = #tpu.dot_dimension_numbers<[1], [0], [0], [1], [0, 0, 1, 1], [], []>} : vector<128x128xbf16>, vector<128x384xbf16>, vector<128x384xf32> -> vector<128x384xf32>
    %8 = arith.addf %3, %7 : vector<128x384xf32>
    %c0_6 = arith.constant 0 : index
    %c0_7 = arith.constant 0 : index
    %9 = vector.load %arg7[%c0_6, %c0_7] : memref<128x384xf32, #tpu.memory_space<vmem>>, vector<128x384xf32>
    tpu.vector_store %arg7[%c0_6, %c0_7], %8 {strides = array<i32>} : memref<128x384xf32, #tpu.memory_space<vmem>>, vector<128x384xf32>,
    %c0_i32_8 = arith.constant 0 : i32
    %10 = arith.cmpi eq, %arg2, %c0_i32_8 : i32
    %11 = arith.extui %10 : i1 to i32
    %c0_i32_9 = arith.constant 0 : i32
    %12 = arith.cmpi ne, %11, %c0_i32_9 : i32
    scf.if %12 {
      %c0_10 = arith.constant 0 : index
      %c0_11 = arith.constant 0 : index
      %13 = vector.load %arg7[%c0_10, %c0_11] : memref<128x384xf32, #tpu.memory_space<vmem>>, vector<128x384xf32>
      %c0_12 = arith.constant 0 : index
      %c0_13 = arith.constant 0 : index
      %14 = vector.load %arg5[%c0_12, %c0_13] : memref<1x384xf32, #tpu.memory_space<vmem>>, vector<1x384xf32>
      %15 = vector.broadcast %14 : vector<1x384xf32> to vector<128x384xf32>
      %16 = arith.addf %13, %15 : vector<128x384xf32>
      %c0_14 = arith.constant 0 : index
      %c0_15 = arith.constant 0 : index
      %17 = vector.load %arg6[%c0_14, %c0_15] : memref<128x384xf32, #tpu.memory_space<vmem>>, vector<128x384xf32>
      tpu.vector_store %arg6[%c0_14, %c0_15], %16 {strides = array<i32>} : memref<128x384xf32, #tpu.memory_space<vmem>>, vector<128x384xf32>,
    } else {
    }
    return
  }
  func.func @transform_0(%arg0: i32, %arg1: i32, %arg2: i32) -> (i32, i32) {
    %c0_i32 = arith.constant 0 : i32
    return %arg0, %arg2 : i32, i32
  }
  func.func @transform_1(%arg0: i32, %arg1: i32, %arg2: i32) -> (i32, i32) {
    %c0_i32 = arith.constant 0 : i32
    return %arg2, %arg1 : i32, i32
  }
  func.func @transform_2(%arg0: i32, %arg1: i32, %arg2: i32) -> (i32, i32) {
    %c0_i32 = arith.constant 0 : i32
    %c0_i32_0 = arith.constant 0 : i32
    return %c0_i32, %arg1 : i32, i32
  }
  func.func @transform_3(%arg0: i32, %arg1: i32, %arg2: i32) -> (i32, i32) {
    %c0_i32 = arith.constant 0 : i32
    return %arg0, %arg1 : i32, i32
  }
}

module attributes {stable_mosaic.version = 11 : i64} {
  func.func @_flash_attn_kernel(%arg0: i32, %arg1: i32, %arg2: i32, %arg3: memref<1x64x128xf32, #tpu.memory_space<vmem>>, %arg4: memref<1x64x128xf32, #tpu.memory_space<vmem>>, %arg5: memref<1x64x128xf32, #tpu.memory_space<vmem>>, %arg6: memref<1x64x128xf32, #tpu.memory_space<vmem>>, %arg7: memref<2x64x1xf32, #tpu.memory_space<vmem>>, %arg8: memref<2x64x1xf32, #tpu.memory_space<vmem>>, %arg9: memref<2x64x64xf32, #tpu.memory_space<vmem>>) attributes {dimension_semantics = [#tpu.dimension_semantics<parallel>, #tpu.dimension_semantics<parallel>, #tpu.dimension_semantics<arbitrary>], iteration_bounds = array<i64: 2, 1, 1>, scalar_prefetch = 0 : i64, scratch_operands = 3 : i64, tpu.core_type = #tpu.core_type<tc>, window_params = [{transform_indices = @transform_0, window_bounds = array<i64: 1, 64, 128>}, {transform_indices = @transform_1, window_bounds = array<i64: 1, 64, 128>}, {transform_indices = @transform_2, window_bounds = array<i64: 1, 64, 128>}, {transform_indices = @transform_3, window_bounds = array<i64: 1, 64, 128>}]} {
    %c0_i32 = arith.constant 0 : i32
    %0 = arith.cmpi eq, %arg2, %c0_i32 : i32
    %1 = arith.extui %0 : i1 to i32
    %c0_i32_0 = arith.constant 0 : i32
    %2 = arith.cmpi ne, %1, %c0_i32_0 : i32
    scf.if %2 {
      %cst_53 = arith.constant 0xFF800000 : f32
      %87 = vector.broadcast %cst_53 : f32 to vector<2x64x1xf32>
      %c0_54 = arith.constant 0 : index
      %c0_55 = arith.constant 0 : index
      %c0_56 = arith.constant 0 : index
      %88 = vector.load %arg7[%c0_54, %c0_55, %c0_56] : memref<2x64x1xf32, #tpu.memory_space<vmem>>, vector<2x64x1xf32>
      tpu.vector_store %arg7[%c0_54, %c0_55, %c0_56], %87 {strides = array<i32>} : memref<2x64x1xf32, #tpu.memory_space<vmem>>, vector<2x64x1xf32>,
      %cst_57 = arith.constant 0.000000e+00 : f32
      %89 = vector.broadcast %cst_57 : f32 to vector<2x64x1xf32>
      %c0_58 = arith.constant 0 : index
      %c0_59 = arith.constant 0 : index
      %c0_60 = arith.constant 0 : index
      %90 = vector.load %arg8[%c0_58, %c0_59, %c0_60] : memref<2x64x1xf32, #tpu.memory_space<vmem>>, vector<2x64x1xf32>
      tpu.vector_store %arg8[%c0_58, %c0_59, %c0_60], %89 {strides = array<i32>} : memref<2x64x1xf32, #tpu.memory_space<vmem>>, vector<2x64x1xf32>,
      %cst_61 = arith.constant 0.000000e+00 : f32
      %91 = vector.broadcast %cst_61 : f32 to vector<2x64x64xf32>
      %c0_62 = arith.constant 0 : index
      %c0_63 = arith.constant 0 : index
      %c0_64 = arith.constant 0 : index
      %92 = vector.load %arg9[%c0_62, %c0_63, %c0_64] : memref<2x64x64xf32, #tpu.memory_space<vmem>>, vector<2x64x64xf32>
      tpu.vector_store %arg9[%c0_62, %c0_63, %c0_64], %91 {strides = array<i32>} : memref<2x64x64xf32, #tpu.memory_space<vmem>>, vector<2x64x64xf32>,
    } else {
    }
    %c0 = arith.constant 0 : index
    %c0_1 = arith.constant 0 : index
    %c0_2 = arith.constant 0 : index
    %3 = vector.load %arg3[%c0, %c0_1, %c0_2] : memref<1x64x128xf32, #tpu.memory_space<vmem>>, vector<1x64x128xf32>
    %4 = vector.shape_cast %3 : vector<1x64x128xf32> to vector<64x128xf32>
    %5 = arith.truncf %4 : vector<64x128xf32> to vector<64x128xbf16>
    %c0_3 = arith.constant 0 : index
    %c0_4 = arith.constant 0 : index
    %c0_5 = arith.constant 0 : index
    %6 = vector.load %arg4[%c0_3, %c0_4, %c0_5] : memref<1x64x128xf32, #tpu.memory_space<vmem>>, vector<1x64x128xf32>
    %7 = vector.shape_cast %6 : vector<1x64x128xf32> to vector<64x128xf32>
    %8 = arith.truncf %7 : vector<64x128xf32> to vector<64x128xbf16>
    %c0_6 = arith.constant 0 : index
    %c0_7 = arith.constant 0 : index
    %c0_8 = arith.constant 0 : index
    %9 = vector.load %arg5[%c0_6, %c0_7, %c0_8] : memref<1x64x128xf32, #tpu.memory_space<vmem>>, vector<1x64x128xf32>
    %10 = vector.shape_cast %9 : vector<1x64x128xf32> to vector<64x128xf32>
    %11 = arith.truncf %10 : vector<64x128xf32> to vector<64x128xbf16>
    %12 = vector.extract_strided_slice %5 {offsets = [0, 0], sizes = [64, 64], strides = [1, 1]} : vector<64x128xbf16> to vector<64x64xbf16>
    %13 = vector.extract_strided_slice %8 {offsets = [0, 0], sizes = [64, 64], strides = [1, 1]} : vector<64x128xbf16> to vector<64x64xbf16>
    %14 = vector.extract_strided_slice %11 {offsets = [0, 0], sizes = [64, 64], strides = [1, 1]} : vector<64x128xbf16> to vector<64x64xbf16>
    %cst = arith.constant dense<0.000000e+00> : vector<64x64xf32>
    %15 = tpu.matmul %12, %13, %cst {dimension_numbers = #tpu.dot_dimension_numbers<[1], [1], [0], [0], [0, 0, 1, 0], [], []>} : vector<64x64xbf16>, vector<64x64xbf16>, vector<64x64xf32> -> vector<64x64xf32>
    %c0_9 = arith.constant 0 : index
    %c0_10 = arith.constant 0 : index
    %c0_11 = arith.constant 0 : index
    %16 = vector.load %arg7[%c0_9, %c0_10, %c0_11] : memref<2x64x1xf32, #tpu.memory_space<vmem>>, vector<1x64x1xf32>
    %17 = vector.shape_cast %16 : vector<1x64x1xf32> to vector<64x1xf32>
    %cst_12 = arith.constant dense<0xFF800000> : vector<64xf32>
    %18 = vector.multi_reduction <maximumf>, %15, %cst_12 [1] : vector<64x64xf32> to vector<64xf32>
    %19 = vector.shape_cast %18 : vector<64xf32> to vector<64x1xf32>
    %20 = arith.maximumf %17, %19 : vector<64x1xf32>
    %21 = arith.subf %17, %20 : vector<64x1xf32>
    %22 = math.exp %21 : vector<64x1xf32>
    %23 = vector.broadcast %20 : vector<64x1xf32> to vector<64x64xf32>
    %24 = arith.subf %15, %23 : vector<64x64xf32>
    %25 = math.exp %24 : vector<64x64xf32>
    %c0_13 = arith.constant 0 : index
    %c0_14 = arith.constant 0 : index
    %c0_15 = arith.constant 0 : index
    %26 = vector.load %arg8[%c0_13, %c0_14, %c0_15] : memref<2x64x1xf32, #tpu.memory_space<vmem>>, vector<1x64x1xf32>
    %27 = vector.shape_cast %26 : vector<1x64x1xf32> to vector<64x1xf32>
    %28 = arith.mulf %22, %27 : vector<64x1xf32>
    %cst_16 = arith.constant dense<0.000000e+00> : vector<64xf32>
    %29 = vector.multi_reduction <add>, %25, %cst_16 [1] : vector<64x64xf32> to vector<64xf32>
    %30 = vector.shape_cast %29 : vector<64xf32> to vector<64x1xf32>
    %31 = arith.addf %28, %30 : vector<64x1xf32>
    %c0_17 = arith.constant 0 : index
    %c0_18 = arith.constant 0 : index
    %c0_19 = arith.constant 0 : index
    %32 = vector.load %arg8[%c0_17, %c0_18, %c0_19] : memref<2x64x1xf32, #tpu.memory_space<vmem>>, vector<1x64x1xf32>
    %33 = vector.shape_cast %32 : vector<1x64x1xf32> to vector<64x1xf32>
    %34 = vector.shape_cast %31 : vector<64x1xf32> to vector<1x64x1xf32>
    tpu.vector_store %arg8[%c0_17, %c0_18, %c0_19], %34 {strides = array<i32>} : memref<2x64x1xf32, #tpu.memory_space<vmem>>, vector<1x64x1xf32>,
    %c0_20 = arith.constant 0 : index
    %c0_21 = arith.constant 0 : index
    %c0_22 = arith.constant 0 : index
    %35 = vector.load %arg9[%c0_20, %c0_21, %c0_22] : memref<2x64x64xf32, #tpu.memory_space<vmem>>, vector<1x64x64xf32>
    %36 = vector.shape_cast %35 : vector<1x64x64xf32> to vector<64x64xf32>
    %37 = vector.broadcast %22 : vector<64x1xf32> to vector<64x64xf32>
    %38 = arith.mulf %37, %36 : vector<64x64xf32>
    %39 = arith.truncf %25 : vector<64x64xf32> to vector<64x64xbf16>
    %cst_23 = arith.constant dense<0.000000e+00> : vector<64x64xf32>
    %40 = tpu.matmul %39, %14, %cst_23 {dimension_numbers = #tpu.dot_dimension_numbers<[1], [0], [0], [1], [0, 0, 1, 1], [], []>} : vector<64x64xbf16>, vector<64x64xbf16>, vector<64x64xf32> -> vector<64x64xf32>
    %41 = arith.addf %38, %40 : vector<64x64xf32>
    %c0_24 = arith.constant 0 : index
    %c0_25 = arith.constant 0 : index
    %c0_26 = arith.constant 0 : index
    %42 = vector.load %arg9[%c0_24, %c0_25, %c0_26] : memref<2x64x64xf32, #tpu.memory_space<vmem>>, vector<1x64x64xf32>
    %43 = vector.shape_cast %42 : vector<1x64x64xf32> to vector<64x64xf32>
    %44 = vector.shape_cast %41 : vector<64x64xf32> to vector<1x64x64xf32>
    tpu.vector_store %arg9[%c0_24, %c0_25, %c0_26], %44 {strides = array<i32>} : memref<2x64x64xf32, #tpu.memory_space<vmem>>, vector<1x64x64xf32>,
    %c0_27 = arith.constant 0 : index
    %c0_28 = arith.constant 0 : index
    %c0_29 = arith.constant 0 : index
    %45 = vector.load %arg7[%c0_27, %c0_28, %c0_29] : memref<2x64x1xf32, #tpu.memory_space<vmem>>, vector<1x64x1xf32>
    %46 = vector.shape_cast %45 : vector<1x64x1xf32> to vector<64x1xf32>
    %47 = vector.shape_cast %20 : vector<64x1xf32> to vector<1x64x1xf32>
    tpu.vector_store %arg7[%c0_27, %c0_28, %c0_29], %47 {strides = array<i32>} : memref<2x64x1xf32, #tpu.memory_space<vmem>>, vector<1x64x1xf32>,
    %48 = vector.extract_strided_slice %5 {offsets = [0, 64], sizes = [64, 64], strides = [1, 1]} : vector<64x128xbf16> to vector<64x64xbf16>
    %49 = vector.extract_strided_slice %8 {offsets = [0, 64], sizes = [64, 64], strides = [1, 1]} : vector<64x128xbf16> to vector<64x64xbf16>
    %50 = vector.extract_strided_slice %11 {offsets = [0, 64], sizes = [64, 64], strides = [1, 1]} : vector<64x128xbf16> to vector<64x64xbf16>
    %cst_30 = arith.constant dense<0.000000e+00> : vector<64x64xf32>
    %51 = tpu.matmul %48, %49, %cst_30 {dimension_numbers = #tpu.dot_dimension_numbers<[1], [1], [0], [0], [0, 0, 1, 0], [], []>} : vector<64x64xbf16>, vector<64x64xbf16>, vector<64x64xf32> -> vector<64x64xf32>
    %c1 = arith.constant 1 : index
    %c0_31 = arith.constant 0 : index
    %c0_32 = arith.constant 0 : index
    %52 = vector.load %arg7[%c1, %c0_31, %c0_32] : memref<2x64x1xf32, #tpu.memory_space<vmem>>, vector<1x64x1xf32>
    %53 = vector.shape_cast %52 : vector<1x64x1xf32> to vector<64x1xf32>
    %cst_33 = arith.constant dense<0xFF800000> : vector<64xf32>
    %54 = vector.multi_reduction <maximumf>, %51, %cst_33 [1] : vector<64x64xf32> to vector<64xf32>
    %55 = vector.shape_cast %54 : vector<64xf32> to vector<64x1xf32>
    %56 = arith.maximumf %53, %55 : vector<64x1xf32>
    %57 = arith.subf %53, %56 : vector<64x1xf32>
    %58 = math.exp %57 : vector<64x1xf32>
    %59 = vector.broadcast %56 : vector<64x1xf32> to vector<64x64xf32>
    %60 = arith.subf %51, %59 : vector<64x64xf32>
    %61 = math.exp %60 : vector<64x64xf32>
    %c1_34 = arith.constant 1 : index
    %c0_35 = arith.constant 0 : index
    %c0_36 = arith.constant 0 : index
    %62 = vector.load %arg8[%c1_34, %c0_35, %c0_36] : memref<2x64x1xf32, #tpu.memory_space<vmem>>, vector<1x64x1xf32>
    %63 = vector.shape_cast %62 : vector<1x64x1xf32> to vector<64x1xf32>
    %64 = arith.mulf %58, %63 : vector<64x1xf32>
    %cst_37 = arith.constant dense<0.000000e+00> : vector<64xf32>
    %65 = vector.multi_reduction <add>, %61, %cst_37 [1] : vector<64x64xf32> to vector<64xf32>
    %66 = vector.shape_cast %65 : vector<64xf32> to vector<64x1xf32>
    %67 = arith.addf %64, %66 : vector<64x1xf32>
    %c1_38 = arith.constant 1 : index
    %c0_39 = arith.constant 0 : index
    %c0_40 = arith.constant 0 : index
    %68 = vector.load %arg8[%c1_38, %c0_39, %c0_40] : memref<2x64x1xf32, #tpu.memory_space<vmem>>, vector<1x64x1xf32>
    %69 = vector.shape_cast %68 : vector<1x64x1xf32> to vector<64x1xf32>
    %70 = vector.shape_cast %67 : vector<64x1xf32> to vector<1x64x1xf32>
    tpu.vector_store %arg8[%c1_38, %c0_39, %c0_40], %70 {strides = array<i32>} : memref<2x64x1xf32, #tpu.memory_space<vmem>>, vector<1x64x1xf32>,
    %c1_41 = arith.constant 1 : index
    %c0_42 = arith.constant 0 : index
    %c0_43 = arith.constant 0 : index
    %71 = vector.load %arg9[%c1_41, %c0_42, %c0_43] : memref<2x64x64xf32, #tpu.memory_space<vmem>>, vector<1x64x64xf32>
    %72 = vector.shape_cast %71 : vector<1x64x64xf32> to vector<64x64xf32>
    %73 = vector.broadcast %58 : vector<64x1xf32> to vector<64x64xf32>
    %74 = arith.mulf %73, %72 : vector<64x64xf32>
    %75 = arith.truncf %61 : vector<64x64xf32> to vector<64x64xbf16>
    %cst_44 = arith.constant dense<0.000000e+00> : vector<64x64xf32>
    %76 = tpu.matmul %75, %50, %cst_44 {dimension_numbers = #tpu.dot_dimension_numbers<[1], [0], [0], [1], [0, 0, 1, 1], [], []>} : vector<64x64xbf16>, vector<64x64xbf16>, vector<64x64xf32> -> vector<64x64xf32>
    %77 = arith.addf %74, %76 : vector<64x64xf32>
    %c1_45 = arith.constant 1 : index
    %c0_46 = arith.constant 0 : index
    %c0_47 = arith.constant 0 : index
    %78 = vector.load %arg9[%c1_45, %c0_46, %c0_47] : memref<2x64x64xf32, #tpu.memory_space<vmem>>, vector<1x64x64xf32>
    %79 = vector.shape_cast %78 : vector<1x64x64xf32> to vector<64x64xf32>
    %80 = vector.shape_cast %77 : vector<64x64xf32> to vector<1x64x64xf32>
    tpu.vector_store %arg9[%c1_45, %c0_46, %c0_47], %80 {strides = array<i32>} : memref<2x64x64xf32, #tpu.memory_space<vmem>>, vector<1x64x64xf32>,
    %c1_48 = arith.constant 1 : index
    %c0_49 = arith.constant 0 : index
    %c0_50 = arith.constant 0 : index
    %81 = vector.load %arg7[%c1_48, %c0_49, %c0_50] : memref<2x64x1xf32, #tpu.memory_space<vmem>>, vector<1x64x1xf32>
    %82 = vector.shape_cast %81 : vector<1x64x1xf32> to vector<64x1xf32>
    %83 = vector.shape_cast %56 : vector<64x1xf32> to vector<1x64x1xf32>
    tpu.vector_store %arg7[%c1_48, %c0_49, %c0_50], %83 {strides = array<i32>} : memref<2x64x1xf32, #tpu.memory_space<vmem>>, vector<1x64x1xf32>,
    %c0_i32_51 = arith.constant 0 : i32
    %84 = arith.cmpi eq, %arg2, %c0_i32_51 : i32
    %85 = arith.extui %84 : i1 to i32
    %c0_i32_52 = arith.constant 0 : i32
    %86 = arith.cmpi ne, %85, %c0_i32_52 : i32
    scf.if %86 {
      %c0_53 = arith.constant 0 : index
      %c0_54 = arith.constant 0 : index
      %c0_55 = arith.constant 0 : index
      %87 = vector.load %arg8[%c0_53, %c0_54, %c0_55] : memref<2x64x1xf32, #tpu.memory_space<vmem>>, vector<1x64x1xf32>
      %88 = vector.shape_cast %87 : vector<1x64x1xf32> to vector<64x1xf32>
      %89 = tpu.reciprocal %88 {approx = true} : vector<64x1xf32> -> vector<64x1xf32>
      %c0_56 = arith.constant 0 : index
      %c0_57 = arith.constant 0 : index
      %c0_58 = arith.constant 0 : index
      %90 = vector.load %arg9[%c0_56, %c0_57, %c0_58] : memref<2x64x64xf32, #tpu.memory_space<vmem>>, vector<1x64x64xf32>
      %91 = vector.shape_cast %90 : vector<1x64x64xf32> to vector<64x64xf32>
      %92 = vector.broadcast %89 : vector<64x1xf32> to vector<64x64xf32>
      %93 = arith.mulf %91, %92 : vector<64x64xf32>
      %c1_59 = arith.constant 1 : index
      %c0_60 = arith.constant 0 : index
      %c0_61 = arith.constant 0 : index
      %94 = vector.load %arg8[%c1_59, %c0_60, %c0_61] : memref<2x64x1xf32, #tpu.memory_space<vmem>>, vector<1x64x1xf32>
      %95 = vector.shape_cast %94 : vector<1x64x1xf32> to vector<64x1xf32>
      %96 = tpu.reciprocal %95 {approx = true} : vector<64x1xf32> -> vector<64x1xf32>
      %c1_62 = arith.constant 1 : index
      %c0_63 = arith.constant 0 : index
      %c0_64 = arith.constant 0 : index
      %97 = vector.load %arg9[%c1_62, %c0_63, %c0_64] : memref<2x64x64xf32, #tpu.memory_space<vmem>>, vector<1x64x64xf32>
      %98 = vector.shape_cast %97 : vector<1x64x64xf32> to vector<64x64xf32>
      %99 = vector.broadcast %96 : vector<64x1xf32> to vector<64x64xf32>
      %100 = arith.mulf %98, %99 : vector<64x64xf32>
      %101 = tpu.concatenate %93, %100 in 1 : vector<64x64xf32>, vector<64x64xf32> -> vector<64x128xf32>
      %c0_65 = arith.constant 0 : index
      %c0_66 = arith.constant 0 : index
      %c0_67 = arith.constant 0 : index
      %102 = vector.load %arg6[%c0_65, %c0_66, %c0_67] : memref<1x64x128xf32, #tpu.memory_space<vmem>>, vector<1x64x128xf32>
      %103 = vector.shape_cast %102 : vector<1x64x128xf32> to vector<64x128xf32>
      %104 = vector.shape_cast %101 : vector<64x128xf32> to vector<1x64x128xf32>
      tpu.vector_store %arg6[%c0_65, %c0_66, %c0_67], %104 {strides = array<i32>} : memref<1x64x128xf32, #tpu.memory_space<vmem>>, vector<1x64x128xf32>,
    } else {
    }
    return
  }
  func.func @transform_0(%arg0: i32, %arg1: i32, %arg2: i32) -> (i32, i32, i32) {
    %c0_i32 = arith.constant 0 : i32
    %c0_i32_0 = arith.constant 0 : i32
    return %arg0, %arg1, %c0_i32 : i32, i32, i32
  }
  func.func @transform_1(%arg0: i32, %arg1: i32, %arg2: i32) -> (i32, i32, i32) {
    %c1_i32 = arith.constant 1 : i32
    %c0_i32 = arith.constant 0 : i32
    return %arg0, %arg2, %c1_i32 : i32, i32, i32
  }
  func.func @transform_2(%arg0: i32, %arg1: i32, %arg2: i32) -> (i32, i32, i32) {
    %c2_i32 = arith.constant 2 : i32
    %c0_i32 = arith.constant 0 : i32
    return %arg0, %arg2, %c2_i32 : i32, i32, i32
  }
  func.func @transform_3(%arg0: i32, %arg1: i32, %arg2: i32) -> (i32, i32, i32) {
    %c0_i32 = arith.constant 0 : i32
    %c0_i32_0 = arith.constant 0 : i32
    return %arg0, %arg1, %c0_i32 : i32, i32, i32
  }
}

module attributes {stable_mosaic.version = 11 : i64} {
  func.func @_matmul_bias_kernel(%arg0: i32, %arg1: i32, %arg2: i32, %arg3: memref<128x128xf32, #tpu.memory_space<vmem>>, %arg4: memref<128x128xbf16, #tpu.memory_space<vmem>>, %arg5: memref<1x128xf32, #tpu.memory_space<vmem>>, %arg6: memref<128x128xf32, #tpu.memory_space<vmem>>, %arg7: memref<128x128xf32, #tpu.memory_space<vmem>>) attributes {dimension_semantics = [#tpu.dimension_semantics<parallel>, #tpu.dimension_semantics<parallel>, #tpu.dimension_semantics<arbitrary>], iteration_bounds = array<i64: 1, 1, 1>, scalar_prefetch = 0 : i64, scratch_operands = 1 : i64, tpu.core_type = #tpu.core_type<tc>, window_params = [{transform_indices = @transform_0, window_bounds = array<i64: 128, 128>}, {transform_indices = @transform_1, window_bounds = array<i64: 128, 128>}, {transform_indices = @transform_2, window_bounds = array<i64: 1, 128>}, {transform_indices = @transform_3, window_bounds = array<i64: 128, 128>}]} {
    %c0_i32 = arith.constant 0 : i32
    %0 = arith.cmpi eq, %arg2, %c0_i32 : i32
    %1 = arith.extui %0 : i1 to i32
    %c0_i32_0 = arith.constant 0 : i32
    %2 = arith.cmpi ne, %1, %c0_i32_0 : i32
    scf.if %2 {
      %cst_10 = arith.constant 0.000000e+00 : f32
      %13 = vector.broadcast %cst_10 : f32 to vector<128x128xf32>
      %c0_11 = arith.constant 0 : index
      %c0_12 = arith.constant 0 : index
      %14 = vector.load %arg7[%c0_11, %c0_12] : memref<128x128xf32, #tpu.memory_space<vmem>>, vector<128x128xf32>
      tpu.vector_store %arg7[%c0_11, %c0_12], %13 {strides = array<i32>} : memref<128x128xf32, #tpu.memory_space<vmem>>, vector<128x128xf32>,
    } else {
    }
    %c0 = arith.constant 0 : index
    %c0_1 = arith.constant 0 : index
    %3 = vector.load %arg7[%c0, %c0_1] : memref<128x128xf32, #tpu.memory_space<vmem>>, vector<128x128xf32>
    %c0_2 = arith.constant 0 : index
    %c0_3 = arith.constant 0 : index
    %4 = vector.load %arg3[%c0_2, %c0_3] : memref<128x128xf32, #tpu.memory_space<vmem>>, vector<128x128xf32>
    %5 = arith.truncf %4 : vector<128x128xf32> to vector<128x128xbf16>
    %c0_4 = arith.constant 0 : index
    %c0_5 = arith.constant 0 : index
    %6 = vector.load %arg4[%c0_4, %c0_5] : memref<128x128xbf16, #tpu.memory_space<vmem>>, vector<128x128xbf16>
    %cst = arith.constant dense<0.000000e+00> : vector<128x128xf32>
    %7 = tpu.matmul %5, %6, %cst {dimension_numbers = #tpu.dot_dimension_numbers<[1], [0], [0], [1], [0, 0, 1, 1], [], []>} : vector<128x128xbf16>, vector<128x128xbf16>, vector<128x128xf32> -> vector<128x128xf32>
    %8 = arith.addf %3, %7 : vector<128x128xf32>
    %c0_6 = arith.constant 0 : index
    %c0_7 = arith.constant 0 : index
    %9 = vector.load %arg7[%c0_6, %c0_7] : memref<128x128xf32, #tpu.memory_space<vmem>>, vector<128x128xf32>
    tpu.vector_store %arg7[%c0_6, %c0_7], %8 {strides = array<i32>} : memref<128x128xf32, #tpu.memory_space<vmem>>, vector<128x128xf32>,
    %c0_i32_8 = arith.constant 0 : i32
    %10 = arith.cmpi eq, %arg2, %c0_i32_8 : i32
    %11 = arith.extui %10 : i1 to i32
    %c0_i32_9 = arith.constant 0 : i32
    %12 = arith.cmpi ne, %11, %c0_i32_9 : i32
    scf.if %12 {
      %c0_10 = arith.constant 0 : index
      %c0_11 = arith.constant 0 : index
      %13 = vector.load %arg7[%c0_10, %c0_11] : memref<128x128xf32, #tpu.memory_space<vmem>>, vector<128x128xf32>
      %c0_12 = arith.constant 0 : index
      %c0_13 = arith.constant 0 : index
      %14 = vector.load %arg5[%c0_12, %c0_13] : memref<1x128xf32, #tpu.memory_space<vmem>>, vector<1x128xf32>
      %15 = vector.broadcast %14 : vector<1x128xf32> to vector<128x128xf32>
      %16 = arith.addf %13, %15 : vector<128x128xf32>
      %c0_14 = arith.constant 0 : index
      %c0_15 = arith.constant 0 : index
      %17 = vector.load %arg6[%c0_14, %c0_15] : memref<128x128xf32, #tpu.memory_space<vmem>>, vector<128x128xf32>
      tpu.vector_store %arg6[%c0_14, %c0_15], %16 {strides = array<i32>} : memref<128x128xf32, #tpu.memory_space<vmem>>, vector<128x128xf32>,
    } else {
    }
    return
  }
  func.func @transform_0(%arg0: i32, %arg1: i32, %arg2: i32) -> (i32, i32) {
    %c0_i32 = arith.constant 0 : i32
    return %arg0, %arg2 : i32, i32
  }
  func.func @transform_1(%arg0: i32, %arg1: i32, %arg2: i32) -> (i32, i32) {
    %c0_i32 = arith.constant 0 : i32
    return %arg2, %arg1 : i32, i32
  }
  func.func @transform_2(%arg0: i32, %arg1: i32, %arg2: i32) -> (i32, i32) {
    %c0_i32 = arith.constant 0 : i32
    %c0_i32_0 = arith.constant 0 : i32
    return %c0_i32, %arg1 : i32, i32
  }
  func.func @transform_3(%arg0: i32, %arg1: i32, %arg2: i32) -> (i32, i32) {
    %c0_i32 = arith.constant 0 : i32
    return %arg0, %arg1 : i32, i32
  }
}

</mosaic_0001>

<llo_original>
// kernel: mul.9
$region0: #{mul.9}
  #allocation0 [shape = 's32[1]{0}', space=sflag, size = 0x4, scoped, tag = 'scoped memory for mul.9']
  %s0 = inlined_call_operand.vmem [shape: f32[384], index: 0, kind: input, shape index: {}]
  %s1 = inlined_call_operand.vmem [shape: f32[384], index: 1, kind: input, shape index: {}]
  %s2 = inlined_call_operand.vmem [shape: f32[384], index: 2, kind: output, shape index: {}]
  %v3 = vld [vmem:[%s0] sm:$0x7]
  %v4 = vld [vmem:[%s1] sm:$0x7]
  %5 = xla_tuple %v3, %v4
  %6 = xla_tuple %5
  %v7 = vmul.f32 %v3, %v4
  %8 = xla_tuple %v7
  %9 = vst [vmem:[%s2] sm:$0xf] %v7

// kernel: multi_scale_attention.5
$region0: #{multi_scale_attention.5}
  #allocation0 [shape = 'u32[]', space=smem, size = 0x4, offset = 0x4, fixed_abs, tag = 'smem constant byte address 0x4 - core index']
  #allocation1 [shape = 'u32[144,128]{1,0:T(1,128)}', space=vmem, size = 0x12000, scoped, tag = 'internal scratch']
  #allocation2 [shape = 'f32[128,128]{1,0:T(8,128)}', space=vmem, size = 0x10000, scoped, tag = 'scratch operand']
  %s0 = inlined_call_operand.vmem [shape: f32[128,128], index: 0, kind: input, shape index: {}]
  %s1 = inlined_call_operand.vmem [shape: bf16[128,128], index: 1, kind: input, shape index: {}]
  %s2 = inlined_call_operand.vmem [shape: f32[1,128], index: 2, kind: input, shape index: {}]
  %s3 = inlined_call_operand.hbm [shape: f32[128,128], index: 3, kind: output, shape index: {}]
  %s4 = sld [smem:[#allocation0]]
  $region30: #{multi_scale_attention.5} parent=0
    _
  %s6 = ssub.s32 1, %s4
  %s7 = scalar_select 0, %s6, %s4
  $region1: #{multi_scale_attention.5} parent=0
    #allocation3 [shape = 'u8[65536]{0}', space=vmem, size = 0x10000, scoped, tag = 'output window, operand 0, single buffered']
    #allocation4 [shape = 's32[1]{0}', space=sflag, size = 0x4, scoped, tag = 'scoped memory for multi_scale_attention.5']
    %8 = vsyncpa [#allocation4], 0
    // Predicated region
    $region2: #{multi_scale_attention.5} parent=1 // pred_check
      _
    $region3: #{multi_scale_attention.5} parent=1 // pred_check_branch
      %10 = sbr.rel (0) target = $region5
    $region4: #{multi_scale_attention.5} parent=1 // pred_region
      _
    $region5: #{multi_scale_attention.5} parent=1 // pred_fallthru
      _
    // Predicated region
    $region6: #{multi_scale_attention.5} parent=1 // pred_check
      _
    $region7: #{multi_scale_attention.5} parent=1 // pred_check_branch
      %12 = sbr.rel (0) target = $region9
    $region8: #{multi_scale_attention.5} parent=1 // pred_region
      _
    $region9: #{multi_scale_attention.5} parent=1 // pred_fallthru
      _
    // Predicated region
    $region10: #{multi_scale_attention.5} parent=1 // pred_check
      _
    $region11: #{multi_scale_attention.5} parent=1 // pred_check_branch
      %14 = sbr.rel (0) target = $region13
    $region12: #{multi_scale_attention.5} parent=1 // pred_region
      _
    $region13: #{multi_scale_attention.5} parent=1 // pred_fallthru
      _
    %p16 = scmp.eq.s32.totalorder 0, 0
    // Predicated region
    $region14: #{multi_scale_attention.5} parent=1 // pred_check
      %p17 = pneg %p16
    $region15: #{multi_scale_attention.5} parent=1 // pred_check_branch
      %19 = sbr.rel (%p17) target = $region17
    $region16: #{multi_scale_attention.5} parent=1 // pred_region
      %20 = vst [vmem:[#allocation2] sm:$0xff] 0.0
      %21 = vst [vmem:[#allocation2 + $0x8] sm:$0xff] 0.0
      %22 = vst [vmem:[#allocation2 + $0x10] sm:$0xff] 0.0
      %23 = vst [vmem:[#allocation2 + $0x18] sm:$0xff] 0.0
      %24 = vst [vmem:[#allocation2 + $0x20] sm:$0xff] 0.0
      %25 = vst [vmem:[#allocation2 + $0x28] sm:$0xff] 0.0
      %26 = vst [vmem:[#allocation2 + $0x30] sm:$0xff] 0.0
      %27 = vst [vmem:[#allocation2 + $0x38] sm:$0xff] 0.0
      %28 = vst [vmem:[#allocation2 + $0x40] sm:$0xff] 0.0
      %29 = vst [vmem:[#allocation2 + $0x48] sm:$0xff] 0.0
      %30 = vst [vmem:[#allocation2 + $0x50] sm:$0xff] 0.0
      %31 = vst [vmem:[#allocation2 + $0x58] sm:$0xff] 0.0
      %32 = vst [vmem:[#allocation2 + $0x60] sm:$0xff] 0.0
      %33 = vst [vmem:[#allocation2 + $0x68] sm:$0xff] 0.0
      %34 = vst [vmem:[#allocation2 + $0x70] sm:$0xff] 0.0
      %35 = vst [vmem:[#allocation2 + $0x78] sm:$0xff] 0.0
    $region17: #{multi_scale_attention.5} parent=1 // pred_fallthru
      _
    %v36 = vld [vmem:[#allocation2] sm:$0xff]
    %v37 = vld [vmem:[#allocation2 + $0x8] sm:$0xff]
    %v38 = vld [vmem:[#allocation2 + $0x10] sm:$0xff]
    %v39 = vld [vmem:[#allocation2 + $0x18] sm:$0xff]
    %v40 = vld [vmem:[#allocation2 + $0x20] sm:$0xff]
    %v41 = vld [vmem:[#allocation2 + $0x28] sm:$0xff]
    %v42 = vld [vmem:[#allocation2 + $0x30] sm:$0xff]
    %v43 = vld [vmem:[#allocation2 + $0x38] sm:$0xff]
    %v44 = vld [vmem:[#allocation2 + $0x40] sm:$0xff]
    %v45 = vld [vmem:[#allocation2 + $0x48] sm:$0xff]
    %v46 = vld [vmem:[#allocation2 + $0x50] sm:$0xff]
    %v47 = vld [vmem:[#allocation2 + $0x58] sm:$0xff]
    %v48 = vld [vmem:[#allocation2 + $0x60] sm:$0xff]
    %v49 = vld [vmem:[#allocation2 + $0x68] sm:$0xff]
    %v50 = vld [vmem:[#allocation2 + $0x70] sm:$0xff]
    %v51 = vld [vmem:[#allocation2 + $0x78] sm:$0xff]
    %v52 = vld [vmem:[%s0] sm:$0xff]
    %v53 = vld [vmem:[%s0 + $0x8] sm:$0xff]
    %v54 = vld [vmem:[%s0 + $0x10] sm:$0xff]
    %v55 = vld [vmem:[%s0 + $0x18] sm:$0xff]
    %v56 = vld [vmem:[%s0 + $0x20] sm:$0xff]
    %v57 = vld [vmem:[%s0 + $0x28] sm:$0xff]
    %v58 = vld [vmem:[%s0 + $0x30] sm:$0xff]
    %v59 = vld [vmem:[%s0 + $0x38] sm:$0xff]
    %v60 = vld [vmem:[%s0 + $0x40] sm:$0xff]
    %v61 = vld [vmem:[%s0 + $0x48] sm:$0xff]
    %v62 = vld [vmem:[%s0 + $0x50] sm:$0xff]
    %v63 = vld [vmem:[%s0 + $0x58] sm:$0xff]
    %v64 = vld [vmem:[%s0 + $0x60] sm:$0xff]
    %v65 = vld [vmem:[%s0 + $0x68] sm:$0xff]
    %v66 = vld [vmem:[%s0 + $0x70] sm:$0xff]
    %v67 = vld [vmem:[%s0 + $0x78] sm:$0xff]
    %v68 = vpack.c.bf16 %v53, %v52
    %v69 = vpack.c.bf16 %v55, %v54
    %v70 = vpack.c.bf16 %v57, %v56
    %v71 = vpack.c.bf16 %v59, %v58
    %v72 = vpack.c.bf16 %v61, %v60
    %v73 = vpack.c.bf16 %v63, %v62
    %v74 = vpack.c.bf16 %v65, %v64
    %v75 = vpack.c.bf16 %v67, %v66
    %v76 = vld [vmem:[%s1] sm:$0xf]
    %v77 = vld [vmem:[%s1 + $0x4] sm:$0xf]
    %v78 = vld [vmem:[%s1 + $0x8] sm:$0xf]
    %v79 = vld [vmem:[%s1 + $0xc] sm:$0xf]
    %v80 = vld [vmem:[%s1 + $0x10] sm:$0xf]
    %v81 = vld [vmem:[%s1 + $0x14] sm:$0xf]
    %v82 = vld [vmem:[%s1 + $0x18] sm:$0xf]
    %v83 = vld [vmem:[%s1 + $0x1c] sm:$0xf]
    %v84 = vld [vmem:[%s1 + $0x20] sm:$0xf]
    %v85 = vld [vmem:[%s1 + $0x24] sm:$0xf]
    %v86 = vld [vmem:[%s1 + $0x28] sm:$0xf]
    %v87 = vld [vmem:[%s1 + $0x2c] sm:$0xf]
    %v88 = vld [vmem:[%s1 + $0x30] sm:$0xf]
    %v89 = vld [vmem:[%s1 + $0x34] sm:$0xf]
    %v90 = vld [vmem:[%s1 + $0x38] sm:$0xf]
    %v91 = vld [vmem:[%s1 + $0x3c] sm:$0xf]
    %v108 = vunpack.c.l.b16 %v76
    %v109 = vunpack.c.l.b16 %v77
    %v110 = vunpack.c.l.b16 %v78
    %v111 = vunpack.c.l.b16 %v79
    %v112 = vunpack.c.l.b16 %v80
    %v113 = vunpack.c.l.b16 %v81
    %v114 = vunpack.c.l.b16 %v82
    %v115 = vunpack.c.l.b16 %v83
    %v116 = vunpack.c.l.b16 %v84
    %v117 = vunpack.c.l.b16 %v85
    %v118 = vunpack.c.l.b16 %v86
    %v119 = vunpack.c.l.b16 %v87
    %v120 = vunpack.c.l.b16 %v88
    %v121 = vunpack.c.l.b16 %v89
    %v122 = vunpack.c.l.b16 %v90
    %v123 = vunpack.c.l.b16 %v91
    %v124 = vpack.c.b16 %v109, %v108
    %v125 = vpack.c.b16 %v111, %v110
    %v126 = vpack.c.b16 %v113, %v112
    %v127 = vpack.c.b16 %v115, %v114
    %v128 = vpack.c.b16 %v117, %v116
    %v129 = vpack.c.b16 %v119, %v118
    %v130 = vpack.c.b16 %v121, %v120
    %v131 = vpack.c.b16 %v123, %v122
    %140 = vmatprep.subr.bf16.mxu0 0
    %141 = vmatpush1.bf16.msra.mxu0 %v124
    %142 = vmatprep.subr.bf16.mxu0 0
    %143 = vmatpush1.bf16.msra.mxu0 %v125
    %144 = vmatprep.subr.bf16.mxu0 0
    %145 = vmatpush1.bf16.msra.mxu0 %v126
    %146 = vmatprep.subr.bf16.mxu0 0
    %147 = vmatpush1.bf16.msra.mxu0 %v127
    %148 = vmatprep.subr.bf16.mxu0 0
    %149 = vmatpush1.bf16.msra.mxu0 %v128
    %150 = vmatprep.subr.bf16.mxu0 0
    %151 = vmatpush1.bf16.msra.mxu0 %v129
    %152 = vmatprep.subr.bf16.mxu0 0
    %153 = vmatpush1.bf16.msra.mxu0 %v130
    %154 = vmatprep.subr.bf16.mxu0 0
    %155 = vmatpush1.bf16.msra.mxu0 %v131
    %156 = vmatprep.subr.bf16.mxu0 0
    %157 = vmatpush1.bf16.msra.mxu0 0
    %158 = vmatprep.subr.bf16.mxu0 0
    %159 = vmatpush1.bf16.msra.mxu0 0
    %160 = vmatprep.subr.bf16.mxu0 0
    %161 = vmatpush1.bf16.msra.mxu0 0
    %162 = vmatprep.subr.bf16.mxu0 0
    %163 = vmatpush1.bf16.msra.mxu0 0
    %164 = vmatprep.subr.bf16.mxu0 0
    %165 = vmatpush1.bf16.msra.mxu0 0
    %166 = vmatprep.subr.bf16.mxu0 0
    %167 = vmatpush1.bf16.msra.mxu0 0
    %168 = vmatprep.subr.bf16.mxu0 0
    %169 = vmatpush1.bf16.msra.mxu0 0
    %170 = vmatprep.subr.bf16.mxu0 0
    %171 = vmatpush1.bf16.msra.mxu0 0
    %172 = vmatprep.mubr.bf16.mxu0 0
    %173 = vmatmul.mubr.bf16.gmra.mrb[0].mxu0 %v68
    %v174 = vpop.f32.mrb[0].mxu0
    %v175 = vadd.f32 0.0, %v174
    %v176 = vpop.f32.mrb[0].mxu0
    %v177 = vpop.f32.mrb[0].mxu0
    %v178 = vadd.f32 0.0, %v177
    %v179 = vpop.f32.mrb[0].mxu0
    %180 = vmatprep.mubr.bf16.mxu0 0
    %181 = vmatmul.mubr.bf16.gmra.mrb[0].mxu0 %v69
    %v182 = vpop.f32.mrb[0].mxu0
    %v183 = vadd.f32 0.0, %v182
    %v184 = vpop.f32.mrb[0].mxu0
    %v185 = vpop.f32.mrb[0].mxu0
    %v186 = vadd.f32 0.0, %v185
    %v187 = vpop.f32.mrb[0].mxu0
    %188 = vmatprep.mubr.bf16.mxu0 0
    %189 = vmatmul.mubr.bf16.gmra.mrb[0].mxu0 %v70
    %v190 = vpop.f32.mrb[0].mxu0
    %v191 = vadd.f32 0.0, %v190
    %v192 = vpop.f32.mrb[0].mxu0
    %v193 = vpop.f32.mrb[0].mxu0
    %v194 = vadd.f32 0.0, %v193
    %v195 = vpop.f32.mrb[0].mxu0
    %196 = vmatprep.mubr.bf16.mxu0 0
    %197 = vmatmul.mubr.bf16.gmra.mrb[0].mxu0 %v71
    %v198 = vpop.f32.mrb[0].mxu0
    %v199 = vadd.f32 0.0, %v198
    %v200 = vpop.f32.mrb[0].mxu0
    %v201 = vpop.f32.mrb[0].mxu0
    %v202 = vadd.f32 0.0, %v201
    %v203 = vpop.f32.mrb[0].mxu0
    %204 = vmatprep.mubr.bf16.mxu0 0
    %205 = vmatmul.mubr.bf16.gmra.mrb[0].mxu0 %v72
    %v206 = vpop.f32.mrb[0].mxu0
    %v207 = vadd.f32 0.0, %v206
    %v208 = vpop.f32.mrb[0].mxu0
    %v209 = vpop.f32.mrb[0].mxu0
    %v210 = vadd.f32 0.0, %v209
    %v211 = vpop.f32.mrb[0].mxu0
    %212 = vmatprep.mubr.bf16.mxu0 0
    %213 = vmatmul.mubr.bf16.gmra.mrb[0].mxu0 %v73
    %v214 = vpop.f32.mrb[0].mxu0
    %v215 = vadd.f32 0.0, %v214
    %v216 = vpop.f32.mrb[0].mxu0
    %v217 = vpop.f32.mrb[0].mxu0
    %v218 = vadd.f32 0.0, %v217
    %v219 = vpop.f32.mrb[0].mxu0
    %220 = vmatprep.mubr.bf16.mxu0 0
    %221 = vmatmul.mubr.bf16.gmra.mrb[0].mxu0 %v74
    %v222 = vpop.f32.mrb[0].mxu0
    %v223 = vadd.f32 0.0, %v222
    %v224 = vpop.f32.mrb[0].mxu0
    %v225 = vpop.f32.mrb[0].mxu0
    %v226 = vadd.f32 0.0, %v225
    %v227 = vpop.f32.mrb[0].mxu0
    %228 = vmatprep.mubr.bf16.mxu0 0
    %229 = vmatmul.mubr.bf16.gmra.mrb[0].mxu0 %v75
    %v230 = vpop.f32.mrb[0].mxu0
    %v231 = vadd.f32 0.0, %v230
    %v232 = vpop.f32.mrb[0].mxu0
    %v233 = vpop.f32.mrb[0].mxu0
    %v234 = vadd.f32 0.0, %v233
    %v235 = vpop.f32.mrb[0].mxu0
    %236 = vdwg.mxu0
    %v237 = vadd.f32 %v36, %v175
    %v238 = vadd.f32 %v37, %v178
    %v239 = vadd.f32 %v38, %v183
    %v240 = vadd.f32 %v39, %v186
    %v241 = vadd.f32 %v40, %v191
    %v242 = vadd.f32 %v41, %v194
    %v243 = vadd.f32 %v42, %v199
    %v244 = vadd.f32 %v43, %v202
    %v245 = vadd.f32 %v44, %v207
    %v246 = vadd.f32 %v45, %v210
    %v247 = vadd.f32 %v46, %v215
    %v248 = vadd.f32 %v47, %v218
    %v249 = vadd.f32 %v48, %v223
    %v250 = vadd.f32 %v49, %v226
    %v251 = vadd.f32 %v50, %v231
    %v252 = vadd.f32 %v51, %v234
    %253 = vst [vmem:[#allocation2] sm:$0xff] %v237
    %254 = vst [vmem:[#allocation2 + $0x8] sm:$0xff] %v238
    %255 = vst [vmem:[#allocation2 + $0x10] sm:$0xff] %v239
    %256 = vst [vmem:[#allocation2 + $0x18] sm:$0xff] %v240
    %257 = vst [vmem:[#allocation2 + $0x20] sm:$0xff] %v241
    %258 = vst [vmem:[#allocation2 + $0x28] sm:$0xff] %v242
    %259 = vst [vmem:[#allocation2 + $0x30] sm:$0xff] %v243
    %260 = vst [vmem:[#allocation2 + $0x38] sm:$0xff] %v244
    %261 = vst [vmem:[#allocation2 + $0x40] sm:$0xff] %v245
    %262 = vst [vmem:[#allocation2 + $0x48] sm:$0xff] %v246
    %263 = vst [vmem:[#allocation2 + $0x50] sm:$0xff] %v247
    %264 = vst [vmem:[#allocation2 + $0x58] sm:$0xff] %v248
    %265 = vst [vmem:[#allocation2 + $0x60] sm:$0xff] %v249
    %266 = vst [vmem:[#allocation2 + $0x68] sm:$0xff] %v250
    %267 = vst [vmem:[#allocation2 + $0x70] sm:$0xff] %v251
    %268 = vst [vmem:[#allocation2 + $0x78] sm:$0xff] %v252
    // Predicated region
    $region18: #{multi_scale_attention.5} parent=1 // pred_check
      %p269 = pneg %p16
    $region19: #{multi_scale_attention.5} parent=1 // pred_check_branch
      %271 = sbr.rel (%p269) target = $region21
    $region20: #{multi_scale_attention.5} parent=1 // pred_region
      %v272 = vld [vmem:[#allocation2] sm:$0xff]
      %v273 = vld [vmem:[#allocation2 + $0x8] sm:$0xff]
      %v274 = vld [vmem:[#allocation2 + $0x10] sm:$0xff]
      %v275 = vld [vmem:[#allocation2 + $0x18] sm:$0xff]
      %v276 = vld [vmem:[#allocation2 + $0x20] sm:$0xff]
      %v277 = vld [vmem:[#allocation2 + $0x28] sm:$0xff]
      %v278 = vld [vmem:[#allocation2 + $0x30] sm:$0xff]
      %v279 = vld [vmem:[#allocation2 + $0x38] sm:$0xff]
      %v280 = vld [vmem:[#allocation2 + $0x40] sm:$0xff]
      %v281 = vld [vmem:[#allocation2 + $0x48] sm:$0xff]
      %v282 = vld [vmem:[#allocation2 + $0x50] sm:$0xff]
      %v283 = vld [vmem:[#allocation2 + $0x58] sm:$0xff]
      %v284 = vld [vmem:[#allocation2 + $0x60] sm:$0xff]
      %v285 = vld [vmem:[#allocation2 + $0x68] sm:$0xff]
      %v286 = vld [vmem:[#allocation2 + $0x70] sm:$0xff]
      %v287 = vld [vmem:[#allocation2 + $0x78] sm:$0xff]
      %v288 = vld [vmem:[%s2] sm:$0x1]
      %v290 = vlaneseq
      %v291 = vshrl.u32 %v290, 7
      %v292 = vsub.s32 0, %v291
      %v293 = vrot.slane %v288, %v292
      %v295 = vadd.f32 %v272, %v293
      %v296 = vadd.f32 %v273, %v293
      %v297 = vadd.f32 %v274, %v293
      %v298 = vadd.f32 %v275, %v293
      %v299 = vadd.f32 %v276, %v293
      %v300 = vadd.f32 %v277, %v293
      %v301 = vadd.f32 %v278, %v293
      %v302 = vadd.f32 %v279, %v293
      %v303 = vadd.f32 %v280, %v293
      %v304 = vadd.f32 %v281, %v293
      %v305 = vadd.f32 %v282, %v293
      %v306 = vadd.f32 %v283, %v293
      %v307 = vadd.f32 %v284, %v293
      %v308 = vadd.f32 %v285, %v293
      %v309 = vadd.f32 %v286, %v293
      %v310 = vadd.f32 %v287, %v293
      %311 = vst [vmem:[#allocation3] sm:$0xff] %v295
      %312 = vst [vmem:[#allocation3 + $0x8] sm:$0xff] %v296
      %313 = vst [vmem:[#allocation3 + $0x10] sm:$0xff] %v297
      %314 = vst [vmem:[#allocation3 + $0x18] sm:$0xff] %v298
      %315 = vst [vmem:[#allocation3 + $0x20] sm:$0xff] %v299
      %316 = vst [vmem:[#allocation3 + $0x28] sm:$0xff] %v300
      %317 = vst [vmem:[#allocation3 + $0x30] sm:$0xff] %v301
      %318 = vst [vmem:[#allocation3 + $0x38] sm:$0xff] %v302
      %319 = vst [vmem:[#allocation3 + $0x40] sm:$0xff] %v303
      %320 = vst [vmem:[#allocation3 + $0x48] sm:$0xff] %v304
      %321 = vst [vmem:[#allocation3 + $0x50] sm:$0xff] %v305
      %322 = vst [vmem:[#allocation3 + $0x58] sm:$0xff] %v306
      %323 = vst [vmem:[#allocation3 + $0x60] sm:$0xff] %v307
      %324 = vst [vmem:[#allocation3 + $0x68] sm:$0xff] %v308
      %325 = vst [vmem:[#allocation3 + $0x70] sm:$0xff] %v309
      %326 = vst [vmem:[#allocation3 + $0x78] sm:$0xff] %v310
    $region21: #{multi_scale_attention.5} parent=1 // pred_fallthru
      _
    // Predicated region
    $region22: #{multi_scale_attention.5} parent=1 // pred_check
      _
    $region23: #{multi_scale_attention.5} parent=1 // pred_check_branch
      %328 = sbr.rel (0) target = $region25
    $region24: #{multi_scale_attention.5} parent=1 // pred_region
      %s330 = ssub.s32 2048, 2048
      %331 = vsyncadd [#allocation4], %s330
      %s332 = sshll.u32 [#allocation3], 4
      %s333 = int_to_ptr.vmem [resolvable:$true] %s332
      %338 = dma.vmem_to_hbm [thread:$0]  %s333, 2048, %s3, [#allocation4], 128, 128, 8
    $region25: #{multi_scale_attention.5} parent=1 // pred_fallthru
      _
    // Predicated region
    $region26: #{multi_scale_attention.5} parent=1 // pred_check
      _
    $region27: #{multi_scale_attention.5} parent=1 // pred_check_branch
      %340 = sbr.rel (0) target = $region29
    $region28: #{multi_scale_attention.5} parent=1 // pred_region
      %341 = dma.done [#allocation4], 2048
    $region29: #{multi_scale_attention.5} parent=1 // pred_fallthru
      _
    %342 = vsyncpa [#allocation4], 1

// kernel: multi_scale_attention.3
$region0: #{multi_scale_attention.3}
  #allocation0 [shape = 'u32[]', space=smem, size = 0x4, offset = 0x4, fixed_abs, tag = 'smem constant byte address 0x4 - core index']
  #allocation1 [shape = 'u32[144,128]{1,0:T(1,128)}', space=vmem, size = 0x12000, scoped, tag = 'internal scratch']
  #allocation2 [shape = 'f32[128,384]{1,0:T(8,128)}', space=vmem, size = 0x30000, scoped, tag = 'scratch operand']
  %s0 = inlined_call_operand.vmem [shape: f32[128,128], index: 0, kind: input, shape index: {}]
  %s1 = inlined_call_operand.vmem [shape: bf16[128,384], index: 1, kind: input, shape index: {}]
  %s2 = inlined_call_operand.vmem [shape: f32[1,384], index: 2, kind: input, shape index: {}]
  %s3 = inlined_call_operand.vmem [shape: f32[128,384], index: 3, kind: output, shape index: {}]
  %s4 = sld [smem:[#allocation0]]
  $region30: #{multi_scale_attention.3} parent=0
    _
  %s6 = ssub.s32 1, %s4
  %s7 = scalar_select 0, %s6, %s4
  // Predicated region
  $region2: #{multi_scale_attention.3} parent=0 // pred_check
    _
  $region3: #{multi_scale_attention.3} parent=0 // pred_check_branch
    %9 = sbr.rel (0) target = $region5
  $region4: #{multi_scale_attention.3} parent=0 // pred_region
    _
  $region5: #{multi_scale_attention.3} parent=0 // pred_fallthru
    _
  // Predicated region
  $region6: #{multi_scale_attention.3} parent=0 // pred_check
    _
  $region7: #{multi_scale_attention.3} parent=0 // pred_check_branch
    %11 = sbr.rel (0) target = $region9
  $region8: #{multi_scale_attention.3} parent=0 // pred_region
    _
  $region9: #{multi_scale_attention.3} parent=0 // pred_fallthru
    _
  // Predicated region
  $region10: #{multi_scale_attention.3} parent=0 // pred_check
    _
  $region11: #{multi_scale_attention.3} parent=0 // pred_check_branch
    %13 = sbr.rel (0) target = $region13
  $region12: #{multi_scale_attention.3} parent=0 // pred_region
    _
  $region13: #{multi_scale_attention.3} parent=0 // pred_fallthru
    _
  %p15 = scmp.eq.s32.totalorder 0, 0
  // Predicated region
  $region14: #{multi_scale_attention.3} parent=0 // pred_check
    %p16 = pneg %p15
  $region15: #{multi_scale_attention.3} parent=0 // pred_check_branch
    %18 = sbr.rel (%p16) target = $region17
  $region16: #{multi_scale_attention.3} parent=0 // pred_region
    %19 = vst [vmem:[#allocation2] sm:$0xff] 0.0
    %20 = vst [vmem:[#allocation2 + $0x8] sm:$0xff] 0.0
    %21 = vst [vmem:[#allocation2 + $0x10] sm:$0xff] 0.0
    %22 = vst [vmem:[#allocation2 + $0x18] sm:$0xff] 0.0
    %23 = vst [vmem:[#allocation2 + $0x20] sm:$0xff] 0.0
    %24 = vst [vmem:[#allocation2 + $0x28] sm:$0xff] 0.0
    %25 = vst [vmem:[#allocation2 + $0x30] sm:$0xff] 0.0
    %26 = vst [vmem:[#allocation2 + $0x38] sm:$0xff] 0.0
    %27 = vst [vmem:[#allocation2 + $0x40] sm:$0xff] 0.0
    %28 = vst [vmem:[#allocation2 + $0x48] sm:$0xff] 0.0
    %29 = vst [vmem:[#allocation2 + $0x50] sm:$0xff] 0.0
    %30 = vst [vmem:[#allocation2 + $0x58] sm:$0xff] 0.0
    %31 = vst [vmem:[#allocation2 + $0x60] sm:$0xff] 0.0
    %32 = vst [vmem:[#allocation2 + $0x68] sm:$0xff] 0.0
    %33 = vst [vmem:[#allocation2 + $0x70] sm:$0xff] 0.0
    %34 = vst [vmem:[#allocation2 + $0x78] sm:$0xff] 0.0
    %35 = vst [vmem:[#allocation2 + $0x80] sm:$0xff] 0.0
    %36 = vst [vmem:[#allocation2 + $0x88] sm:$0xff] 0.0
    %37 = vst [vmem:[#allocation2 + $0x90] sm:$0xff] 0.0
    %38 = vst [vmem:[#allocation2 + $0x98] sm:$0xff] 0.0
    %39 = vst [vmem:[#allocation2 + $0xa0] sm:$0xff] 0.0
    %40 = vst [vmem:[#allocation2 + $0xa8] sm:$0xff] 0.0
    %41 = vst [vmem:[#allocation2 + $0xb0] sm:$0xff] 0.0
    %42 = vst [vmem:[#allocation2 + $0xb8] sm:$0xff] 0.0
    %43 = vst [vmem:[#allocation2 + $0xc0] sm:$0xff] 0.0
    %44 = vst [vmem:[#allocation2 + $0xc8] sm:$0xff] 0.0
    %45 = vst [vmem:[#allocation2 + $0xd0] sm:$0xff] 0.0
    %46 = vst [vmem:[#allocation2 + $0xd8] sm:$0xff] 0.0
    %47 = vst [vmem:[#allocation2 + $0xe0] sm:$0xff] 0.0
    %48 = vst [vmem:[#allocation2 + $0xe8] sm:$0xff] 0.0
    %49 = vst [vmem:[#allocation2 + $0xf0] sm:$0xff] 0.0
    %50 = vst [vmem:[#allocation2 + $0xf8] sm:$0xff] 0.0
    %51 = vst [vmem:[#allocation2 + $0x100] sm:$0xff] 0.0
    %52 = vst [vmem:[#allocation2 + $0x108] sm:$0xff] 0.0
    %53 = vst [vmem:[#allocation2 + $0x110] sm:$0xff] 0.0
    %54 = vst [vmem:[#allocation2 + $0x118] sm:$0xff] 0.0
    %55 = vst [vmem:[#allocation2 + $0x120] sm:$0xff] 0.0
    %56 = vst [vmem:[#allocation2 + $0x128] sm:$0xff] 0.0
    %57 = vst [vmem:[#allocation2 + $0x130] sm:$0xff] 0.0
    %58 = vst [vmem:[#allocation2 + $0x138] sm:$0xff] 0.0
    %59 = vst [vmem:[#allocation2 + $0x140] sm:$0xff] 0.0
    %60 = vst [vmem:[#allocation2 + $0x148] sm:$0xff] 0.0
    %61 = vst [vmem:[#allocation2 + $0x150] sm:$0xff] 0.0
    %62 = vst [vmem:[#allocation2 + $0x158] sm:$0xff] 0.0
    %63 = vst [vmem:[#allocation2 + $0x160] sm:$0xff] 0.0
    %64 = vst [vmem:[#allocation2 + $0x168] sm:$0xff] 0.0
    %65 = vst [vmem:[#allocation2 + $0x170] sm:$0xff] 0.0
    %66 = vst [vmem:[#allocation2 + $0x178] sm:$0xff] 0.0
  $region17: #{multi_scale_attention.3} parent=0 // pred_fallthru
    _
  %v67 = vld [vmem:[#allocation2] sm:$0xff]
  %v68 = vld [vmem:[#allocation2 + $0x8] sm:$0xff]
  %v69 = vld [vmem:[#allocation2 + $0x10] sm:$0xff]
  %v70 = vld [vmem:[#allocation2 + $0x18] sm:$0xff]
  %v71 = vld [vmem:[#allocation2 + $0x20] sm:$0xff]
  %v72 = vld [vmem:[#allocation2 + $0x28] sm:$0xff]
  %v73 = vld [vmem:[#allocation2 + $0x30] sm:$0xff]
  %v74 = vld [vmem:[#allocation2 + $0x38] sm:$0xff]
  %v75 = vld [vmem:[#allocation2 + $0x40] sm:$0xff]
  %v76 = vld [vmem:[#allocation2 + $0x48] sm:$0xff]
  %v77 = vld [vmem:[#allocation2 + $0x50] sm:$0xff]
  %v78 = vld [vmem:[#allocation2 + $0x58] sm:$0xff]
  %v79 = vld [vmem:[#allocation2 + $0x60] sm:$0xff]
  %v80 = vld [vmem:[#allocation2 + $0x68] sm:$0xff]
  %v81 = vld [vmem:[#allocation2 + $0x70] sm:$0xff]
  %v82 = vld [vmem:[#allocation2 + $0x78] sm:$0xff]
  %v83 = vld [vmem:[#allocation2 + $0x80] sm:$0xff]
  %v84 = vld [vmem:[#allocation2 + $0x88] sm:$0xff]
  %v85 = vld [vmem:[#allocation2 + $0x90] sm:$0xff]
  %v86 = vld [vmem:[#allocation2 + $0x98] sm:$0xff]
  %v87 = vld [vmem:[#allocation2 + $0xa0] sm:$0xff]
  %v88 = vld [vmem:[#allocation2 + $0xa8] sm:$0xff]
  %v89 = vld [vmem:[#allocation2 + $0xb0] sm:$0xff]
  %v90 = vld [vmem:[#allocation2 + $0xb8] sm:$0xff]
  %v91 = vld [vmem:[#allocation2 + $0xc0] sm:$0xff]
  %v92 = vld [vmem:[#allocation2 + $0xc8] sm:$0xff]
  %v93 = vld [vmem:[#allocation2 + $0xd0] sm:$0xff]
  %v94 = vld [vmem:[#allocation2 + $0xd8] sm:$0xff]
  %v95 = vld [vmem:[#allocation2 + $0xe0] sm:$0xff]
  %v96 = vld [vmem:[#allocation2 + $0xe8] sm:$0xff]
  %v97 = vld [vmem:[#allocation2 + $0xf0] sm:$0xff]
  %v98 = vld [vmem:[#allocation2 + $0xf8] sm:$0xff]
  %v99 = vld [vmem:[#allocation2 + $0x100] sm:$0xff]
  %v100 = vld [vmem:[#allocation2 + $0x108] sm:$0xff]
  %v101 = vld [vmem:[#allocation2 + $0x110] sm:$0xff]
  %v102 = vld [vmem:[#allocation2 + $0x118] sm:$0xff]
  %v103 = vld [vmem:[#allocation2 + $0x120] sm:$0xff]
  %v104 = vld [vmem:[#allocation2 + $0x128] sm:$0xff]
  %v105 = vld [vmem:[#allocation2 + $0x130] sm:$0xff]
  %v106 = vld [vmem:[#allocation2 + $0x138] sm:$0xff]
  %v107 = vld [vmem:[#allocation2 + $0x140] sm:$0xff]
  %v108 = vld [vmem:[#allocation2 + $0x148] sm:$0xff]
  %v109 = vld [vmem:[#allocation2 + $0x150] sm:$0xff]
  %v110 = vld [vmem:[#allocation2 + $0x158] sm:$0xff]
  %v111 = vld [vmem:[#allocation2 + $0x160] sm:$0xff]
  %v112 = vld [vmem:[#allocation2 + $0x168] sm:$0xff]
  %v113 = vld [vmem:[#allocation2 + $0x170] sm:$0xff]
  %v114 = vld [vmem:[#allocation2 + $0x178] sm:$0xff]
  %v115 = vld [vmem:[%s0] sm:$0xff]
  %v116 = vld [vmem:[%s0 + $0x8] sm:$0xff]
  %v117 = vld [vmem:[%s0 + $0x10] sm:$0xff]
  %v118 = vld [vmem:[%s0 + $0x18] sm:$0xff]
  %v119 = vld [vmem:[%s0 + $0x20] sm:$0xff]
  %v120 = vld [vmem:[%s0 + $0x28] sm:$0xff]
  %v121 = vld [vmem:[%s0 + $0x30] sm:$0xff]
  %v122 = vld [vmem:[%s0 + $0x38] sm:$0xff]
  %v123 = vld [vmem:[%s0 + $0x40] sm:$0xff]
  %v124 = vld [vmem:[%s0 + $0x48] sm:$0xff]
  %v125 = vld [vmem:[%s0 + $0x50] sm:$0xff]
  %v126 = vld [vmem:[%s0 + $0x58] sm:$0xff]
  %v127 = vld [vmem:[%s0 + $0x60] sm:$0xff]
  %v128 = vld [vmem:[%s0 + $0x68] sm:$0xff]
  %v129 = vld [vmem:[%s0 + $0x70] sm:$0xff]
  %v130 = vld [vmem:[%s0 + $0x78] sm:$0xff]
  %v131 = vpack.c.bf16 %v116, %v115
  %v132 = vpack.c.bf16 %v118, %v117
  %v133 = vpack.c.bf16 %v120, %v119
  %v134 = vpack.c.bf16 %v122, %v121
  %v135 = vpack.c.bf16 %v124, %v123
  %v136 = vpack.c.bf16 %v126, %v125
  %v137 = vpack.c.bf16 %v128, %v127
  %v138 = vpack.c.bf16 %v130, %v129
  %v139 = vld [vmem:[%s1] sm:$0xff]
  %v140 = vld [vmem:[%s1 + $0x8] sm:$0xf]
  %v141 = vld [vmem:[%s1 + $0xc] sm:$0xff]
  %v142 = vld [vmem:[%s1 + $0x14] sm:$0xf]
  %v143 = vld [vmem:[%s1 + $0x18] sm:$0xff]
  %v144 = vld [vmem:[%s1 + $0x20] sm:$0xf]
  %v145 = vld [vmem:[%s1 + $0x24] sm:$0xff]
  %v146 = vld [vmem:[%s1 + $0x2c] sm:$0xf]
  %v147 = vld [vmem:[%s1 + $0x30] sm:$0xff]
  %v148 = vld [vmem:[%s1 + $0x38] sm:$0xf]
  %v149 = vld [vmem:[%s1 + $0x3c] sm:$0xff]
  %v150 = vld [vmem:[%s1 + $0x44] sm:$0xf]
  %v151 = vld [vmem:[%s1 + $0x48] sm:$0xff]
  %v152 = vld [vmem:[%s1 + $0x50] sm:$0xf]
  %v153 = vld [vmem:[%s1 + $0x54] sm:$0xff]
  %v154 = vld [vmem:[%s1 + $0x5c] sm:$0xf]
  %v155 = vld [vmem:[%s1 + $0x60] sm:$0xff]
  %v156 = vld [vmem:[%s1 + $0x68] sm:$0xf]
  %v157 = vld [vmem:[%s1 + $0x6c] sm:$0xff]
  %v158 = vld [vmem:[%s1 + $0x74] sm:$0xf]
  %v159 = vld [vmem:[%s1 + $0x78] sm:$0xff]
  %v160 = vld [vmem:[%s1 + $0x80] sm:$0xf]
  %v161 = vld [vmem:[%s1 + $0x84] sm:$0xff]
  %v162 = vld [vmem:[%s1 + $0x8c] sm:$0xf]
  %v163 = vld [vmem:[%s1 + $0x90] sm:$0xff]
  %v164 = vld [vmem:[%s1 + $0x98] sm:$0xf]
  %v165 = vld [vmem:[%s1 + $0x9c] sm:$0xff]
  %v166 = vld [vmem:[%s1 + $0xa4] sm:$0xf]
  %v167 = vld [vmem:[%s1 + $0xa8] sm:$0xff]
  %v168 = vld [vmem:[%s1 + $0xb0] sm:$0xf]
  %v169 = vld [vmem:[%s1 + $0xb4] sm:$0xff]
  %v170 = vld [vmem:[%s1 + $0xbc] sm:$0xf]
  %v203 = vunpack.c.l.b16 %v139
  %v204 = vunpack.c.h.b16 %v139
  %v205 = vunpack.c.l.b16 %v140
  %v206 = vunpack.c.l.b16 %v141
  %v207 = vunpack.c.h.b16 %v141
  %v208 = vunpack.c.l.b16 %v142
  %v209 = vunpack.c.l.b16 %v143
  %v210 = vunpack.c.h.b16 %v143
  %v211 = vunpack.c.l.b16 %v144
  %v212 = vunpack.c.l.b16 %v145
  %v213 = vunpack.c.h.b16 %v145
  %v214 = vunpack.c.l.b16 %v146
  %v215 = vunpack.c.l.b16 %v147
  %v216 = vunpack.c.h.b16 %v147
  %v217 = vunpack.c.l.b16 %v148
  %v218 = vunpack.c.l.b16 %v149
  %v219 = vunpack.c.h.b16 %v149
  %v220 = vunpack.c.l.b16 %v150
  %v221 = vunpack.c.l.b16 %v151
  %v222 = vunpack.c.h.b16 %v151
  %v223 = vunpack.c.l.b16 %v152
  %v224 = vunpack.c.l.b16 %v153
  %v225 = vunpack.c.h.b16 %v153
  %v226 = vunpack.c.l.b16 %v154
  %v227 = vunpack.c.l.b16 %v155
  %v228 = vunpack.c.h.b16 %v155
  %v229 = vunpack.c.l.b16 %v156
  %v230 = vunpack.c.l.b16 %v157
  %v231 = vunpack.c.h.b16 %v157
  %v232 = vunpack.c.l.b16 %v158
  %v233 = vunpack.c.l.b16 %v159
  %v234 = vunpack.c.h.b16 %v159
  %v235 = vunpack.c.l.b16 %v160
  %v236 = vunpack.c.l.b16 %v161
  %v237 = vunpack.c.h.b16 %v161
  %v238 = vunpack.c.l.b16 %v162
  %v239 = vunpack.c.l.b16 %v163
  %v240 = vunpack.c.h.b16 %v163
  %v241 = vunpack.c.l.b16 %v164
  %v242 = vunpack.c.l.b16 %v165
  %v243 = vunpack.c.h.b16 %v165
  %v244 = vunpack.c.l.b16 %v166
  %v245 = vunpack.c.l.b16 %v167
  %v246 = vunpack.c.h.b16 %v167
  %v247 = vunpack.c.l.b16 %v168
  %v248 = vunpack.c.l.b16 %v169
  %v249 = vunpack.c.h.b16 %v169
  %v250 = vunpack.c.l.b16 %v170
  %v251 = vpack.c.b16 %v206, %v203
  %v252 = vpack.c.b16 %v207, %v204
  %v253 = vpack.c.b16 %v208, %v205
  %v254 = vpack.c.b16 %v212, %v209
  %v255 = vpack.c.b16 %v213, %v210
  %v256 = vpack.c.b16 %v214, %v211
  %v257 = vpack.c.b16 %v218, %v215
  %v258 = vpack.c.b16 %v219, %v216
  %v259 = vpack.c.b16 %v220, %v217
  %v260 = vpack.c.b16 %v224, %v221
  %v261 = vpack.c.b16 %v225, %v222
  %v262 = vpack.c.b16 %v226, %v223
  %v263 = vpack.c.b16 %v230, %v227
  %v264 = vpack.c.b16 %v231, %v228
  %v265 = vpack.c.b16 %v232, %v229
  %v266 = vpack.c.b16 %v236, %v233
  %v267 = vpack.c.b16 %v237, %v234
  %v268 = vpack.c.b16 %v238, %v235
  %v269 = vpack.c.b16 %v242, %v239
  %v270 = vpack.c.b16 %v243, %v240
  %v271 = vpack.c.b16 %v244, %v241
  %v272 = vpack.c.b16 %v248, %v245
  %v273 = vpack.c.b16 %v249, %v246
  %v274 = vpack.c.b16 %v250, %v247
  %299 = vmatprep.subr.bf16.mxu0 %v252
  %300 = vmatpush1.bf16.msra.mxu0 %v251
  %301 = vmatprep.subr.bf16.mxu0 %v255
  %302 = vmatpush1.bf16.msra.mxu0 %v254
  %303 = vmatprep.subr.bf16.mxu0 %v258
  %304 = vmatpush1.bf16.msra.mxu0 %v257
  %305 = vmatprep.subr.bf16.mxu0 %v261
  %306 = vmatpush1.bf16.msra.mxu0 %v260
  %307 = vmatprep.subr.bf16.mxu0 %v264
  %308 = vmatpush1.bf16.msra.mxu0 %v263
  %309 = vmatprep.subr.bf16.mxu0 %v267
  %310 = vmatpush1.bf16.msra.mxu0 %v266
  %311 = vmatprep.subr.bf16.mxu0 %v270
  %312 = vmatpush1.bf16.msra.mxu0 %v269
  %313 = vmatprep.subr.bf16.mxu0 %v273
  %314 = vmatpush1.bf16.msra.mxu0 %v272
  %315 = vmatprep.subr.bf16.mxu0 0
  %316 = vmatpush1.bf16.msra.mxu0 0
  %317 = vmatprep.subr.bf16.mxu0 0
  %318 = vmatpush1.bf16.msra.mxu0 0
  %319 = vmatprep.subr.bf16.mxu0 0
  %320 = vmatpush1.bf16.msra.mxu0 0
  %321 = vmatprep.subr.bf16.mxu0 0
  %322 = vmatpush1.bf16.msra.mxu0 0
  %323 = vmatprep.subr.bf16.mxu0 0
  %324 = vmatpush1.bf16.msra.mxu0 0
  %325 = vmatprep.subr.bf16.mxu0 0
  %326 = vmatpush1.bf16.msra.mxu0 0
  %327 = vmatprep.subr.bf16.mxu0 0
  %328 = vmatpush1.bf16.msra.mxu0 0
  %329 = vmatprep.subr.bf16.mxu0 0
  %330 = vmatpush1.bf16.msra.mxu0 0
  %331 = vmatprep.mubr.bf16.mxu0 0
  %332 = vmatmul.mubr.bf16.gmra.mrb[0].mxu0 %v131
  %v333 = vpop.f32.mrb[0].mxu0
  %v334 = vadd.f32 0.0, %v333
  %v335 = vpop.f32.mrb[0].mxu0
  %v336 = vadd.f32 0.0, %v335
  %v337 = vpop.f32.mrb[0].mxu0
  %v338 = vadd.f32 0.0, %v337
  %v339 = vpop.f32.mrb[0].mxu0
  %v340 = vadd.f32 0.0, %v339
  %341 = vmatprep.mubr.bf16.mxu0 0
  %342 = vmatmul.mubr.bf16.gmra.mrb[0].mxu0 %v132
  %v343 = vpop.f32.mrb[0].mxu0
  %v344 = vadd.f32 0.0, %v343
  %v345 = vpop.f32.mrb[0].mxu0
  %v346 = vadd.f32 0.0, %v345
  %v347 = vpop.f32.mrb[0].mxu0
  %v348 = vadd.f32 0.0, %v347
  %v349 = vpop.f32.mrb[0].mxu0
  %v350 = vadd.f32 0.0, %v349
  %351 = vmatprep.mubr.bf16.mxu0 0
  %352 = vmatmul.mubr.bf16.gmra.mrb[0].mxu0 %v133
  %v353 = vpop.f32.mrb[0].mxu0
  %v354 = vadd.f32 0.0, %v353
  %v355 = vpop.f32.mrb[0].mxu0
  %v356 = vadd.f32 0.0, %v355
  %v357 = vpop.f32.mrb[0].mxu0
  %v358 = vadd.f32 0.0, %v357
  %v359 = vpop.f32.mrb[0].mxu0
  %v360 = vadd.f32 0.0, %v359
  %361 = vmatprep.mubr.bf16.mxu0 0
  %362 = vmatmul.mubr.bf16.gmra.mrb[0].mxu0 %v134
  %v363 = vpop.f32.mrb[0].mxu0
  %v364 = vadd.f32 0.0, %v363
  %v365 = vpop.f32.mrb[0].mxu0
  %v366 = vadd.f32 0.0, %v365
  %v367 = vpop.f32.mrb[0].mxu0
  %v368 = vadd.f32 0.0, %v367
  %v369 = vpop.f32.mrb[0].mxu0
  %v370 = vadd.f32 0.0, %v369
  %371 = vmatprep.mubr.bf16.mxu0 0
  %372 = vmatmul.mubr.bf16.gmra.mrb[0].mxu0 %v135
  %v373 = vpop.f32.mrb[0].mxu0
  %v374 = vadd.f32 0.0, %v373
  %v375 = vpop.f32.mrb[0].mxu0
  %v376 = vadd.f32 0.0, %v375
  %v377 = vpop.f32.mrb[0].mxu0
  %v378 = vadd.f32 0.0, %v377
  %v379 = vpop.f32.mrb[0].mxu0
  %v380 = vadd.f32 0.0, %v379
  %381 = vmatprep.mubr.bf16.mxu0 0
  %382 = vmatmul.mubr.bf16.gmra.mrb[0].mxu0 %v136
  %v383 = vpop.f32.mrb[0].mxu0
  %v384 = vadd.f32 0.0, %v383
  %v385 = vpop.f32.mrb[0].mxu0
  %v386 = vadd.f32 0.0, %v385
  %v387 = vpop.f32.mrb[0].mxu0
  %v388 = vadd.f32 0.0, %v387
  %v389 = vpop.f32.mrb[0].mxu0
  %v390 = vadd.f32 0.0, %v389
  %391 = vmatprep.mubr.bf16.mxu0 0
  %392 = vmatmul.mubr.bf16.gmra.mrb[0].mxu0 %v137
  %v393 = vpop.f32.mrb[0].mxu0
  %v394 = vadd.f32 0.0, %v393
  %v395 = vpop.f32.mrb[0].mxu0
  %v396 = vadd.f32 0.0, %v395
  %v397 = vpop.f32.mrb[0].mxu0
  %v398 = vadd.f32 0.0, %v397
  %v399 = vpop.f32.mrb[0].mxu0
  %v400 = vadd.f32 0.0, %v399
  %401 = vmatprep.mubr.bf16.mxu0 0
  %402 = vmatmul.mubr.bf16.gmra.mrb[0].mxu0 %v138
  %v403 = vpop.f32.mrb[0].mxu0
  %v404 = vadd.f32 0.0, %v403
  %v405 = vpop.f32.mrb[0].mxu0
  %v406 = vadd.f32 0.0, %v405
  %v407 = vpop.f32.mrb[0].mxu0
  %v408 = vadd.f32 0.0, %v407
  %v409 = vpop.f32.mrb[0].mxu0
  %v410 = vadd.f32 0.0, %v409
  %411 = vdwg.mxu0
  %412 = vmatprep.subr.bf16.mxu0 0
  %413 = vmatpush1.bf16.msra.mxu0 %v253
  %414 = vmatprep.subr.bf16.mxu0 0
  %415 = vmatpush1.bf16.msra.mxu0 %v256
  %416 = vmatprep.subr.bf16.mxu0 0
  %417 = vmatpush1.bf16.msra.mxu0 %v259
  %418 = vmatprep.subr.bf16.mxu0 0
  %419 = vmatpush1.bf16.msra.mxu0 %v262
  %420 = vmatprep.subr.bf16.mxu0 0
  %421 = vmatpush1.bf16.msra.mxu0 %v265
  %422 = vmatprep.subr.bf16.mxu0 0
  %423 = vmatpush1.bf16.msra.mxu0 %v268
  %424 = vmatprep.subr.bf16.mxu0 0
  %425 = vmatpush1.bf16.msra.mxu0 %v271
  %426 = vmatprep.subr.bf16.mxu0 0
  %427 = vmatpush1.bf16.msra.mxu0 %v274
  %428 = vmatprep.subr.bf16.mxu0 0
  %429 = vmatpush1.bf16.msra.mxu0 0
  %430 = vmatprep.subr.bf16.mxu0 0
  %431 = vmatpush1.bf16.msra.mxu0 0
  %432 = vmatprep.subr.bf16.mxu0 0
  %433 = vmatpush1.bf16.msra.mxu0 0
  %434 = vmatprep.subr.bf16.mxu0 0
  %435 = vmatpush1.bf16.msra.mxu0 0
  %436 = vmatprep.subr.bf16.mxu0 0
  %437 = vmatpush1.bf16.msra.mxu0 0
  %438 = vmatprep.subr.bf16.mxu0 0
  %439 = vmatpush1.bf16.msra.mxu0 0
  %440 = vmatprep.subr.bf16.mxu0 0
  %441 = vmatpush1.bf16.msra.mxu0 0
  %442 = vmatprep.subr.bf16.mxu0 0
  %443 = vmatpush1.bf16.msra.mxu0 0
  %444 = vmatprep.mubr.bf16.mxu0 0
  %445 = vmatmul.mubr.bf16.gmra.mrb[0].mxu0 %v131
  %v446 = vpop.f32.mrb[0].mxu0
  %v447 = vadd.f32 0.0, %v446
  %v448 = vpop.f32.mrb[0].mxu0
  %v449 = vpop.f32.mrb[0].mxu0
  %v450 = vadd.f32 0.0, %v449
  %v451 = vpop.f32.mrb[0].mxu0
  %452 = vmatprep.mubr.bf16.mxu0 0
  %453 = vmatmul.mubr.bf16.gmra.mrb[0].mxu0 %v132
  %v454 = vpop.f32.mrb[0].mxu0
  %v455 = vadd.f32 0.0, %v454
  %v456 = vpop.f32.mrb[0].mxu0
  %v457 = vpop.f32.mrb[0].mxu0
  %v458 = vadd.f32 0.0, %v457
  %v459 = vpop.f32.mrb[0].mxu0
  %460 = vmatprep.mubr.bf16.mxu0 0
  %461 = vmatmul.mubr.bf16.gmra.mrb[0].mxu0 %v133
  %v462 = vpop.f32.mrb[0].mxu0
  %v463 = vadd.f32 0.0, %v462
  %v464 = vpop.f32.mrb[0].mxu0
  %v465 = vpop.f32.mrb[0].mxu0
  %v466 = vadd.f32 0.0, %v465
  %v467 = vpop.f32.mrb[0].mxu0
  %468 = vmatprep.mubr.bf16.mxu0 0
  %469 = vmatmul.mubr.bf16.gmra.mrb[0].mxu0 %v134
  %v470 = vpop.f32.mrb[0].mxu0
  %v471 = vadd.f32 0.0, %v470
  %v472 = vpop.f32.mrb[0].mxu0
  %v473 = vpop.f32.mrb[0].mxu0
  %v474 = vadd.f32 0.0, %v473
  %v475 = vpop.f32.mrb[0].mxu0
  %476 = vmatprep.mubr.bf16.mxu0 0
  %477 = vmatmul.mubr.bf16.gmra.mrb[0].mxu0 %v135
  %v478 = vpop.f32.mrb[0].mxu0
  %v479 = vadd.f32 0.0, %v478
  %v480 = vpop.f32.mrb[0].mxu0
  %v481 = vpop.f32.mrb[0].mxu0
  %v482 = vadd.f32 0.0, %v481
  %v483 = vpop.f32.mrb[0].mxu0
  %484 = vmatprep.mubr.bf16.mxu0 0
  %485 = vmatmul.mubr.bf16.gmra.mrb[0].mxu0 %v136
  %v486 = vpop.f32.mrb[0].mxu0
  %v487 = vadd.f32 0.0, %v486
  %v488 = vpop.f32.mrb[0].mxu0
  %v489 = vpop.f32.mrb[0].mxu0
  %v490 = vadd.f32 0.0, %v489
  %v491 = vpop.f32.mrb[0].mxu0
  %492 = vmatprep.mubr.bf16.mxu0 0
  %493 = vmatmul.mubr.bf16.gmra.mrb[0].mxu0 %v137
  %v494 = vpop.f32.mrb[0].mxu0
  %v495 = vadd.f32 0.0, %v494
  %v496 = vpop.f32.mrb[0].mxu0
  %v497 = vpop.f32.mrb[0].mxu0
  %v498 = vadd.f32 0.0, %v497
  %v499 = vpop.f32.mrb[0].mxu0
  %500 = vmatprep.mubr.bf16.mxu0 0
  %501 = vmatmul.mubr.bf16.gmra.mrb[0].mxu0 %v138
  %v502 = vpop.f32.mrb[0].mxu0
  %v503 = vadd.f32 0.0, %v502
  %v504 = vpop.f32.mrb[0].mxu0
  %v505 = vpop.f32.mrb[0].mxu0
  %v506 = vadd.f32 0.0, %v505
  %v507 = vpop.f32.mrb[0].mxu0
  %508 = vdwg.mxu0
  %v509 = vadd.f32 %v67, %v334
  %v510 = vadd.f32 %v68, %v336
  %v511 = vadd.f32 %v69, %v447
  %v512 = vadd.f32 %v70, %v338
  %v513 = vadd.f32 %v71, %v340
  %v514 = vadd.f32 %v72, %v450
  %v515 = vadd.f32 %v73, %v344
  %v516 = vadd.f32 %v74, %v346
  %v517 = vadd.f32 %v75, %v455
  %v518 = vadd.f32 %v76, %v348
  %v519 = vadd.f32 %v77, %v350
  %v520 = vadd.f32 %v78, %v458
  %v521 = vadd.f32 %v79, %v354
  %v522 = vadd.f32 %v80, %v356
  %v523 = vadd.f32 %v81, %v463
  %v524 = vadd.f32 %v82, %v358
  %v525 = vadd.f32 %v83, %v360
  %v526 = vadd.f32 %v84, %v466
  %v527 = vadd.f32 %v85, %v364
  %v528 = vadd.f32 %v86, %v366
  %v529 = vadd.f32 %v87, %v471
  %v530 = vadd.f32 %v88, %v368
  %v531 = vadd.f32 %v89, %v370
  %v532 = vadd.f32 %v90, %v474
  %v533 = vadd.f32 %v91, %v374
  %v534 = vadd.f32 %v92, %v376
  %v535 = vadd.f32 %v93, %v479
  %v536 = vadd.f32 %v94, %v378
  %v537 = vadd.f32 %v95, %v380
  %v538 = vadd.f32 %v96, %v482
  %v539 = vadd.f32 %v97, %v384
  %v540 = vadd.f32 %v98, %v386
  %v541 = vadd.f32 %v99, %v487
  %v542 = vadd.f32 %v100, %v388
  %v543 = vadd.f32 %v101, %v390
  %v544 = vadd.f32 %v102, %v490
  %v545 = vadd.f32 %v103, %v394
  %v546 = vadd.f32 %v104, %v396
  %v547 = vadd.f32 %v105, %v495
  %v548 = vadd.f32 %v106, %v398
  %v549 = vadd.f32 %v107, %v400
  %v550 = vadd.f32 %v108, %v498
  %v551 = vadd.f32 %v109, %v404
  %v552 = vadd.f32 %v110, %v406
  %v553 = vadd.f32 %v111, %v503
  %v554 = vadd.f32 %v112, %v408
  %v555 = vadd.f32 %v113, %v410
  %v556 = vadd.f32 %v114, %v506
  %557 = vst [vmem:[#allocation2] sm:$0xff] %v509
  %558 = vst [vmem:[#allocation2 + $0x8] sm:$0xff] %v510
  %559 = vst [vmem:[#allocation2 + $0x10] sm:$0xff] %v511
  %560 = vst [vmem:[#allocation2 + $0x18] sm:$0xff] %v512
  %561 = vst [vmem:[#allocation2 + $0x20] sm:$0xff] %v513
  %562 = vst [vmem:[#allocation2 + $0x28] sm:$0xff] %v514
  %563 = vst [vmem:[#allocation2 + $0x30] sm:$0xff] %v515
  %564 = vst [vmem:[#allocation2 + $0x38] sm:$0xff] %v516
  %565 = vst [vmem:[#allocation2 + $0x40] sm:$0xff] %v517
  %566 = vst [vmem:[#allocation2 + $0x48] sm:$0xff] %v518
  %567 = vst [vmem:[#allocation2 + $0x50] sm:$0xff] %v519
  %568 = vst [vmem:[#allocation2 + $0x58] sm:$0xff] %v520
  %569 = vst [vmem:[#allocation2 + $0x60] sm:$0xff] %v521
  %570 = vst [vmem:[#allocation2 + $0x68] sm:$0xff] %v522
  %571 = vst [vmem:[#allocation2 + $0x70] sm:$0xff] %v523
  %572 = vst [vmem:[#allocation2 + $0x78] sm:$0xff] %v524
  %573 = vst [vmem:[#allocation2 + $0x80] sm:$0xff] %v525
  %574 = vst [vmem:[#allocation2 + $0x88] sm:$0xff] %v526
  %575 = vst [vmem:[#allocation2 + $0x90] sm:$0xff] %v527
  %576 = vst [vmem:[#allocation2 + $0x98] sm:$0xff] %v528
  %577 = vst [vmem:[#allocation2 + $0xa0] sm:$0xff] %v529
  %578 = vst [vmem:[#allocation2 + $0xa8] sm:$0xff] %v530
  %579 = vst [vmem:[#allocation2 + $0xb0] sm:$0xff] %v531
  %580 = vst [vmem:[#allocation2 + $0xb8] sm:$0xff] %v532
  %581 = vst [vmem:[#allocation2 + $0xc0] sm:$0xff] %v533
  %582 = vst [vmem:[#allocation2 + $0xc8] sm:$0xff] %v534
  %583 = vst [vmem:[#allocation2 + $0xd0] sm:$0xff] %v535
  %584 = vst [vmem:[#allocation2 + $0xd8] sm:$0xff] %v536
  %585 = vst [vmem:[#allocation2 + $0xe0] sm:$0xff] %v537
  %586 = vst [vmem:[#allocation2 + $0xe8] sm:$0xff] %v538
  %587 = vst [vmem:[#allocation2 + $0xf0] sm:$0xff] %v539
  %588 = vst [vmem:[#allocation2 + $0xf8] sm:$0xff] %v540
  %589 = vst [vmem:[#allocation2 + $0x100] sm:$0xff] %v541
  %590 = vst [vmem:[#allocation2 + $0x108] sm:$0xff] %v542
  %591 = vst [vmem:[#allocation2 + $0x110] sm:$0xff] %v543
  %592 = vst [vmem:[#allocation2 + $0x118] sm:$0xff] %v544
  %593 = vst [vmem:[#allocation2 + $0x120] sm:$0xff] %v545
  %594 = vst [vmem:[#allocation2 + $0x128] sm:$0xff] %v546
  %595 = vst [vmem:[#allocation2 + $0x130] sm:$0xff] %v547
  %596 = vst [vmem:[#allocation2 + $0x138] sm:$0xff] %v548
  %597 = vst [vmem:[#allocation2 + $0x140] sm:$0xff] %v549
  %598 = vst [vmem:[#allocation2 + $0x148] sm:$0xff] %v550
  %599 = vst [vmem:[#allocation2 + $0x150] sm:$0xff] %v551
  %600 = vst [vmem:[#allocation2 + $0x158] sm:$0xff] %v552
  %601 = vst [vmem:[#allocation2 + $0x160] sm:$0xff] %v553
  %602 = vst [vmem:[#allocation2 + $0x168] sm:$0xff] %v554
  %603 = vst [vmem:[#allocation2 + $0x170] sm:$0xff] %v555
  %604 = vst [vmem:[#allocation2 + $0x178] sm:$0xff] %v556
  // Predicated region
  $region18: #{multi_scale_attention.3} parent=0 // pred_check
    %p605 = pneg %p15
  $region19: #{multi_scale_attention.3} parent=0 // pred_check_branch
    %607 = sbr.rel (%p605) target = $region21
  $region20: #{multi_scale_attention.3} parent=0 // pred_region
    %v608 = vld [vmem:[#allocation2] sm:$0xff]
    %v609 = vld [vmem:[#allocation2 + $0x8] sm:$0xff]
    %v610 = vld [vmem:[#allocation2 + $0x10] sm:$0xff]
    %v611 = vld [vmem:[#allocation2 + $0x18] sm:$0xff]
    %v612 = vld [vmem:[#allocation2 + $0x20] sm:$0xff]
    %v613 = vld [vmem:[#allocation2 + $0x28] sm:$0xff]
    %v614 = vld [vmem:[#allocation2 + $0x30] sm:$0xff]
    %v615 = vld [vmem:[#allocation2 + $0x38] sm:$0xff]
    %v616 = vld [vmem:[#allocation2 + $0x40] sm:$0xff]
    %v617 = vld [vmem:[#allocation2 + $0x48] sm:$0xff]
    %v618 = vld [vmem:[#allocation2 + $0x50] sm:$0xff]
    %v619 = vld [vmem:[#allocation2 + $0x58] sm:$0xff]
    %v620 = vld [vmem:[#allocation2 + $0x60] sm:$0xff]
    %v621 = vld [vmem:[#allocation2 + $0x68] sm:$0xff]
    %v622 = vld [vmem:[#allocation2 + $0x70] sm:$0xff]
    %v623 = vld [vmem:[#allocation2 + $0x78] sm:$0xff]
    %v624 = vld [vmem:[#allocation2 + $0x80] sm:$0xff]
    %v625 = vld [vmem:[#allocation2 + $0x88] sm:$0xff]
    %v626 = vld [vmem:[#allocation2 + $0x90] sm:$0xff]
    %v627 = vld [vmem:[#allocation2 + $0x98] sm:$0xff]
    %v628 = vld [vmem:[#allocation2 + $0xa0] sm:$0xff]
    %v629 = vld [vmem:[#allocation2 + $0xa8] sm:$0xff]
    %v630 = vld [vmem:[#allocation2 + $0xb0] sm:$0xff]
    %v631 = vld [vmem:[#allocation2 + $0xb8] sm:$0xff]
    %v632 = vld [vmem:[#allocation2 + $0xc0] sm:$0xff]
    %v633 = vld [vmem:[#allocation2 + $0xc8] sm:$0xff]
    %v634 = vld [vmem:[#allocation2 + $0xd0] sm:$0xff]
    %v635 = vld [vmem:[#allocation2 + $0xd8] sm:$0xff]
    %v636 = vld [vmem:[#allocation2 + $0xe0] sm:$0xff]
    %v637 = vld [vmem:[#allocation2 + $0xe8] sm:$0xff]
    %v638 = vld [vmem:[#allocation2 + $0xf0] sm:$0xff]
    %v639 = vld [vmem:[#allocation2 + $0xf8] sm:$0xff]
    %v640 = vld [vmem:[#allocation2 + $0x100] sm:$0xff]
    %v641 = vld [vmem:[#allocation2 + $0x108] sm:$0xff]
    %v642 = vld [vmem:[#allocation2 + $0x110] sm:$0xff]
    %v643 = vld [vmem:[#allocation2 + $0x118] sm:$0xff]
    %v644 = vld [vmem:[#allocation2 + $0x120] sm:$0xff]
    %v645 = vld [vmem:[#allocation2 + $0x128] sm:$0xff]
    %v646 = vld [vmem:[#allocation2 + $0x130] sm:$0xff]
    %v647 = vld [vmem:[#allocation2 + $0x138] sm:$0xff]
    %v648 = vld [vmem:[#allocation2 + $0x140] sm:$0xff]
    %v649 = vld [vmem:[#allocation2 + $0x148] sm:$0xff]
    %v650 = vld [vmem:[#allocation2 + $0x150] sm:$0xff]
    %v651 = vld [vmem:[#allocation2 + $0x158] sm:$0xff]
    %v652 = vld [vmem:[#allocation2 + $0x160] sm:$0xff]
    %v653 = vld [vmem:[#allocation2 + $0x168] sm:$0xff]
    %v654 = vld [vmem:[#allocation2 + $0x170] sm:$0xff]
    %v655 = vld [vmem:[#allocation2 + $0x178] sm:$0xff]
    %v656 = vld [vmem:[%s2] sm:$0x7]
    %v658 = vlaneseq
    %v659 = vshrl.u32 %v658, 7
    %v660 = vsub.s32 0, %v659
    %v661 = vrot.slane %v656, %v660
    %v662 = vlaneseq
    %v663 = vshrl.u32 %v662, 7
    %v664 = vsub.s32 1, %v663
    %v665 = vrot.slane %v656, %v664
    %v666 = vlaneseq
    %v667 = vshrl.u32 %v666, 7
    %v668 = vsub.s32 2, %v667
    %v669 = vrot.slane %v656, %v668
    %v673 = vadd.f32 %v608, %v661
    %v674 = vadd.f32 %v609, %v665
    %v675 = vadd.f32 %v610, %v669
    %v676 = vadd.f32 %v611, %v661
    %v677 = vadd.f32 %v612, %v665
    %v678 = vadd.f32 %v613, %v669
    %v679 = vadd.f32 %v614, %v661
    %v680 = vadd.f32 %v615, %v665
    %v681 = vadd.f32 %v616, %v669
    %v682 = vadd.f32 %v617, %v661
    %v683 = vadd.f32 %v618, %v665
    %v684 = vadd.f32 %v619, %v669
    %v685 = vadd.f32 %v620, %v661
    %v686 = vadd.f32 %v621, %v665
    %v687 = vadd.f32 %v622, %v669
    %v688 = vadd.f32 %v623, %v661
    %v689 = vadd.f32 %v624, %v665
    %v690 = vadd.f32 %v625, %v669
    %v691 = vadd.f32 %v626, %v661
    %v692 = vadd.f32 %v627, %v665
    %v693 = vadd.f32 %v628, %v669
    %v694 = vadd.f32 %v629, %v661
    %v695 = vadd.f32 %v630, %v665
    %v696 = vadd.f32 %v631, %v669
    %v697 = vadd.f32 %v632, %v661
    %v698 = vadd.f32 %v633, %v665
    %v699 = vadd.f32 %v634, %v669
    %v700 = vadd.f32 %v635, %v661
    %v701 = vadd.f32 %v636, %v665
    %v702 = vadd.f32 %v637, %v669
    %v703 = vadd.f32 %v638, %v661
    %v704 = vadd.f32 %v639, %v665
    %v705 = vadd.f32 %v640, %v669
    %v706 = vadd.f32 %v641, %v661
    %v707 = vadd.f32 %v642, %v665
    %v708 = vadd.f32 %v643, %v669
    %v709 = vadd.f32 %v644, %v661
    %v710 = vadd.f32 %v645, %v665
    %v711 = vadd.f32 %v646, %v669
    %v712 = vadd.f32 %v647, %v661
    %v713 = vadd.f32 %v648, %v665
    %v714 = vadd.f32 %v649, %v669
    %v715 = vadd.f32 %v650, %v661
    %v716 = vadd.f32 %v651, %v665
    %v717 = vadd.f32 %v652, %v669
    %v718 = vadd.f32 %v653, %v661
    %v719 = vadd.f32 %v654, %v665
    %v720 = vadd.f32 %v655, %v669
    %721 = vst [vmem:[%s3] sm:$0xff] %v673
    %722 = vst [vmem:[%s3 + $0x8] sm:$0xff] %v674
    %723 = vst [vmem:[%s3 + $0x10] sm:$0xff] %v675
    %724 = vst [vmem:[%s3 + $0x18] sm:$0xff] %v676
    %725 = vst [vmem:[%s3 + $0x20] sm:$0xff] %v677
    %726 = vst [vmem:[%s3 + $0x28] sm:$0xff] %v678
    %727 = vst [vmem:[%s3 + $0x30] sm:$0xff] %v679
    %728 = vst [vmem:[%s3 + $0x38] sm:$0xff] %v680
    %729 = vst [vmem:[%s3 + $0x40] sm:$0xff] %v681
    %730 = vst [vmem:[%s3 + $0x48] sm:$0xff] %v682
    %731 = vst [vmem:[%s3 + $0x50] sm:$0xff] %v683
    %732 = vst [vmem:[%s3 + $0x58] sm:$0xff] %v684
    %733 = vst [vmem:[%s3 + $0x60] sm:$0xff] %v685
    %734 = vst [vmem:[%s3 + $0x68] sm:$0xff] %v686
    %735 = vst [vmem:[%s3 + $0x70] sm:$0xff] %v687
    %736 = vst [vmem:[%s3 + $0x78] sm:$0xff] %v688
    %737 = vst [vmem:[%s3 + $0x80] sm:$0xff] %v689
    %738 = vst [vmem:[%s3 + $0x88] sm:$0xff] %v690
    %739 = vst [vmem:[%s3 + $0x90] sm:$0xff] %v691
    %740 = vst [vmem:[%s3 + $0x98] sm:$0xff] %v692
    %741 = vst [vmem:[%s3 + $0xa0] sm:$0xff] %v693
    %742 = vst [vmem:[%s3 + $0xa8] sm:$0xff] %v694
    %743 = vst [vmem:[%s3 + $0xb0] sm:$0xff] %v695
    %744 = vst [vmem:[%s3 + $0xb8] sm:$0xff] %v696
    %745 = vst [vmem:[%s3 + $0xc0] sm:$0xff] %v697
    %746 = vst [vmem:[%s3 + $0xc8] sm:$0xff] %v698
    %747 = vst [vmem:[%s3 + $0xd0] sm:$0xff] %v699
    %748 = vst [vmem:[%s3 + $0xd8] sm:$0xff] %v700
    %749 = vst [vmem:[%s3 + $0xe0] sm:$0xff] %v701
    %750 = vst [vmem:[%s3 + $0xe8] sm:$0xff] %v702
    %751 = vst [vmem:[%s3 + $0xf0] sm:$0xff] %v703
    %752 = vst [vmem:[%s3 + $0xf8] sm:$0xff] %v704
    %753 = vst [vmem:[%s3 + $0x100] sm:$0xff] %v705
    %754 = vst [vmem:[%s3 + $0x108] sm:$0xff] %v706
    %755 = vst [vmem:[%s3 + $0x110] sm:$0xff] %v707
    %756 = vst [vmem:[%s3 + $0x118] sm:$0xff] %v708
    %757 = vst [vmem:[%s3 + $0x120] sm:$0xff] %v709
    %758 = vst [vmem:[%s3 + $0x128] sm:$0xff] %v710
    %759 = vst [vmem:[%s3 + $0x130] sm:$0xff] %v711
    %760 = vst [vmem:[%s3 + $0x138] sm:$0xff] %v712
    %761 = vst [vmem:[%s3 + $0x140] sm:$0xff] %v713
    %762 = vst [vmem:[%s3 + $0x148] sm:$0xff] %v714
    %763 = vst [vmem:[%s3 + $0x150] sm:$0xff] %v715
    %764 = vst [vmem:[%s3 + $0x158] sm:$0xff] %v716
    %765 = vst [vmem:[%s3 + $0x160] sm:$0xff] %v717
    %766 = vst [vmem:[%s3 + $0x168] sm:$0xff] %v718
    %767 = vst [vmem:[%s3 + $0x170] sm:$0xff] %v719
    %768 = vst [vmem:[%s3 + $0x178] sm:$0xff] %v720
  $region21: #{multi_scale_attention.3} parent=0 // pred_fallthru
    _
  // Predicated region
  $region22: #{multi_scale_attention.3} parent=0 // pred_check
    _
  $region23: #{multi_scale_attention.3} parent=0 // pred_check_branch
    %770 = sbr.rel (0) target = $region25
  $region24: #{multi_scale_attention.3} parent=0 // pred_region
    _
  $region25: #{multi_scale_attention.3} parent=0 // pred_fallthru
    _
  // Predicated region
  $region26: #{multi_scale_attention.3} parent=0 // pred_check
    _
  $region27: #{multi_scale_attention.3} parent=0 // pred_check_branch
    %772 = sbr.rel (0) target = $region29
  $region28: #{multi_scale_attention.3} parent=0 // pred_region
    _
  $region29: #{multi_scale_attention.3} parent=0 // pred_fallthru
    _

// kernel: multi_scale_attention.4
$region0: #{multi_scale_attention.4}
  #allocation0 [shape = 'u32[]', space=smem, size = 0x4, offset = 0x4, fixed_abs, tag = 'smem constant byte address 0x4 - core index']
  #allocation1 [shape = 'u32[144,128]{1,0:T(1,128)}', space=vmem, size = 0x12000, scoped, tag = 'internal scratch']
  #allocation2 [shape = 'f32[2,64,1]{2,1,0:T(8,128)}', space=vmem, size = 0x10000, scoped, tag = 'scratch operand']
  #allocation3 [shape = 'f32[2,64,1]{2,1,0:T(8,128)}', space=vmem, size = 0x10000, scoped, tag = 'scratch operand']
  #allocation4 [shape = 'f32[2,64,64]{2,1,0:T(8,128)}', space=vmem, size = 0x10000, scoped, tag = 'scratch operand']
  %s0 = inlined_call_operand.vmem [shape: f32[2,64,384], index: 0, kind: input, shape index: {}, may-alias: {0,1,2}]
  %s1 = inlined_call_operand.vmem [shape: f32[2,64,384], index: 1, kind: input, shape index: {}, may-alias: {0,1,2}]
  %s2 = inlined_call_operand.vmem [shape: f32[2,64,384], index: 2, kind: input, shape index: {}, may-alias: {0,1,2}]
  %s3 = inlined_call_operand.vmem [shape: f32[2,64,128], index: 3, kind: output, shape index: {}]
  %s4 = sld [smem:[#allocation0]]
  $region167: #{multi_scale_attention.4} parent=0
    _
  %s6 = ssub.s32 1, %s4
  %s7 = scalar_select 0, %s6, %s4
  $region1: #{multi_scale_attention.4} parent=0
    #allocation5 [shape = 'u8[65536]{0}', space=vmem, size = 0x10000, scoped, tag = 'input window, operand 0']
    #allocation6 [shape = 'u8[65536]{0}', space=vmem, size = 0x10000, scoped, tag = 'input window, operand 1']
    #allocation7 [shape = 'u8[65536]{0}', space=vmem, size = 0x10000, scoped, tag = 'input window, operand 2']
    loop: start=0, step=1, limit=4
    $region2: #{multi_scale_attention.4} parent=1 // loop_pre_header
      _
    $region3: #{multi_scale_attention.4} parent=1 // loop_header
      %s9 = sphi 0, %s13
      %p10 = scmp.ge.s32.totalorder %s9, 4
      %s16 = sphi 0, %s35
      %s17 = sphi 0, %s31
      %s18 = sphi 0, %s27
      %s19 = sphi 0, %s16
      %s20 = sphi 0, %s17
      %s21 = sphi 0, %s18
      %s22 = sphi 0, %s19
      %s23 = sphi 0, %s20
      %s24 = sphi 0, %s21
      %s40 = sphi 0, %s42
      %s43 = sphi 0, %s40
      %s44 = sphi 0, %s43
      %s60 = sphi 0, %s44
      %s68 = sphi 0, %s70
      %s71 = sphi 0, %s68
      %s72 = sphi 0, %s71
      %s88 = sphi 0, %s72
      %s96 = sphi 0, %s98
      %s99 = sphi 0, %s96
      %s100 = sphi 0, %s99
      %s116 = sphi 0, %s100
      %s124 = sphi 0, %s126
      %s127 = sphi 0, %s124
      %s128 = sphi 0, %s127
      %s144 = sphi 0, %s128
    $region4: #{multi_scale_attention.4} parent=1 // loop_header_branch
      %12 = sbr.rel (%p10) target = $region8
    $region5: #{multi_scale_attention.4} parent=1 // loop_body
      %s14 = ssub.s32 %s9, 1
      %s15 = ssub.s32 %s9, 2
      %s25 = sadd.s32 1, %s18
      %p26 = scmp.ge.s32.totalorder %s25, 1
      %s27 = scalar_select %p26, 0, %s25
      %s28 = sadd.s32 1, %s17
      %s29 = scalar_select %p26, %s28, %s17
      %p30 = scmp.ge.s32.totalorder %s29, 1
      %s31 = scalar_select %p30, 0, %s29
      %s32 = sadd.s32 1, %s16
      %s33 = scalar_select %p30, %s32, %s16
      %p34 = scmp.ge.s32.totalorder %s33, 2
      %s35 = scalar_select %p34, 0, %s33
      %s36 = ssub.s32 %s16, %s35
      %s37 = ssub.s32 %s17, %s31
      %s38 = sor.u32 %s36, %s37
      %p39 = scmp.eq.s32.totalorder %s38, 0
      %s41 = sadd.s32 %s40, 1
      %s42 = scalar_select %p39, %s40, %s41
      %p45 = pneg %p39
      %p46 = scmp.eq.s32.totalorder %s9, 1
      %p47 = por %p45, %p46
      %p48 = scmp.ne.s32.totalorder %s40, %s43
      %p49 = scmp.eq.s32.totalorder %s9, 0
      %p50 = por %p48, %p49
      %p51 = scmp.ne.s32.totalorder %s40, %s43
      %p52 = scmp.eq.s32.totalorder %s14, 1
      %p53 = por %p51, %p52
      %p54 = scmp.ne.s32.totalorder %s43, %s44
      %p55 = scmp.eq.s32.totalorder %s14, 0
      %p56 = por %p54, %p55
      %p57 = scmp.ne.s32.totalorder %s43, %s44
      %p58 = scmp.eq.s32.totalorder %s15, 1
      %p59 = por %p57, %p58
      %p61 = scmp.ne.s32.totalorder %s44, %s60
      %p62 = scmp.eq.s32.totalorder %s15, 0
      %p63 = por %p61, %p62
      %s64 = ssub.s32 %s16, %s35
      %s65 = ssub.s32 %s18, %s27
      %s66 = sor.u32 %s64, %s65
      %p67 = scmp.eq.s32.totalorder %s66, 0
      %s69 = sadd.s32 %s68, 1
      %s70 = scalar_select %p67, %s68, %s69
      %p73 = pneg %p67
      %p74 = scmp.eq.s32.totalorder %s9, 1
      %p75 = por %p73, %p74
      %p76 = scmp.ne.s32.totalorder %s68, %s71
      %p77 = scmp.eq.s32.totalorder %s9, 0
      %p78 = por %p76, %p77
      %p79 = scmp.ne.s32.totalorder %s68, %s71
      %p80 = scmp.eq.s32.totalorder %s14, 1
      %p81 = por %p79, %p80
      %p82 = scmp.ne.s32.totalorder %s71, %s72
      %p83 = scmp.eq.s32.totalorder %s14, 0
      %p84 = por %p82, %p83
      %p85 = scmp.ne.s32.totalorder %s71, %s72
      %p86 = scmp.eq.s32.totalorder %s15, 1
      %p87 = por %p85, %p86
      %p89 = scmp.ne.s32.totalorder %s72, %s88
      %p90 = scmp.eq.s32.totalorder %s15, 0
      %p91 = por %p89, %p90
      %s92 = ssub.s32 %s16, %s35
      %s93 = ssub.s32 %s18, %s27
      %s94 = sor.u32 %s92, %s93
      %p95 = scmp.eq.s32.totalorder %s94, 0
      %s97 = sadd.s32 %s96, 1
      %s98 = scalar_select %p95, %s96, %s97
      %p101 = pneg %p95
      %p102 = scmp.eq.s32.totalorder %s9, 1
      %p103 = por %p101, %p102
      %p104 = scmp.ne.s32.totalorder %s96, %s99
      %p105 = scmp.eq.s32.totalorder %s9, 0
      %p106 = por %p104, %p105
      %p107 = scmp.ne.s32.totalorder %s96, %s99
      %p108 = scmp.eq.s32.totalorder %s14, 1
      %p109 = por %p107, %p108
      %p110 = scmp.ne.s32.totalorder %s99, %s100
      %p111 = scmp.eq.s32.totalorder %s14, 0
      %p112 = por %p110, %p111
      %p113 = scmp.ne.s32.totalorder %s99, %s100
      %p114 = scmp.eq.s32.totalorder %s15, 1
      %p115 = por %p113, %p114
      %p117 = scmp.ne.s32.totalorder %s100, %s116
      %p118 = scmp.eq.s32.totalorder %s15, 0
      %p119 = por %p117, %p118
      %s120 = ssub.s32 %s16, %s35
      %s121 = ssub.s32 %s17, %s31
      %s122 = sor.u32 %s120, %s121
      %p123 = scmp.eq.s32.totalorder %s122, 0
      %s125 = sadd.s32 %s124, 1
      %s126 = scalar_select %p123, %s124, %s125
      %p129 = pneg %p123
      %p130 = scmp.eq.s32.totalorder %s9, 1
      %p131 = por %p129, %p130
      %p132 = scmp.ne.s32.totalorder %s124, %s127
      %p133 = scmp.eq.s32.totalorder %s9, 0
      %p134 = por %p132, %p133
      %p135 = scmp.ne.s32.totalorder %s124, %s127
      %p136 = scmp.eq.s32.totalorder %s14, 1
      %p137 = por %p135, %p136
      %p138 = scmp.ne.s32.totalorder %s127, %s128
      %p139 = scmp.eq.s32.totalorder %s14, 0
      %p140 = por %p138, %p139
      %p141 = scmp.ne.s32.totalorder %s127, %s128
      %p142 = scmp.eq.s32.totalorder %s15, 1
      %p143 = por %p141, %p142
      %p145 = scmp.ne.s32.totalorder %s128, %s144
      %p146 = scmp.eq.s32.totalorder %s15, 0
      %p147 = por %p145, %p146
      %p148 = scmp.le.s32.totalorder 1, %s9
      %p149 = scmp.lt.s32.totalorder %s9, 3
      %p150 = pnand %p148, %p149
      %p151 = pneg %p150
      // Predicated region
      $region9: #{multi_scale_attention.4} parent=5 // pred_check
        _
      $region10: #{multi_scale_attention.4} parent=5 // pred_check_branch
        %153 = sbr.rel (%p150) target = $region12
      $region11: #{multi_scale_attention.4} parent=5 // pred_region
        %s154 = ssub.s32 %s9, 1
      $region12: #{multi_scale_attention.4} parent=5 // pred_fallthru
        _
      %p155 = scmp.lt.s32.totalorder %s9, 2
      // Predicated region
      $region13: #{multi_scale_attention.4} parent=5 // pred_check
        %p156 = pneg %p155
      $region14: #{multi_scale_attention.4} parent=5 // pred_check_branch
        %158 = sbr.rel (%p156) target = $region16
      $region15: #{multi_scale_attention.4} parent=5 // pred_region
        // Predicated region
        $region17: #{multi_scale_attention.4} parent=15 // pred_check
          %p159 = pneg %p50
        $region18: #{multi_scale_attention.4} parent=15 // pred_check_branch
          %161 = sbr.rel (%p159) target = $region20
        $region19: #{multi_scale_attention.4} parent=15 // pred_region
          %s162 = sand.u32 %s40, 1
          %s163 = sand.u32 %s40, 1
          %s164 = smul.addr %s163, 64
          %s165 = scalar_lea.vmem [#allocation5], %s164
          %s166 = smul.u32 8, %s17
          %s167 = smul.addr %s166, 3
          %s168 = smul.addr %s16, 24
          %s169 = sadd.s32 %s167, %s168
          %s170 = smul.addr %s169, 8
          %s171 = scalar_lea.vmem %s0, %s170
          // Predicated region
          $region21: #{multi_scale_attention.4} parent=19 // pred_check
            _
          $region22: #{multi_scale_attention.4} parent=19 // pred_check_branch
            %173 = sbr.rel (0) target = $region24
          $region23: #{multi_scale_attention.4} parent=19 // pred_region
            // Predicated region
            $region25: #{multi_scale_attention.4} parent=23 // pred_check
              _
            $region26: #{multi_scale_attention.4} parent=23 // pred_check_branch
              %175 = sbr.rel (0) target = $region28
            $region27: #{multi_scale_attention.4} parent=23 // pred_region
              // Predicated region
              $region40: #{multi_scale_attention.4} parent=27 // pred_check
                _
              $region41: #{multi_scale_attention.4} parent=27 // pred_check_branch
                %204 = sbr.rel (0) target = $region43
              $region42: #{multi_scale_attention.4} parent=27 // pred_region
                loop: start=0, step=1, limit=1
                $region44: #{multi_scale_attention.4} parent=42 // loop_pre_header
                  _
                $region45: #{multi_scale_attention.4} parent=42 // loop_header
                  %s206 = sphi 0, %s210
                  %p207 = scmp.ge.s32.totalorder %s206, 1
                  %s211 = sphi %s171, %s171
                  %s212 = sphi %s165, %s165
                $region46: #{multi_scale_attention.4} parent=42 // loop_header_branch
                  %209 = sbr.rel (%p207) target = $region50
                $region47: #{multi_scale_attention.4} parent=42 // loop_body
                  %v213 = vld [vmem:[%s211] sm:$0xff]
                  %214 = vst [vmem:[%s212] sm:$0xff] %v213
                  %v215 = vld [vmem:[%s211 + $0x18] sm:$0xff]
                  %216 = vst [vmem:[%s212 + $0x8] sm:$0xff] %v215
                  %v217 = vld [vmem:[%s211 + $0x30] sm:$0xff]
                  %218 = vst [vmem:[%s212 + $0x10] sm:$0xff] %v217
                  %v219 = vld [vmem:[%s211 + $0x48] sm:$0xff]
                  %220 = vst [vmem:[%s212 + $0x18] sm:$0xff] %v219
                  %v221 = vld [vmem:[%s211 + $0x60] sm:$0xff]
                  %222 = vst [vmem:[%s212 + $0x20] sm:$0xff] %v221
                  %v223 = vld [vmem:[%s211 + $0x78] sm:$0xff]
                  %224 = vst [vmem:[%s212 + $0x28] sm:$0xff] %v223
                  %v225 = vld [vmem:[%s211 + $0x90] sm:$0xff]
                  %226 = vst [vmem:[%s212 + $0x30] sm:$0xff] %v225
                  %v227 = vld [vmem:[%s211 + $0xa8] sm:$0xff]
                  %228 = vst [vmem:[%s212 + $0x38] sm:$0xff] %v227
                $region48: #{multi_scale_attention.4} parent=42 // loop_footer
                  %s210 = sadd.s32 1, %s206
                $region49: #{multi_scale_attention.4} parent=42 // loop_footer_branch
                  %205 = sbr.rel target = $region45
                $region50: #{multi_scale_attention.4} parent=42 // loop_exit
                  _
              $region43: #{multi_scale_attention.4} parent=27 // pred_fallthru
                _
              // Predicated region
              $region51: #{multi_scale_attention.4} parent=27 // pred_check
                _
              $region52: #{multi_scale_attention.4} parent=27 // pred_check_branch
                %230 = sbr.rel target = $region54
              $region53: #{multi_scale_attention.4} parent=27 // pred_region
                _
              $region54: #{multi_scale_attention.4} parent=27 // pred_fallthru
                _
            $region28: #{multi_scale_attention.4} parent=23 // pred_fallthru
              _
            // Predicated region
            $region29: #{multi_scale_attention.4} parent=23 // pred_check
              _
            $region30: #{multi_scale_attention.4} parent=23 // pred_check_branch
              %177 = sbr.rel target = $region32
            $region31: #{multi_scale_attention.4} parent=23 // pred_region
              loop: start=0, step=1, limit=1
              $region33: #{multi_scale_attention.4} parent=31 // loop_pre_header
                _
              $region34: #{multi_scale_attention.4} parent=31 // loop_header
                %s180 = sphi 0, %s184
                %p181 = scmp.ge.s32.totalorder %s180, 1
                %s185 = sphi %s171, %s171
                %s186 = sphi %s165, %s165
              $region35: #{multi_scale_attention.4} parent=31 // loop_header_branch
                %183 = sbr.rel (%p181) target = $region39
              $region36: #{multi_scale_attention.4} parent=31 // loop_body
                %v187 = vld [vmem:[%s185] sm:$0xff]
                %188 = vst [vmem:[%s186] sm:$0xff] %v187
                %v189 = vld [vmem:[%s185 + $0x18] sm:$0xff]
                %190 = vst [vmem:[%s186 + $0x8] sm:$0xff] %v189
                %v191 = vld [vmem:[%s185 + $0x30] sm:$0xff]
                %192 = vst [vmem:[%s186 + $0x10] sm:$0xff] %v191
                %v193 = vld [vmem:[%s185 + $0x48] sm:$0xff]
                %194 = vst [vmem:[%s186 + $0x18] sm:$0xff] %v193
                %v195 = vld [vmem:[%s185 + $0x60] sm:$0xff]
                %196 = vst [vmem:[%s186 + $0x20] sm:$0xff] %v195
                %v197 = vld [vmem:[%s185 + $0x78] sm:$0xff]
                %198 = vst [vmem:[%s186 + $0x28] sm:$0xff] %v197
                %v199 = vld [vmem:[%s185 + $0x90] sm:$0xff]
                %200 = vst [vmem:[%s186 + $0x30] sm:$0xff] %v199
                %v201 = vld [vmem:[%s185 + $0xa8] sm:$0xff]
                %202 = vst [vmem:[%s186 + $0x38] sm:$0xff] %v201
              $region37: #{multi_scale_attention.4} parent=31 // loop_footer
                %s184 = sadd.s32 1, %s180
              $region38: #{multi_scale_attention.4} parent=31 // loop_footer_branch
                %179 = sbr.rel target = $region34
              $region39: #{multi_scale_attention.4} parent=31 // loop_exit
                _
            $region32: #{multi_scale_attention.4} parent=23 // pred_fallthru
              _
          $region24: #{multi_scale_attention.4} parent=19 // pred_fallthru
            _
          %231 = vnop
        $region20: #{multi_scale_attention.4} parent=15 // pred_fallthru
          _
        // Predicated region
        $region55: #{multi_scale_attention.4} parent=15 // pred_check
          %p232 = pneg %p78
        $region56: #{multi_scale_attention.4} parent=15 // pred_check_branch
          %234 = sbr.rel (%p232) target = $region58
        $region57: #{multi_scale_attention.4} parent=15 // pred_region
          %s235 = sand.u32 %s68, 1
          %s236 = sand.u32 %s68, 1
          %s237 = smul.addr %s236, 64
          %s238 = scalar_lea.vmem [#allocation6], %s237
          %s239 = smul.u32 8, %s18
          %s240 = smul.addr %s239, 3
          %s241 = sadd.s32 1, %s240
          %s242 = smul.addr %s16, 24
          %s243 = sadd.s32 %s241, %s242
          %s244 = smul.addr %s243, 8
          %s245 = scalar_lea.vmem %s1, %s244
          // Predicated region
          $region59: #{multi_scale_attention.4} parent=57 // pred_check
            _
          $region60: #{multi_scale_attention.4} parent=57 // pred_check_branch
            %247 = sbr.rel (0) target = $region62
          $region61: #{multi_scale_attention.4} parent=57 // pred_region
            // Predicated region
            $region63: #{multi_scale_attention.4} parent=61 // pred_check
              _
            $region64: #{multi_scale_attention.4} parent=61 // pred_check_branch
              %249 = sbr.rel (0) target = $region66
            $region65: #{multi_scale_attention.4} parent=61 // pred_region
              // Predicated region
              $region78: #{multi_scale_attention.4} parent=65 // pred_check
                _
              $region79: #{multi_scale_attention.4} parent=65 // pred_check_branch
                %278 = sbr.rel (0) target = $region81
              $region80: #{multi_scale_attention.4} parent=65 // pred_region
                loop: start=0, step=1, limit=1
                $region82: #{multi_scale_attention.4} parent=80 // loop_pre_header
                  _
                $region83: #{multi_scale_attention.4} parent=80 // loop_header
                  %s280 = sphi 0, %s284
                  %p281 = scmp.ge.s32.totalorder %s280, 1
                  %s285 = sphi %s245, %s245
                  %s286 = sphi %s238, %s238
                $region84: #{multi_scale_attention.4} parent=80 // loop_header_branch
                  %283 = sbr.rel (%p281) target = $region88
                $region85: #{multi_scale_attention.4} parent=80 // loop_body
                  %v287 = vld [vmem:[%s285] sm:$0xff]
                  %288 = vst [vmem:[%s286] sm:$0xff] %v287
                  %v289 = vld [vmem:[%s285 + $0x18] sm:$0xff]
                  %290 = vst [vmem:[%s286 + $0x8] sm:$0xff] %v289
                  %v291 = vld [vmem:[%s285 + $0x30] sm:$0xff]
                  %292 = vst [vmem:[%s286 + $0x10] sm:$0xff] %v291
                  %v293 = vld [vmem:[%s285 + $0x48] sm:$0xff]
                  %294 = vst [vmem:[%s286 + $0x18] sm:$0xff] %v293
                  %v295 = vld [vmem:[%s285 + $0x60] sm:$0xff]
                  %296 = vst [vmem:[%s286 + $0x20] sm:$0xff] %v295
                  %v297 = vld [vmem:[%s285 + $0x78] sm:$0xff]
                  %298 = vst [vmem:[%s286 + $0x28] sm:$0xff] %v297
                  %v299 = vld [vmem:[%s285 + $0x90] sm:$0xff]
                  %300 = vst [vmem:[%s286 + $0x30] sm:$0xff] %v299
                  %v301 = vld [vmem:[%s285 + $0xa8] sm:$0xff]
                  %302 = vst [vmem:[%s286 + $0x38] sm:$0xff] %v301
                $region86: #{multi_scale_attention.4} parent=80 // loop_footer
                  %s284 = sadd.s32 1, %s280
                $region87: #{multi_scale_attention.4} parent=80 // loop_footer_branch
                  %279 = sbr.rel target = $region83
                $region88: #{multi_scale_attention.4} parent=80 // loop_exit
                  _
              $region81: #{multi_scale_attention.4} parent=65 // pred_fallthru
                _
              // Predicated region
              $region89: #{multi_scale_attention.4} parent=65 // pred_check
                _
              $region90: #{multi_scale_attention.4} parent=65 // pred_check_branch
                %304 = sbr.rel target = $region92
              $region91: #{multi_scale_attention.4} parent=65 // pred_region
                _
              $region92: #{multi_scale_attention.4} parent=65 // pred_fallthru
                _
            $region66: #{multi_scale_attention.4} parent=61 // pred_fallthru
              _
            // Predicated region
            $region67: #{multi_scale_attention.4} parent=61 // pred_check
              _
            $region68: #{multi_scale_attention.4} parent=61 // pred_check_branch
              %251 = sbr.rel target = $region70
            $region69: #{multi_scale_attention.4} parent=61 // pred_region
              loop: start=0, step=1, limit=1
              $region71: #{multi_scale_attention.4} parent=69 // loop_pre_header
                _
              $region72: #{multi_scale_attention.4} parent=69 // loop_header
                %s254 = sphi 0, %s258
                %p255 = scmp.ge.s32.totalorder %s254, 1
                %s259 = sphi %s245, %s245
                %s260 = sphi %s238, %s238
              $region73: #{multi_scale_attention.4} parent=69 // loop_header_branch
                %257 = sbr.rel (%p255) target = $region77
              $region74: #{multi_scale_attention.4} parent=69 // loop_body
                %v261 = vld [vmem:[%s259] sm:$0xff]
                %262 = vst [vmem:[%s260] sm:$0xff] %v261
                %v263 = vld [vmem:[%s259 + $0x18] sm:$0xff]
                %264 = vst [vmem:[%s260 + $0x8] sm:$0xff] %v263
                %v265 = vld [vmem:[%s259 + $0x30] sm:$0xff]
                %266 = vst [vmem:[%s260 + $0x10] sm:$0xff] %v265
                %v267 = vld [vmem:[%s259 + $0x48] sm:$0xff]
                %268 = vst [vmem:[%s260 + $0x18] sm:$0xff] %v267
                %v269 = vld [vmem:[%s259 + $0x60] sm:$0xff]
                %270 = vst [vmem:[%s260 + $0x20] sm:$0xff] %v269
                %v271 = vld [vmem:[%s259 + $0x78] sm:$0xff]
                %272 = vst [vmem:[%s260 + $0x28] sm:$0xff] %v271
                %v273 = vld [vmem:[%s259 + $0x90] sm:$0xff]
                %274 = vst [vmem:[%s260 + $0x30] sm:$0xff] %v273
                %v275 = vld [vmem:[%s259 + $0xa8] sm:$0xff]
                %276 = vst [vmem:[%s260 + $0x38] sm:$0xff] %v275
              $region75: #{multi_scale_attention.4} parent=69 // loop_footer
                %s258 = sadd.s32 1, %s254
              $region76: #{multi_scale_attention.4} parent=69 // loop_footer_branch
                %253 = sbr.rel target = $region72
              $region77: #{multi_scale_attention.4} parent=69 // loop_exit
                _
            $region70: #{multi_scale_attention.4} parent=61 // pred_fallthru
              _
          $region62: #{multi_scale_attention.4} parent=57 // pred_fallthru
            _
          %305 = vnop
        $region58: #{multi_scale_attention.4} parent=15 // pred_fallthru
          _
        // Predicated region
        $region93: #{multi_scale_attention.4} parent=15 // pred_check
          %p306 = pneg %p106
        $region94: #{multi_scale_attention.4} parent=15 // pred_check_branch
          %308 = sbr.rel (%p306) target = $region96
        $region95: #{multi_scale_attention.4} parent=15 // pred_region
          %s309 = sand.u32 %s96, 1
          %s310 = sand.u32 %s96, 1
          %s311 = smul.addr %s310, 64
          %s312 = scalar_lea.vmem [#allocation7], %s311
          %s313 = smul.u32 8, %s18
          %s314 = smul.addr %s313, 3
          %s315 = sadd.s32 2, %s314
          %s316 = smul.addr %s16, 24
          %s317 = sadd.s32 %s315, %s316
          %s318 = smul.addr %s317, 8
          %s319 = scalar_lea.vmem %s2, %s318
          // Predicated region
          $region97: #{multi_scale_attention.4} parent=95 // pred_check
            _
          $region98: #{multi_scale_attention.4} parent=95 // pred_check_branch
            %321 = sbr.rel (0) target = $region100
          $region99: #{multi_scale_attention.4} parent=95 // pred_region
            // Predicated region
            $region101: #{multi_scale_attention.4} parent=99 // pred_check
              _
            $region102: #{multi_scale_attention.4} parent=99 // pred_check_branch
              %323 = sbr.rel (0) target = $region104
            $region103: #{multi_scale_attention.4} parent=99 // pred_region
              // Predicated region
              $region116: #{multi_scale_attention.4} parent=103 // pred_check
                _
              $region117: #{multi_scale_attention.4} parent=103 // pred_check_branch
                %352 = sbr.rel (0) target = $region119
              $region118: #{multi_scale_attention.4} parent=103 // pred_region
                loop: start=0, step=1, limit=1
                $region120: #{multi_scale_attention.4} parent=118 // loop_pre_header
                  _
                $region121: #{multi_scale_attention.4} parent=118 // loop_header
                  %s354 = sphi 0, %s358
                  %p355 = scmp.ge.s32.totalorder %s354, 1
                  %s359 = sphi %s319, %s319
                  %s360 = sphi %s312, %s312
                $region122: #{multi_scale_attention.4} parent=118 // loop_header_branch
                  %357 = sbr.rel (%p355) target = $region126
                $region123: #{multi_scale_attention.4} parent=118 // loop_body
                  %v361 = vld [vmem:[%s359] sm:$0xff]
                  %362 = vst [vmem:[%s360] sm:$0xff] %v361
                  %v363 = vld [vmem:[%s359 + $0x18] sm:$0xff]
                  %364 = vst [vmem:[%s360 + $0x8] sm:$0xff] %v363
                  %v365 = vld [vmem:[%s359 + $0x30] sm:$0xff]
                  %366 = vst [vmem:[%s360 + $0x10] sm:$0xff] %v365
                  %v367 = vld [vmem:[%s359 + $0x48] sm:$0xff]
                  %368 = vst [vmem:[%s360 + $0x18] sm:$0xff] %v367
                  %v369 = vld [vmem:[%s359 + $0x60] sm:$0xff]
                  %370 = vst [vmem:[%s360 + $0x20] sm:$0xff] %v369
                  %v371 = vld [vmem:[%s359 + $0x78] sm:$0xff]
                  %372 = vst [vmem:[%s360 + $0x28] sm:$0xff] %v371
                  %v373 = vld [vmem:[%s359 + $0x90] sm:$0xff]
                  %374 = vst [vmem:[%s360 + $0x30] sm:$0xff] %v373
                  %v375 = vld [vmem:[%s359 + $0xa8] sm:$0xff]
                  %376 = vst [vmem:[%s360 + $0x38] sm:$0xff] %v375
                $region124: #{multi_scale_attention.4} parent=118 // loop_footer
                  %s358 = sadd.s32 1, %s354
                $region125: #{multi_scale_attention.4} parent=118 // loop_footer_branch
                  %353 = sbr.rel target = $region121
                $region126: #{multi_scale_attention.4} parent=118 // loop_exit
                  _
              $region119: #{multi_scale_attention.4} parent=103 // pred_fallthru
                _
              // Predicated region
              $region127: #{multi_scale_attention.4} parent=103 // pred_check
                _
              $region128: #{multi_scale_attention.4} parent=103 // pred_check_branch
                %378 = sbr.rel target = $region130
              $region129: #{multi_scale_attention.4} parent=103 // pred_region
                _
              $region130: #{multi_scale_attention.4} parent=103 // pred_fallthru
                _
            $region104: #{multi_scale_attention.4} parent=99 // pred_fallthru
              _
            // Predicated region
            $region105: #{multi_scale_attention.4} parent=99 // pred_check
              _
            $region106: #{multi_scale_attention.4} parent=99 // pred_check_branch
              %325 = sbr.rel target = $region108
            $region107: #{multi_scale_attention.4} parent=99 // pred_region
              loop: start=0, step=1, limit=1
              $region109: #{multi_scale_attention.4} parent=107 // loop_pre_header
                _
              $region110: #{multi_scale_attention.4} parent=107 // loop_header
                %s328 = sphi 0, %s332
                %p329 = scmp.ge.s32.totalorder %s328, 1
                %s333 = sphi %s319, %s319
                %s334 = sphi %s312, %s312
              $region111: #{multi_scale_attention.4} parent=107 // loop_header_branch
                %331 = sbr.rel (%p329) target = $region115
              $region112: #{multi_scale_attention.4} parent=107 // loop_body
                %v335 = vld [vmem:[%s333] sm:$0xff]
                %336 = vst [vmem:[%s334] sm:$0xff] %v335
                %v337 = vld [vmem:[%s333 + $0x18] sm:$0xff]
                %338 = vst [vmem:[%s334 + $0x8] sm:$0xff] %v337
                %v339 = vld [vmem:[%s333 + $0x30] sm:$0xff]
                %340 = vst [vmem:[%s334 + $0x10] sm:$0xff] %v339
                %v341 = vld [vmem:[%s333 + $0x48] sm:$0xff]
                %342 = vst [vmem:[%s334 + $0x18] sm:$0xff] %v341
                %v343 = vld [vmem:[%s333 + $0x60] sm:$0xff]
                %344 = vst [vmem:[%s334 + $0x20] sm:$0xff] %v343
                %v345 = vld [vmem:[%s333 + $0x78] sm:$0xff]
                %346 = vst [vmem:[%s334 + $0x28] sm:$0xff] %v345
                %v347 = vld [vmem:[%s333 + $0x90] sm:$0xff]
                %348 = vst [vmem:[%s334 + $0x30] sm:$0xff] %v347
                %v349 = vld [vmem:[%s333 + $0xa8] sm:$0xff]
                %350 = vst [vmem:[%s334 + $0x38] sm:$0xff] %v349
              $region113: #{multi_scale_attention.4} parent=107 // loop_footer
                %s332 = sadd.s32 1, %s328
              $region114: #{multi_scale_attention.4} parent=107 // loop_footer_branch
                %327 = sbr.rel target = $region110
              $region115: #{multi_scale_attention.4} parent=107 // loop_exit
                _
            $region108: #{multi_scale_attention.4} parent=99 // pred_fallthru
              _
          $region100: #{multi_scale_attention.4} parent=95 // pred_fallthru
            _
          %379 = vnop
        $region96: #{multi_scale_attention.4} parent=15 // pred_fallthru
          _
      $region16: #{multi_scale_attention.4} parent=5 // pred_fallthru
        _
      %p380 = scmp.le.s32.totalorder 1, %s9
      %p381 = scmp.lt.s32.totalorder %s9, 3
      %p382 = pnand %p380, %p381
      %p383 = pneg %p382
      // Predicated region
      $region131: #{multi_scale_attention.4} parent=5 // pred_check
        _
      $region132: #{multi_scale_attention.4} parent=5 // pred_check_branch
        %385 = sbr.rel (%p382) target = $region134
      $region133: #{multi_scale_attention.4} parent=5 // pred_region
        %s386 = ssub.s32 %s9, 1
        %s387 = sand.u32 %s43, 1
        %s388 = sand.u32 %s43, 1
        %s389 = smul.addr %s388, 64
        %s390 = scalar_lea.vmem [#allocation5], %s389
        // Predicated region
        $region135: #{multi_scale_attention.4} parent=133 // pred_check
          %p391 = pneg %p56
        $region136: #{multi_scale_attention.4} parent=133 // pred_check_branch
          %393 = sbr.rel (%p391) target = $region138
        $region137: #{multi_scale_attention.4} parent=133 // pred_region
          _
        $region138: #{multi_scale_attention.4} parent=133 // pred_fallthru
          _
        %s394 = sand.u32 %s71, 1
        %s395 = sand.u32 %s71, 1
        %s396 = smul.addr %s395, 64
        %s397 = scalar_lea.vmem [#allocation6], %s396
        // Predicated region
        $region139: #{multi_scale_attention.4} parent=133 // pred_check
          %p398 = pneg %p84
        $region140: #{multi_scale_attention.4} parent=133 // pred_check_branch
          %400 = sbr.rel (%p398) target = $region142
        $region141: #{multi_scale_attention.4} parent=133 // pred_region
          _
        $region142: #{multi_scale_attention.4} parent=133 // pred_fallthru
          _
        %s401 = sand.u32 %s99, 1
        %s402 = sand.u32 %s99, 1
        %s403 = smul.addr %s402, 64
        %s404 = scalar_lea.vmem [#allocation7], %s403
        // Predicated region
        $region143: #{multi_scale_attention.4} parent=133 // pred_check
          %p405 = pneg %p112
        $region144: #{multi_scale_attention.4} parent=133 // pred_check_branch
          %407 = sbr.rel (%p405) target = $region146
        $region145: #{multi_scale_attention.4} parent=133 // pred_region
          _
        $region146: #{multi_scale_attention.4} parent=133 // pred_fallthru
          _
        %s408 = sand.u32 %s43, 1
        %s409 = sand.u32 %s43, 1
        %s410 = smul.addr %s409, 64
        %s411 = scalar_lea.vmem [#allocation5], %s410
        %p412 = pneg %p56
        %p413 = pneg %p53
        %s414 = sand.u32 %s71, 1
        %s415 = sand.u32 %s71, 1
        %s416 = smul.addr %s415, 64
        %s417 = scalar_lea.vmem [#allocation6], %s416
        %p418 = pneg %p84
        %p419 = pneg %p81
        %s420 = sand.u32 %s99, 1
        %s421 = sand.u32 %s99, 1
        %s422 = smul.addr %s421, 64
        %s423 = scalar_lea.vmem [#allocation7], %s422
        %p424 = pneg %p112
        %p425 = pneg %p109
        %p426 = pneg %p140
        %p427 = pneg %p137
        %s428 = smul.u32 8, %s20
        %p429 = scmp.lt.s32.totalorder %s19, 1
        %s430 = scalar_select %p429, %s19, 1
        %p431 = scmp.lt.s32.totalorder %s428, 7
        %s432 = scalar_select %p431, %s428, 7
        %s433 = smul.addr %s430, 8
        %s434 = sadd.s32 %s432, %s433
        %s435 = smul.addr %s434, 8
        %s436 = scalar_lea.vmem %s3, %s435
        %s437 = smul.u32 8, %s20
        %s438 = smul.u32 8, %s21
        %s439 = smul.u32 8, %s21
        %s440 = smul.u32 8, %s20
        %p441 = scmp.lt.s32.totalorder %s19, 1
        %s442 = scalar_select %p441, %s19, 1
        %p443 = scmp.lt.s32.totalorder %s440, 7
        %s444 = scalar_select %p443, %s440, 7
        %s445 = smul.addr %s442, 8
        %s446 = sadd.s32 %s444, %s445
        %s447 = smul.addr %s446, 8
        %s448 = scalar_lea.vmem %s3, %s447
        %s449 = smul.u32 8, %s20
        %p451 = scmp.eq.s32.totalorder %s21, 0
        // Predicated region
        $region147: #{multi_scale_attention.4} parent=133 // pred_check
          %p452 = pneg %p451
        $region148: #{multi_scale_attention.4} parent=133 // pred_check_branch
          %454 = sbr.rel (%p452) target = $region150
        $region149: #{multi_scale_attention.4} parent=133 // pred_region
          %vm455 = vcmask 7168
          %456 = vst.msk [vmem:[#allocation2] sm:$0xff] %vm455, -inf
          %457 = vst.msk [vmem:[#allocation2 + $0x8] sm:$0xff] %vm455, -inf
          %458 = vst.msk [vmem:[#allocation2 + $0x10] sm:$0xff] %vm455, -inf
          %459 = vst.msk [vmem:[#allocation2 + $0x18] sm:$0xff] %vm455, -inf
          %460 = vst.msk [vmem:[#allocation2 + $0x20] sm:$0xff] %vm455, -inf
          %461 = vst.msk [vmem:[#allocation2 + $0x28] sm:$0xff] %vm455, -inf
          %462 = vst.msk [vmem:[#allocation2 + $0x30] sm:$0xff] %vm455, -inf
          %463 = vst.msk [vmem:[#allocation2 + $0x38] sm:$0xff] %vm455, -inf
          %464 = vst.msk [vmem:[#allocation2 + $0x40] sm:$0xff] %vm455, -inf
          %465 = vst.msk [vmem:[#allocation2 + $0x48] sm:$0xff] %vm455, -inf
          %466 = vst.msk [vmem:[#allocation2 + $0x50] sm:$0xff] %vm455, -inf
          %467 = vst.msk [vmem:[#allocation2 + $0x58] sm:$0xff] %vm455, -inf
          %468 = vst.msk [vmem:[#allocation2 + $0x60] sm:$0xff] %vm455, -inf
          %469 = vst.msk [vmem:[#allocation2 + $0x68] sm:$0xff] %vm455, -inf
          %470 = vst.msk [vmem:[#allocation2 + $0x70] sm:$0xff] %vm455, -inf
          %471 = vst.msk [vmem:[#allocation2 + $0x78] sm:$0xff] %vm455, -inf
          %472 = vst.msk [vmem:[#allocation3] sm:$0xff] %vm455, 0.0
          %473 = vst.msk [vmem:[#allocation3 + $0x8] sm:$0xff] %vm455, 0.0
          %474 = vst.msk [vmem:[#allocation3 + $0x10] sm:$0xff] %vm455, 0.0
          %475 = vst.msk [vmem:[#allocation3 + $0x18] sm:$0xff] %vm455, 0.0
          %476 = vst.msk [vmem:[#allocation3 + $0x20] sm:$0xff] %vm455, 0.0
          %477 = vst.msk [vmem:[#allocation3 + $0x28] sm:$0xff] %vm455, 0.0
          %478 = vst.msk [vmem:[#allocation3 + $0x30] sm:$0xff] %vm455, 0.0
          %479 = vst.msk [vmem:[#allocation3 + $0x38] sm:$0xff] %vm455, 0.0
          %480 = vst.msk [vmem:[#allocation3 + $0x40] sm:$0xff] %vm455, 0.0
          %481 = vst.msk [vmem:[#allocation3 + $0x48] sm:$0xff] %vm455, 0.0
          %482 = vst.msk [vmem:[#allocation3 + $0x50] sm:$0xff] %vm455, 0.0
          %483 = vst.msk [vmem:[#allocation3 + $0x58] sm:$0xff] %vm455, 0.0
          %484 = vst.msk [vmem:[#allocation3 + $0x60] sm:$0xff] %vm455, 0.0
          %485 = vst.msk [vmem:[#allocation3 + $0x68] sm:$0xff] %vm455, 0.0
          %486 = vst.msk [vmem:[#allocation3 + $0x70] sm:$0xff] %vm455, 0.0
          %487 = vst.msk [vmem:[#allocation3 + $0x78] sm:$0xff] %vm455, 0.0
          %vm488 = vcmask 523264
          %489 = vst.msk [vmem:[#allocation4] sm:$0xff] %vm488, 0.0
          %490 = vst.msk [vmem:[#allocation4 + $0x8] sm:$0xff] %vm488, 0.0
          %491 = vst.msk [vmem:[#allocation4 + $0x10] sm:$0xff] %vm488, 0.0
          %492 = vst.msk [vmem:[#allocation4 + $0x18] sm:$0xff] %vm488, 0.0
          %493 = vst.msk [vmem:[#allocation4 + $0x20] sm:$0xff] %vm488, 0.0
          %494 = vst.msk [vmem:[#allocation4 + $0x28] sm:$0xff] %vm488, 0.0
          %495 = vst.msk [vmem:[#allocation4 + $0x30] sm:$0xff] %vm488, 0.0
          %496 = vst.msk [vmem:[#allocation4 + $0x38] sm:$0xff] %vm488, 0.0
          %497 = vst.msk [vmem:[#allocation4 + $0x40] sm:$0xff] %vm488, 0.0
          %498 = vst.msk [vmem:[#allocation4 + $0x48] sm:$0xff] %vm488, 0.0
          %499 = vst.msk [vmem:[#allocation4 + $0x50] sm:$0xff] %vm488, 0.0
          %500 = vst.msk [vmem:[#allocation4 + $0x58] sm:$0xff] %vm488, 0.0
          %501 = vst.msk [vmem:[#allocation4 + $0x60] sm:$0xff] %vm488, 0.0
          %502 = vst.msk [vmem:[#allocation4 + $0x68] sm:$0xff] %vm488, 0.0
          %503 = vst.msk [vmem:[#allocation4 + $0x70] sm:$0xff] %vm488, 0.0
          %504 = vst.msk [vmem:[#allocation4 + $0x78] sm:$0xff] %vm488, 0.0
        $region150: #{multi_scale_attention.4} parent=133 // pred_fallthru
          _
        %v505 = vld [vmem:[%s390] sm:$0xff]
        %v506 = vld [vmem:[%s390 + $0x8] sm:$0xff]
        %v507 = vld [vmem:[%s390 + $0x10] sm:$0xff]
        %v508 = vld [vmem:[%s390 + $0x18] sm:$0xff]
        %v509 = vld [vmem:[%s390 + $0x20] sm:$0xff]
        %v510 = vld [vmem:[%s390 + $0x28] sm:$0xff]
        %v511 = vld [vmem:[%s390 + $0x30] sm:$0xff]
        %v512 = vld [vmem:[%s390 + $0x38] sm:$0xff]
        %v513 = vpack.c.bf16 %v506, %v505
        %v514 = vpack.c.bf16 %v508, %v507
        %v515 = vpack.c.bf16 %v510, %v509
        %v516 = vpack.c.bf16 %v512, %v511
        %v517 = vld [vmem:[%s397] sm:$0xff]
        %v518 = vld [vmem:[%s397 + $0x8] sm:$0xff]
        %v519 = vld [vmem:[%s397 + $0x10] sm:$0xff]
        %v520 = vld [vmem:[%s397 + $0x18] sm:$0xff]
        %v521 = vld [vmem:[%s397 + $0x20] sm:$0xff]
        %v522 = vld [vmem:[%s397 + $0x28] sm:$0xff]
        %v523 = vld [vmem:[%s397 + $0x30] sm:$0xff]
        %v524 = vld [vmem:[%s397 + $0x38] sm:$0xff]
        %v525 = vpack.c.bf16 %v518, %v517
        %v526 = vpack.c.bf16 %v520, %v519
        %v527 = vpack.c.bf16 %v522, %v521
        %v528 = vpack.c.bf16 %v524, %v523
        %v529 = vld [vmem:[%s404] sm:$0xff]
        %v530 = vld [vmem:[%s404 + $0x8] sm:$0xff]
        %v531 = vld [vmem:[%s404 + $0x10] sm:$0xff]
        %v532 = vld [vmem:[%s404 + $0x18] sm:$0xff]
        %v533 = vld [vmem:[%s404 + $0x20] sm:$0xff]
        %v534 = vld [vmem:[%s404 + $0x28] sm:$0xff]
        %v535 = vld [vmem:[%s404 + $0x30] sm:$0xff]
        %v536 = vld [vmem:[%s404 + $0x38] sm:$0xff]
        %v537 = vpack.c.bf16 %v530, %v529
        %v538 = vpack.c.bf16 %v532, %v531
        %v539 = vpack.c.bf16 %v534, %v533
        %v540 = vpack.c.bf16 %v536, %v535
        %vm541 = vcmask 523264
        %v543 = vsel %vm541, %v513, 0
        %v546 = vsel %vm541, %v514, 0
        %v549 = vsel %vm541, %v515, 0
        %v552 = vsel %vm541, %v516, 0
        %v555 = vsel %vm541, %v525, 0
        %v558 = vsel %vm541, %v526, 0
        %v561 = vsel %vm541, %v527, 0
        %v564 = vsel %vm541, %v528, 0
        %566 = vmatprep.subr.bf16.mxu0 0
        %567 = vmatpush1.bf16.xpose.msra.mxu0 %v555
        %568 = vmatprep.subr.bf16.mxu0 0
        %569 = vmatpush1.bf16.xpose.msra.mxu0 %v558
        %570 = vmatprep.subr.bf16.mxu0 0
        %571 = vmatpush1.bf16.xpose.msra.mxu0 %v561
        %572 = vmatprep.subr.bf16.mxu0 0
        %573 = vmatpush1.bf16.xpose.msra.mxu0 %v564
        %574 = vmatprep.subr.bf16.mxu0 0
        %575 = vmatpush1.bf16.xpose.msra.mxu0 0
        %576 = vmatprep.subr.bf16.mxu0 0
        %577 = vmatpush1.bf16.xpose.msra.mxu0 0
        %578 = vmatprep.subr.bf16.mxu0 0
        %579 = vmatpush1.bf16.xpose.msra.mxu0 0
        %580 = vmatprep.subr.bf16.mxu0 0
        %581 = vmatpush1.bf16.xpose.msra.mxu0 0
        %582 = vmatprep.subr.bf16.mxu0 0
        %583 = vmatpush1.bf16.xpose.msra.mxu0 0
        %584 = vmatprep.subr.bf16.mxu0 0
        %585 = vmatpush1.bf16.xpose.msra.mxu0 0
        %586 = vmatprep.subr.bf16.mxu0 0
        %587 = vmatpush1.bf16.xpose.msra.mxu0 0
        %588 = vmatprep.subr.bf16.mxu0 0
        %589 = vmatpush1.bf16.xpose.msra.mxu0 0
        %590 = vmatprep.subr.bf16.mxu0 0
        %591 = vmatpush1.bf16.xpose.msra.mxu0 0
        %592 = vmatprep.subr.bf16.mxu0 0
        %593 = vmatpush1.bf16.xpose.msra.mxu0 0
        %594 = vmatprep.subr.bf16.mxu0 0
        %595 = vmatpush1.bf16.xpose.msra.mxu0 0
        %596 = vmatprep.subr.bf16.mxu0 0
        %597 = vmatpush1.bf16.xpose.msra.mxu0 0
        %598 = vmatprep.mubr.bf16.mxu0 0
        %599 = vmatmul.mubr.bf16.gmra.mrb[0].mxu0 %v543
        %v600 = vpop.f32.mrb[0].mxu0
        %v601 = vadd.f32 0.0, %v600
        %v602 = vpop.f32.mrb[0].mxu0
        %v603 = vpop.f32.mrb[0].mxu0
        %v604 = vadd.f32 0.0, %v603
        %v605 = vpop.f32.mrb[0].mxu0
        %606 = vmatprep.mubr.bf16.mxu0 0
        %607 = vmatmul.mubr.bf16.gmra.mrb[0].mxu0 %v546
        %v608 = vpop.f32.mrb[0].mxu0
        %v609 = vadd.f32 0.0, %v608
        %v610 = vpop.f32.mrb[0].mxu0
        %v611 = vpop.f32.mrb[0].mxu0
        %v612 = vadd.f32 0.0, %v611
        %v613 = vpop.f32.mrb[0].mxu0
        %614 = vmatprep.mubr.bf16.mxu0 0
        %615 = vmatmul.mubr.bf16.gmra.mrb[0].mxu0 %v549
        %v616 = vpop.f32.mrb[0].mxu0
        %v617 = vadd.f32 0.0, %v616
        %v618 = vpop.f32.mrb[0].mxu0
        %v619 = vpop.f32.mrb[0].mxu0
        %v620 = vadd.f32 0.0, %v619
        %v621 = vpop.f32.mrb[0].mxu0
        %622 = vmatprep.mubr.bf16.mxu0 0
        %623 = vmatmul.mubr.bf16.gmra.mrb[0].mxu0 %v552
        %v624 = vpop.f32.mrb[0].mxu0
        %v625 = vadd.f32 0.0, %v624
        %v626 = vpop.f32.mrb[0].mxu0
        %v627 = vpop.f32.mrb[0].mxu0
        %v628 = vadd.f32 0.0, %v627
        %v629 = vpop.f32.mrb[0].mxu0
        %630 = vdwg.mxu0
        %v631 = vld [vmem:[#allocation2] sm:$0xff]
        %v632 = vld [vmem:[#allocation2 + $0x8] sm:$0xff]
        %v633 = vld [vmem:[#allocation2 + $0x10] sm:$0xff]
        %v634 = vld [vmem:[#allocation2 + $0x18] sm:$0xff]
        %v635 = vld [vmem:[#allocation2 + $0x20] sm:$0xff]
        %v636 = vld [vmem:[#allocation2 + $0x28] sm:$0xff]
        %v637 = vld [vmem:[#allocation2 + $0x30] sm:$0xff]
        %v638 = vld [vmem:[#allocation2 + $0x38] sm:$0xff]
        %v639 = vsel %vm541, %v601, -inf
        %640 = vmax.xlane.f32.xlu0 %v639
        %v641 = vpop.xlane.xlu0 %640
        %v642 = vsel %vm541, %v604, -inf
        %643 = vmax.xlane.f32.xlu0 %v642
        %v644 = vpop.xlane.xlu0 %643
        %v645 = vsel %vm541, %v609, -inf
        %646 = vmax.xlane.f32.xlu0 %v645
        %v647 = vpop.xlane.xlu0 %646
        %v648 = vsel %vm541, %v612, -inf
        %649 = vmax.xlane.f32.xlu0 %v648
        %v650 = vpop.xlane.xlu0 %649
        %v651 = vsel %vm541, %v617, -inf
        %652 = vmax.xlane.f32.xlu0 %v651
        %v653 = vpop.xlane.xlu0 %652
        %v654 = vsel %vm541, %v620, -inf
        %655 = vmax.xlane.f32.xlu0 %v654
        %v656 = vpop.xlane.xlu0 %655
        %v657 = vsel %vm541, %v625, -inf
        %658 = vmax.xlane.f32.xlu0 %v657
        %v659 = vpop.xlane.xlu0 %658
        %v660 = vsel %vm541, %v628, -inf
        %661 = vmax.xlane.f32.xlu0 %v660
        %v662 = vpop.xlane.xlu0 %661
        %v663 = vmax.f32 %v631, %v641
        %v664 = vmax.f32 %v632, %v644
        %v665 = vmax.f32 %v633, %v647
        %v666 = vmax.f32 %v634, %v650
        %v667 = vmax.f32 %v635, %v653
        %v668 = vmax.f32 %v636, %v656
        %v669 = vmax.f32 %v637, %v659
        %v670 = vmax.f32 %v638, %v662
        %v671 = vsub.f32 %v631, %v663
        %v672 = vsub.f32 %v632, %v664
        %v673 = vsub.f32 %v633, %v665
        %v674 = vsub.f32 %v634, %v666
        %v675 = vsub.f32 %v635, %v667
        %v676 = vsub.f32 %v636, %v668
        %v677 = vsub.f32 %v637, %v669
        %v678 = vsub.f32 %v638, %v670
        %v679 = vmul.f32 %v671, 1.442695
        %v680 = vpow.pop %v679
        %v681 = vmul.f32 %v672, 1.442695
        %v682 = vpow.pop %v681
        %v683 = vmul.f32 %v673, 1.442695
        %v684 = vpow.pop %v683
        %v685 = vmul.f32 %v674, 1.442695
        %v686 = vpow.pop %v685
        %v687 = vmul.f32 %v675, 1.442695
        %v688 = vpow.pop %v687
        %v689 = vmul.f32 %v676, 1.442695
        %v690 = vpow.pop %v689
        %v691 = vmul.f32 %v677, 1.442695
        %v692 = vpow.pop %v691
        %v693 = vmul.f32 %v678, 1.442695
        %v694 = vpow.pop %v693
        %696 = vset.pattern.permute.xlu0 0
        %697 = vperm.xlu0 %696, %v663
        %v698 = vpop.permute.xlu0 %697
        %701 = vset.pattern.permute.xlu0 0
        %702 = vperm.xlu0 %701, %v664
        %v703 = vpop.permute.xlu0 %702
        %706 = vset.pattern.permute.xlu0 0
        %707 = vperm.xlu0 %706, %v665
        %v708 = vpop.permute.xlu0 %707
        %711 = vset.pattern.permute.xlu0 0
        %712 = vperm.xlu0 %711, %v666
        %v713 = vpop.permute.xlu0 %712
        %716 = vset.pattern.permute.xlu0 0
        %717 = vperm.xlu0 %716, %v667
        %v718 = vpop.permute.xlu0 %717
        %721 = vset.pattern.permute.xlu0 0
        %722 = vperm.xlu0 %721, %v668
        %v723 = vpop.permute.xlu0 %722
        %726 = vset.pattern.permute.xlu0 0
        %727 = vperm.xlu0 %726, %v669
        %v728 = vpop.permute.xlu0 %727
        %731 = vset.pattern.permute.xlu0 0
        %732 = vperm.xlu0 %731, %v670
        %v733 = vpop.permute.xlu0 %732
        %v735 = vsub.f32 %v601, %v698
        %v736 = vsub.f32 %v604, %v703
        %v737 = vsub.f32 %v609, %v708
        %v738 = vsub.f32 %v612, %v713
        %v739 = vsub.f32 %v617, %v718
        %v740 = vsub.f32 %v620, %v723
        %v741 = vsub.f32 %v625, %v728
        %v742 = vsub.f32 %v628, %v733
        %v743 = vmul.f32 %v735, 1.442695
        %v744 = vpow.pop %v743
        %v745 = vmul.f32 %v736, 1.442695
        %v746 = vpow.pop %v745
        %v747 = vmul.f32 %v737, 1.442695
        %v748 = vpow.pop %v747
        %v749 = vmul.f32 %v738, 1.442695
        %v750 = vpow.pop %v749
        %v751 = vmul.f32 %v739, 1.442695
        %v752 = vpow.pop %v751
        %v753 = vmul.f32 %v740, 1.442695
        %v754 = vpow.pop %v753
        %v755 = vmul.f32 %v741, 1.442695
        %v756 = vpow.pop %v755
        %v757 = vmul.f32 %v742, 1.442695
        %v758 = vpow.pop %v757
        %v759 = vld [vmem:[#allocation3] sm:$0xff]
        %v760 = vld [vmem:[#allocation3 + $0x8] sm:$0xff]
        %v761 = vld [vmem:[#allocation3 + $0x10] sm:$0xff]
        %v762 = vld [vmem:[#allocation3 + $0x18] sm:$0xff]
        %v763 = vld [vmem:[#allocation3 + $0x20] sm:$0xff]
        %v764 = vld [vmem:[#allocation3 + $0x28] sm:$0xff]
        %v765 = vld [vmem:[#allocation3 + $0x30] sm:$0xff]
        %v766 = vld [vmem:[#allocation3 + $0x38] sm:$0xff]
        %v767 = vmul.f32 %v680, %v759
        %v768 = vmul.f32 %v682, %v760
        %v769 = vmul.f32 %v684, %v761
        %v770 = vmul.f32 %v686, %v762
        %v771 = vmul.f32 %v688, %v763
        %v772 = vmul.f32 %v690, %v764
        %v773 = vmul.f32 %v692, %v765
        %v774 = vmul.f32 %v694, %v766
        %v775 = vsel %vm541, %v744, 0.0
        %776 = vadd.xlane.f32.xlu0 %v775
        %v777 = vpop.xlane.xlu0 %776
        %v778 = vsel %vm541, %v746, 0.0
        %779 = vadd.xlane.f32.xlu0 %v778
        %v780 = vpop.xlane.xlu0 %779
        %v781 = vsel %vm541, %v748, 0.0
        %782 = vadd.xlane.f32.xlu0 %v781
        %v783 = vpop.xlane.xlu0 %782
        %v784 = vsel %vm541, %v750, 0.0
        %785 = vadd.xlane.f32.xlu0 %v784
        %v786 = vpop.xlane.xlu0 %785
        %v787 = vsel %vm541, %v752, 0.0
        %788 = vadd.xlane.f32.xlu0 %v787
        %v789 = vpop.xlane.xlu0 %788
        %v790 = vsel %vm541, %v754, 0.0
        %791 = vadd.xlane.f32.xlu0 %v790
        %v792 = vpop.xlane.xlu0 %791
        %v793 = vsel %vm541, %v756, 0.0
        %794 = vadd.xlane.f32.xlu0 %v793
        %v795 = vpop.xlane.xlu0 %794
        %v796 = vsel %vm541, %v758, 0.0
        %797 = vadd.xlane.f32.xlu0 %v796
        %v798 = vpop.xlane.xlu0 %797
        %v799 = vadd.f32 %v767, %v777
        %v800 = vadd.f32 %v768, %v780
        %v801 = vadd.f32 %v769, %v783
        %v802 = vadd.f32 %v770, %v786
        %v803 = vadd.f32 %v771, %v789
        %v804 = vadd.f32 %v772, %v792
        %v805 = vadd.f32 %v773, %v795
        %v806 = vadd.f32 %v774, %v798
        %vm807 = vcmask 7168
        %808 = vst.msk [vmem:[#allocation3] sm:$0xff] %vm807, %v799
        %809 = vst.msk [vmem:[#allocation3 + $0x8] sm:$0xff] %vm807, %v800
        %810 = vst.msk [vmem:[#allocation3 + $0x10] sm:$0xff] %vm807, %v801
        %811 = vst.msk [vmem:[#allocation3 + $0x18] sm:$0xff] %vm807, %v802
        %812 = vst.msk [vmem:[#allocation3 + $0x20] sm:$0xff] %vm807, %v803
        %813 = vst.msk [vmem:[#allocation3 + $0x28] sm:$0xff] %vm807, %v804
        %814 = vst.msk [vmem:[#allocation3 + $0x30] sm:$0xff] %vm807, %v805
        %815 = vst.msk [vmem:[#allocation3 + $0x38] sm:$0xff] %vm807, %v806
        %v816 = vld [vmem:[#allocation4] sm:$0xff]
        %v817 = vld [vmem:[#allocation4 + $0x8] sm:$0xff]
        %v818 = vld [vmem:[#allocation4 + $0x10] sm:$0xff]
        %v819 = vld [vmem:[#allocation4 + $0x18] sm:$0xff]
        %v820 = vld [vmem:[#allocation4 + $0x20] sm:$0xff]
        %v821 = vld [vmem:[#allocation4 + $0x28] sm:$0xff]
        %v822 = vld [vmem:[#allocation4 + $0x30] sm:$0xff]
        %v823 = vld [vmem:[#allocation4 + $0x38] sm:$0xff]
        %825 = vset.pattern.permute.xlu0 0
        %826 = vperm.xlu0 %825, %v680
        %v827 = vpop.permute.xlu0 %826
        %830 = vset.pattern.permute.xlu0 0
        %831 = vperm.xlu0 %830, %v682
        %v832 = vpop.permute.xlu0 %831
        %835 = vset.pattern.permute.xlu0 0
        %836 = vperm.xlu0 %835, %v684
        %v837 = vpop.permute.xlu0 %836
        %840 = vset.pattern.permute.xlu0 0
        %841 = vperm.xlu0 %840, %v686
        %v842 = vpop.permute.xlu0 %841
        %845 = vset.pattern.permute.xlu0 0
        %846 = vperm.xlu0 %845, %v688
        %v847 = vpop.permute.xlu0 %846
        %850 = vset.pattern.permute.xlu0 0
        %851 = vperm.xlu0 %850, %v690
        %v852 = vpop.permute.xlu0 %851
        %855 = vset.pattern.permute.xlu0 0
        %856 = vperm.xlu0 %855, %v692
        %v857 = vpop.permute.xlu0 %856
        %860 = vset.pattern.permute.xlu0 0
        %861 = vperm.xlu0 %860, %v694
        %v862 = vpop.permute.xlu0 %861
        %v864 = vmul.f32 %v827, %v816
        %v865 = vmul.f32 %v832, %v817
        %v866 = vmul.f32 %v837, %v818
        %v867 = vmul.f32 %v842, %v819
        %v868 = vmul.f32 %v847, %v820
        %v869 = vmul.f32 %v852, %v821
        %v870 = vmul.f32 %v857, %v822
        %v871 = vmul.f32 %v862, %v823
        %v872 = vpack.c.bf16 %v746, %v744
        %v873 = vpack.c.bf16 %v750, %v748
        %v874 = vpack.c.bf16 %v754, %v752
        %v875 = vpack.c.bf16 %v758, %v756
        %v877 = vsel %vm541, %v872, 0
        %v880 = vsel %vm541, %v873, 0
        %v883 = vsel %vm541, %v874, 0
        %v886 = vsel %vm541, %v875, 0
        %888 = vmatprep.subr.bf16.mxu0 0
        %889 = vmatpush1.bf16.msra.mxu0 %v537
        %890 = vmatprep.subr.bf16.mxu0 0
        %891 = vmatpush1.bf16.msra.mxu0 %v538
        %892 = vmatprep.subr.bf16.mxu0 0
        %893 = vmatpush1.bf16.msra.mxu0 %v539
        %894 = vmatprep.subr.bf16.mxu0 0
        %895 = vmatpush1.bf16.msra.mxu0 %v540
        %896 = vmatprep.subr.bf16.mxu0 0
        %897 = vmatpush1.bf16.msra.mxu0 0
        %898 = vmatprep.subr.bf16.mxu0 0
        %899 = vmatpush1.bf16.msra.mxu0 0
        %900 = vmatprep.subr.bf16.mxu0 0
        %901 = vmatpush1.bf16.msra.mxu0 0
        %902 = vmatprep.subr.bf16.mxu0 0
        %903 = vmatpush1.bf16.msra.mxu0 0
        %904 = vmatprep.subr.bf16.mxu0 0
        %905 = vmatpush1.bf16.msra.mxu0 0
        %906 = vmatprep.subr.bf16.mxu0 0
        %907 = vmatpush1.bf16.msra.mxu0 0
        %908 = vmatprep.subr.bf16.mxu0 0
        %909 = vmatpush1.bf16.msra.mxu0 0
        %910 = vmatprep.subr.bf16.mxu0 0
        %911 = vmatpush1.bf16.msra.mxu0 0
        %912 = vmatprep.subr.bf16.mxu0 0
        %913 = vmatpush1.bf16.msra.mxu0 0
        %914 = vmatprep.subr.bf16.mxu0 0
        %915 = vmatpush1.bf16.msra.mxu0 0
        %916 = vmatprep.subr.bf16.mxu0 0
        %917 = vmatpush1.bf16.msra.mxu0 0
        %918 = vmatprep.subr.bf16.mxu0 0
        %919 = vmatpush1.bf16.msra.mxu0 0
        %920 = vmatprep.mubr.bf16.mxu0 0
        %921 = vmatmul.mubr.bf16.gmra.mrb[0].mxu0 %v877
        %v922 = vpop.f32.mrb[0].mxu0
        %v923 = vadd.f32 0.0, %v922
        %v924 = vpop.f32.mrb[0].mxu0
        %v925 = vpop.f32.mrb[0].mxu0
        %v926 = vadd.f32 0.0, %v925
        %v927 = vpop.f32.mrb[0].mxu0
        %928 = vmatprep.mubr.bf16.mxu0 0
        %929 = vmatmul.mubr.bf16.gmra.mrb[0].mxu0 %v880
        %v930 = vpop.f32.mrb[0].mxu0
        %v931 = vadd.f32 0.0, %v930
        %v932 = vpop.f32.mrb[0].mxu0
        %v933 = vpop.f32.mrb[0].mxu0
        %v934 = vadd.f32 0.0, %v933
        %v935 = vpop.f32.mrb[0].mxu0
        %936 = vmatprep.mubr.bf16.mxu0 0
        %937 = vmatmul.mubr.bf16.gmra.mrb[0].mxu0 %v883
        %v938 = vpop.f32.mrb[0].mxu0
        %v939 = vadd.f32 0.0, %v938
        %v940 = vpop.f32.mrb[0].mxu0
        %v941 = vpop.f32.mrb[0].mxu0
        %v942 = vadd.f32 0.0, %v941
        %v943 = vpop.f32.mrb[0].mxu0
        %944 = vmatprep.mubr.bf16.mxu0 0
        %945 = vmatmul.mubr.bf16.gmra.mrb[0].mxu0 %v886
        %v946 = vpop.f32.mrb[0].mxu0
        %v947 = vadd.f32 0.0, %v946
        %v948 = vpop.f32.mrb[0].mxu0
        %v949 = vpop.f32.mrb[0].mxu0
        %v950 = vadd.f32 0.0, %v949
        %v951 = vpop.f32.mrb[0].mxu0
        %952 = vdwg.mxu0
        %v953 = vadd.f32 %v864, %v923
        %v954 = vadd.f32 %v865, %v926
        %v955 = vadd.f32 %v866, %v931
        %v956 = vadd.f32 %v867, %v934
        %v957 = vadd.f32 %v868, %v939
        %v958 = vadd.f32 %v869, %v942
        %v959 = vadd.f32 %v870, %v947
        %v960 = vadd.f32 %v871, %v950
        %961 = vst.msk [vmem:[#allocation4] sm:$0xff] %vm541, %v953
        %962 = vst.msk [vmem:[#allocation4 + $0x8] sm:$0xff] %vm541, %v954
        %963 = vst.msk [vmem:[#allocation4 + $0x10] sm:$0xff] %vm541, %v955
        %964 = vst.msk [vmem:[#allocation4 + $0x18] sm:$0xff] %vm541, %v956
        %965 = vst.msk [vmem:[#allocation4 + $0x20] sm:$0xff] %vm541, %v957
        %966 = vst.msk [vmem:[#allocation4 + $0x28] sm:$0xff] %vm541, %v958
        %967 = vst.msk [vmem:[#allocation4 + $0x30] sm:$0xff] %vm541, %v959
        %968 = vst.msk [vmem:[#allocation4 + $0x38] sm:$0xff] %vm541, %v960
        %969 = vst.msk [vmem:[#allocation2] sm:$0xff] %vm807, %v663
        %970 = vst.msk [vmem:[#allocation2 + $0x8] sm:$0xff] %vm807, %v664
        %971 = vst.msk [vmem:[#allocation2 + $0x10] sm:$0xff] %vm807, %v665
        %972 = vst.msk [vmem:[#allocation2 + $0x18] sm:$0xff] %vm807, %v666
        %973 = vst.msk [vmem:[#allocation2 + $0x20] sm:$0xff] %vm807, %v667
        %974 = vst.msk [vmem:[#allocation2 + $0x28] sm:$0xff] %vm807, %v668
        %975 = vst.msk [vmem:[#allocation2 + $0x30] sm:$0xff] %vm807, %v669
        %976 = vst.msk [vmem:[#allocation2 + $0x38] sm:$0xff] %vm807, %v670
        %981 = vrot.lane.b32.xlu0 %v513, 64
        %v982 = vpop.permute.xlu0 %981
        %983 = vrot.lane.b32.xlu0 %v514, 64
        %v984 = vpop.permute.xlu0 %983
        %985 = vrot.lane.b32.xlu0 %v515, 64
        %v986 = vpop.permute.xlu0 %985
        %987 = vrot.lane.b32.xlu0 %v516, 64
        %v988 = vpop.permute.xlu0 %987
        %993 = vrot.lane.b32.xlu0 %v525, 64
        %v994 = vpop.permute.xlu0 %993
        %995 = vrot.lane.b32.xlu0 %v526, 64
        %v996 = vpop.permute.xlu0 %995
        %997 = vrot.lane.b32.xlu0 %v527, 64
        %v998 = vpop.permute.xlu0 %997
        %999 = vrot.lane.b32.xlu0 %v528, 64
        %v1000 = vpop.permute.xlu0 %999
        %v1002 = vsel %vm541, %v982, 0
        %v1005 = vsel %vm541, %v984, 0
        %v1008 = vsel %vm541, %v986, 0
        %v1011 = vsel %vm541, %v988, 0
        %v1014 = vsel %vm541, %v994, 0
        %v1017 = vsel %vm541, %v996, 0
        %v1020 = vsel %vm541, %v998, 0
        %v1023 = vsel %vm541, %v1000, 0
        %1025 = vmatprep.subr.bf16.mxu0 0
        %1026 = vmatpush1.bf16.xpose.msra.mxu0 %v1014
        %1027 = vmatprep.subr.bf16.mxu0 0
        %1028 = vmatpush1.bf16.xpose.msra.mxu0 %v1017
        %1029 = vmatprep.subr.bf16.mxu0 0
        %1030 = vmatpush1.bf16.xpose.msra.mxu0 %v1020
        %1031 = vmatprep.subr.bf16.mxu0 0
        %1032 = vmatpush1.bf16.xpose.msra.mxu0 %v1023
        %1033 = vmatprep.subr.bf16.mxu0 0
        %1034 = vmatpush1.bf16.xpose.msra.mxu0 0
        %1035 = vmatprep.subr.bf16.mxu0 0
        %1036 = vmatpush1.bf16.xpose.msra.mxu0 0
        %1037 = vmatprep.subr.bf16.mxu0 0
        %1038 = vmatpush1.bf16.xpose.msra.mxu0 0
        %1039 = vmatprep.subr.bf16.mxu0 0
        %1040 = vmatpush1.bf16.xpose.msra.mxu0 0
        %1041 = vmatprep.subr.bf16.mxu0 0
        %1042 = vmatpush1.bf16.xpose.msra.mxu0 0
        %1043 = vmatprep.subr.bf16.mxu0 0
        %1044 = vmatpush1.bf16.xpose.msra.mxu0 0
        %1045 = vmatprep.subr.bf16.mxu0 0
        %1046 = vmatpush1.bf16.xpose.msra.mxu0 0
        %1047 = vmatprep.subr.bf16.mxu0 0
        %1048 = vmatpush1.bf16.xpose.msra.mxu0 0
        %1049 = vmatprep.subr.bf16.mxu0 0
        %1050 = vmatpush1.bf16.xpose.msra.mxu0 0
        %1051 = vmatprep.subr.bf16.mxu0 0
        %1052 = vmatpush1.bf16.xpose.msra.mxu0 0
        %1053 = vmatprep.subr.bf16.mxu0 0
        %1054 = vmatpush1.bf16.xpose.msra.mxu0 0
        %1055 = vmatprep.subr.bf16.mxu0 0
        %1056 = vmatpush1.bf16.xpose.msra.mxu0 0
        %1057 = vmatprep.mubr.bf16.mxu0 0
        %1058 = vmatmul.mubr.bf16.gmra.mrb[0].mxu0 %v1002
        %v1059 = vpop.f32.mrb[0].mxu0
        %v1060 = vadd.f32 0.0, %v1059
        %v1061 = vpop.f32.mrb[0].mxu0
        %v1062 = vpop.f32.mrb[0].mxu0
        %v1063 = vadd.f32 0.0, %v1062
        %v1064 = vpop.f32.mrb[0].mxu0
        %1065 = vmatprep.mubr.bf16.mxu0 0
        %1066 = vmatmul.mubr.bf16.gmra.mrb[0].mxu0 %v1005
        %v1067 = vpop.f32.mrb[0].mxu0
        %v1068 = vadd.f32 0.0, %v1067
        %v1069 = vpop.f32.mrb[0].mxu0
        %v1070 = vpop.f32.mrb[0].mxu0
        %v1071 = vadd.f32 0.0, %v1070
        %v1072 = vpop.f32.mrb[0].mxu0
        %1073 = vmatprep.mubr.bf16.mxu0 0
        %1074 = vmatmul.mubr.bf16.gmra.mrb[0].mxu0 %v1008
        %v1075 = vpop.f32.mrb[0].mxu0
        %v1076 = vadd.f32 0.0, %v1075
        %v1077 = vpop.f32.mrb[0].mxu0
        %v1078 = vpop.f32.mrb[0].mxu0
        %v1079 = vadd.f32 0.0, %v1078
        %v1080 = vpop.f32.mrb[0].mxu0
        %1081 = vmatprep.mubr.bf16.mxu0 0
        %1082 = vmatmul.mubr.bf16.gmra.mrb[0].mxu0 %v1011
        %v1083 = vpop.f32.mrb[0].mxu0
        %v1084 = vadd.f32 0.0, %v1083
        %v1085 = vpop.f32.mrb[0].mxu0
        %v1086 = vpop.f32.mrb[0].mxu0
        %v1087 = vadd.f32 0.0, %v1086
        %v1088 = vpop.f32.mrb[0].mxu0
        %1089 = vdwg.mxu0
        %s1090 = scalar_lea.vmem [#allocation2], 64
        %v1091 = vld [vmem:[%s1090] sm:$0xff]
        %v1092 = vld [vmem:[%s1090 + $0x8] sm:$0xff]
        %v1093 = vld [vmem:[%s1090 + $0x10] sm:$0xff]
        %v1094 = vld [vmem:[%s1090 + $0x18] sm:$0xff]
        %v1095 = vld [vmem:[%s1090 + $0x20] sm:$0xff]
        %v1096 = vld [vmem:[%s1090 + $0x28] sm:$0xff]
        %v1097 = vld [vmem:[%s1090 + $0x30] sm:$0xff]
        %v1098 = vld [vmem:[%s1090 + $0x38] sm:$0xff]
        %v1099 = vsel %vm541, %v1060, -inf
        %1100 = vmax.xlane.f32.xlu0 %v1099
        %v1101 = vpop.xlane.xlu0 %1100
        %v1102 = vsel %vm541, %v1063, -inf
        %1103 = vmax.xlane.f32.xlu0 %v1102
        %v1104 = vpop.xlane.xlu0 %1103
        %v1105 = vsel %vm541, %v1068, -inf
        %1106 = vmax.xlane.f32.xlu0 %v1105
        %v1107 = vpop.xlane.xlu0 %1106
        %v1108 = vsel %vm541, %v1071, -inf
        %1109 = vmax.xlane.f32.xlu0 %v1108
        %v1110 = vpop.xlane.xlu0 %1109
        %v1111 = vsel %vm541, %v1076, -inf
        %1112 = vmax.xlane.f32.xlu0 %v1111
        %v1113 = vpop.xlane.xlu0 %1112
        %v1114 = vsel %vm541, %v1079, -inf
        %1115 = vmax.xlane.f32.xlu0 %v1114
        %v1116 = vpop.xlane.xlu0 %1115
        %v1117 = vsel %vm541, %v1084, -inf
        %1118 = vmax.xlane.f32.xlu0 %v1117
        %v1119 = vpop.xlane.xlu0 %1118
        %v1120 = vsel %vm541, %v1087, -inf
        %1121 = vmax.xlane.f32.xlu0 %v1120
        %v1122 = vpop.xlane.xlu0 %1121
        %v1123 = vmax.f32 %v1091, %v1101
        %v1124 = vmax.f32 %v1092, %v1104
        %v1125 = vmax.f32 %v1093, %v1107
        %v1126 = vmax.f32 %v1094, %v1110
        %v1127 = vmax.f32 %v1095, %v1113
        %v1128 = vmax.f32 %v1096, %v1116
        %v1129 = vmax.f32 %v1097, %v1119
        %v1130 = vmax.f32 %v1098, %v1122
        %v1131 = vsub.f32 %v1091, %v1123
        %v1132 = vsub.f32 %v1092, %v1124
        %v1133 = vsub.f32 %v1093, %v1125
        %v1134 = vsub.f32 %v1094, %v1126
        %v1135 = vsub.f32 %v1095, %v1127
        %v1136 = vsub.f32 %v1096, %v1128
        %v1137 = vsub.f32 %v1097, %v1129
        %v1138 = vsub.f32 %v1098, %v1130
        %v1139 = vmul.f32 %v1131, 1.442695
        %v1140 = vpow.pop %v1139
        %v1141 = vmul.f32 %v1132, 1.442695
        %v1142 = vpow.pop %v1141
        %v1143 = vmul.f32 %v1133, 1.442695
        %v1144 = vpow.pop %v1143
        %v1145 = vmul.f32 %v1134, 1.442695
        %v1146 = vpow.pop %v1145
        %v1147 = vmul.f32 %v1135, 1.442695
        %v1148 = vpow.pop %v1147
        %v1149 = vmul.f32 %v1136, 1.442695
        %v1150 = vpow.pop %v1149
        %v1151 = vmul.f32 %v1137, 1.442695
        %v1152 = vpow.pop %v1151
        %v1153 = vmul.f32 %v1138, 1.442695
        %v1154 = vpow.pop %v1153
        %1156 = vset.pattern.permute.xlu0 0
        %1157 = vperm.xlu0 %1156, %v1123
        %v1158 = vpop.permute.xlu0 %1157
        %1161 = vset.pattern.permute.xlu0 0
        %1162 = vperm.xlu0 %1161, %v1124
        %v1163 = vpop.permute.xlu0 %1162
        %1166 = vset.pattern.permute.xlu0 0
        %1167 = vperm.xlu0 %1166, %v1125
        %v1168 = vpop.permute.xlu0 %1167
        %1171 = vset.pattern.permute.xlu0 0
        %1172 = vperm.xlu0 %1171, %v1126
        %v1173 = vpop.permute.xlu0 %1172
        %1176 = vset.pattern.permute.xlu0 0
        %1177 = vperm.xlu0 %1176, %v1127
        %v1178 = vpop.permute.xlu0 %1177
        %1181 = vset.pattern.permute.xlu0 0
        %1182 = vperm.xlu0 %1181, %v1128
        %v1183 = vpop.permute.xlu0 %1182
        %1186 = vset.pattern.permute.xlu0 0
        %1187 = vperm.xlu0 %1186, %v1129
        %v1188 = vpop.permute.xlu0 %1187
        %1191 = vset.pattern.permute.xlu0 0
        %1192 = vperm.xlu0 %1191, %v1130
        %v1193 = vpop.permute.xlu0 %1192
        %v1195 = vsub.f32 %v1060, %v1158
        %v1196 = vsub.f32 %v1063, %v1163
        %v1197 = vsub.f32 %v1068, %v1168
        %v1198 = vsub.f32 %v1071, %v1173
        %v1199 = vsub.f32 %v1076, %v1178
        %v1200 = vsub.f32 %v1079, %v1183
        %v1201 = vsub.f32 %v1084, %v1188
        %v1202 = vsub.f32 %v1087, %v1193
        %v1203 = vmul.f32 %v1195, 1.442695
        %v1204 = vpow.pop %v1203
        %v1205 = vmul.f32 %v1196, 1.442695
        %v1206 = vpow.pop %v1205
        %v1207 = vmul.f32 %v1197, 1.442695
        %v1208 = vpow.pop %v1207
        %v1209 = vmul.f32 %v1198, 1.442695
        %v1210 = vpow.pop %v1209
        %v1211 = vmul.f32 %v1199, 1.442695
        %v1212 = vpow.pop %v1211
        %v1213 = vmul.f32 %v1200, 1.442695
        %v1214 = vpow.pop %v1213
        %v1215 = vmul.f32 %v1201, 1.442695
        %v1216 = vpow.pop %v1215
        %v1217 = vmul.f32 %v1202, 1.442695
        %v1218 = vpow.pop %v1217
        %s1219 = scalar_lea.vmem [#allocation3], 64
        %v1220 = vld [vmem:[%s1219] sm:$0xff]
        %v1221 = vld [vmem:[%s1219 + $0x8] sm:$0xff]
        %v1222 = vld [vmem:[%s1219 + $0x10] sm:$0xff]
        %v1223 = vld [vmem:[%s1219 + $0x18] sm:$0xff]
        %v1224 = vld [vmem:[%s1219 + $0x20] sm:$0xff]
        %v1225 = vld [vmem:[%s1219 + $0x28] sm:$0xff]
        %v1226 = vld [vmem:[%s1219 + $0x30] sm:$0xff]
        %v1227 = vld [vmem:[%s1219 + $0x38] sm:$0xff]
        %v1228 = vmul.f32 %v1140, %v1220
        %v1229 = vmul.f32 %v1142, %v1221
        %v1230 = vmul.f32 %v1144, %v1222
        %v1231 = vmul.f32 %v1146, %v1223
        %v1232 = vmul.f32 %v1148, %v1224
        %v1233 = vmul.f32 %v1150, %v1225
        %v1234 = vmul.f32 %v1152, %v1226
        %v1235 = vmul.f32 %v1154, %v1227
        %v1236 = vsel %vm541, %v1204, 0.0
        %1237 = vadd.xlane.f32.xlu0 %v1236
        %v1238 = vpop.xlane.xlu0 %1237
        %v1239 = vsel %vm541, %v1206, 0.0
        %1240 = vadd.xlane.f32.xlu0 %v1239
        %v1241 = vpop.xlane.xlu0 %1240
        %v1242 = vsel %vm541, %v1208, 0.0
        %1243 = vadd.xlane.f32.xlu0 %v1242
        %v1244 = vpop.xlane.xlu0 %1243
        %v1245 = vsel %vm541, %v1210, 0.0
        %1246 = vadd.xlane.f32.xlu0 %v1245
        %v1247 = vpop.xlane.xlu0 %1246
        %v1248 = vsel %vm541, %v1212, 0.0
        %1249 = vadd.xlane.f32.xlu0 %v1248
        %v1250 = vpop.xlane.xlu0 %1249
        %v1251 = vsel %vm541, %v1214, 0.0
        %1252 = vadd.xlane.f32.xlu0 %v1251
        %v1253 = vpop.xlane.xlu0 %1252
        %v1254 = vsel %vm541, %v1216, 0.0
        %1255 = vadd.xlane.f32.xlu0 %v1254
        %v1256 = vpop.xlane.xlu0 %1255
        %v1257 = vsel %vm541, %v1218, 0.0
        %1258 = vadd.xlane.f32.xlu0 %v1257
        %v1259 = vpop.xlane.xlu0 %1258
        %v1260 = vadd.f32 %v1228, %v1238
        %v1261 = vadd.f32 %v1229, %v1241
        %v1262 = vadd.f32 %v1230, %v1244
        %v1263 = vadd.f32 %v1231, %v1247
        %v1264 = vadd.f32 %v1232, %v1250
        %v1265 = vadd.f32 %v1233, %v1253
        %v1266 = vadd.f32 %v1234, %v1256
        %v1267 = vadd.f32 %v1235, %v1259
        %1268 = vst.msk [vmem:[%s1219] sm:$0xff] %vm807, %v1260
        %1269 = vst.msk [vmem:[%s1219 + $0x8] sm:$0xff] %vm807, %v1261
        %1270 = vst.msk [vmem:[%s1219 + $0x10] sm:$0xff] %vm807, %v1262
        %1271 = vst.msk [vmem:[%s1219 + $0x18] sm:$0xff] %vm807, %v1263
        %1272 = vst.msk [vmem:[%s1219 + $0x20] sm:$0xff] %vm807, %v1264
        %1273 = vst.msk [vmem:[%s1219 + $0x28] sm:$0xff] %vm807, %v1265
        %1274 = vst.msk [vmem:[%s1219 + $0x30] sm:$0xff] %vm807, %v1266
        %1275 = vst.msk [vmem:[%s1219 + $0x38] sm:$0xff] %vm807, %v1267
        %s1276 = scalar_lea.vmem [#allocation4], 64
        %v1277 = vld [vmem:[%s1276] sm:$0xff]
        %v1278 = vld [vmem:[%s1276 + $0x8] sm:$0xff]
        %v1279 = vld [vmem:[%s1276 + $0x10] sm:$0xff]
        %v1280 = vld [vmem:[%s1276 + $0x18] sm:$0xff]
        %v1281 = vld [vmem:[%s1276 + $0x20] sm:$0xff]
        %v1282 = vld [vmem:[%s1276 + $0x28] sm:$0xff]
        %v1283 = vld [vmem:[%s1276 + $0x30] sm:$0xff]
        %v1284 = vld [vmem:[%s1276 + $0x38] sm:$0xff]
        %1286 = vset.pattern.permute.xlu0 0
        %1287 = vperm.xlu0 %1286, %v1140
        %v1288 = vpop.permute.xlu0 %1287
        %1291 = vset.pattern.permute.xlu0 0
        %1292 = vperm.xlu0 %1291, %v1142
        %v1293 = vpop.permute.xlu0 %1292
        %1296 = vset.pattern.permute.xlu0 0
        %1297 = vperm.xlu0 %1296, %v1144
        %v1298 = vpop.permute.xlu0 %1297
        %1301 = vset.pattern.permute.xlu0 0
        %1302 = vperm.xlu0 %1301, %v1146
        %v1303 = vpop.permute.xlu0 %1302
        %1306 = vset.pattern.permute.xlu0 0
        %1307 = vperm.xlu0 %1306, %v1148
        %v1308 = vpop.permute.xlu0 %1307
        %1311 = vset.pattern.permute.xlu0 0
        %1312 = vperm.xlu0 %1311, %v1150
        %v1313 = vpop.permute.xlu0 %1312
        %1316 = vset.pattern.permute.xlu0 0
        %1317 = vperm.xlu0 %1316, %v1152
        %v1318 = vpop.permute.xlu0 %1317
        %1321 = vset.pattern.permute.xlu0 0
        %1322 = vperm.xlu0 %1321, %v1154
        %v1323 = vpop.permute.xlu0 %1322
        %v1325 = vmul.f32 %v1288, %v1277
        %v1326 = vmul.f32 %v1293, %v1278
        %v1327 = vmul.f32 %v1298, %v1279
        %v1328 = vmul.f32 %v1303, %v1280
        %v1329 = vmul.f32 %v1308, %v1281
        %v1330 = vmul.f32 %v1313, %v1282
        %v1331 = vmul.f32 %v1318, %v1283
        %v1332 = vmul.f32 %v1323, %v1284
        %v1333 = vpack.c.bf16 %v1206, %v1204
        %v1334 = vpack.c.bf16 %v1210, %v1208
        %v1335 = vpack.c.bf16 %v1214, %v1212
        %v1336 = vpack.c.bf16 %v1218, %v1216
        %1341 = vrot.lane.b32.xlu0 %v537, 64
        %v1342 = vpop.permute.xlu0 %1341
        %1343 = vrot.lane.b32.xlu0 %v538, 64
        %v1344 = vpop.permute.xlu0 %1343
        %1345 = vrot.lane.b32.xlu0 %v539, 64
        %v1346 = vpop.permute.xlu0 %1345
        %1347 = vrot.lane.b32.xlu0 %v540, 64
        %v1348 = vpop.permute.xlu0 %1347
        %v1354 = vsel %vm541, %v1333, 0
        %v1357 = vsel %vm541, %v1334, 0
        %v1360 = vsel %vm541, %v1335, 0
        %v1363 = vsel %vm541, %v1336, 0
        %1365 = vmatprep.subr.bf16.mxu0 0
        %1366 = vmatpush1.bf16.msra.mxu0 %v1342
        %1367 = vmatprep.subr.bf16.mxu0 0
        %1368 = vmatpush1.bf16.msra.mxu0 %v1344
        %1369 = vmatprep.subr.bf16.mxu0 0
        %1370 = vmatpush1.bf16.msra.mxu0 %v1346
        %1371 = vmatprep.subr.bf16.mxu0 0
        %1372 = vmatpush1.bf16.msra.mxu0 %v1348
        %1373 = vmatprep.subr.bf16.mxu0 0
        %1374 = vmatpush1.bf16.msra.mxu0 0
        %1375 = vmatprep.subr.bf16.mxu0 0
        %1376 = vmatpush1.bf16.msra.mxu0 0
        %1377 = vmatprep.subr.bf16.mxu0 0
        %1378 = vmatpush1.bf16.msra.mxu0 0
        %1379 = vmatprep.subr.bf16.mxu0 0
        %1380 = vmatpush1.bf16.msra.mxu0 0
        %1381 = vmatprep.subr.bf16.mxu0 0
        %1382 = vmatpush1.bf16.msra.mxu0 0
        %1383 = vmatprep.subr.bf16.mxu0 0
        %1384 = vmatpush1.bf16.msra.mxu0 0
        %1385 = vmatprep.subr.bf16.mxu0 0
        %1386 = vmatpush1.bf16.msra.mxu0 0
        %1387 = vmatprep.subr.bf16.mxu0 0
        %1388 = vmatpush1.bf16.msra.mxu0 0
        %1389 = vmatprep.subr.bf16.mxu0 0
        %1390 = vmatpush1.bf16.msra.mxu0 0
        %1391 = vmatprep.subr.bf16.mxu0 0
        %1392 = vmatpush1.bf16.msra.mxu0 0
        %1393 = vmatprep.subr.bf16.mxu0 0
        %1394 = vmatpush1.bf16.msra.mxu0 0
        %1395 = vmatprep.subr.bf16.mxu0 0
        %1396 = vmatpush1.bf16.msra.mxu0 0
        %1397 = vmatprep.mubr.bf16.mxu0 0
        %1398 = vmatmul.mubr.bf16.gmra.mrb[0].mxu0 %v1354
        %v1399 = vpop.f32.mrb[0].mxu0
        %v1400 = vadd.f32 0.0, %v1399
        %v1401 = vpop.f32.mrb[0].mxu0
        %v1402 = vpop.f32.mrb[0].mxu0
        %v1403 = vadd.f32 0.0, %v1402
        %v1404 = vpop.f32.mrb[0].mxu0
        %1405 = vmatprep.mubr.bf16.mxu0 0
        %1406 = vmatmul.mubr.bf16.gmra.mrb[0].mxu0 %v1357
        %v1407 = vpop.f32.mrb[0].mxu0
        %v1408 = vadd.f32 0.0, %v1407
        %v1409 = vpop.f32.mrb[0].mxu0
        %v1410 = vpop.f32.mrb[0].mxu0
        %v1411 = vadd.f32 0.0, %v1410
        %v1412 = vpop.f32.mrb[0].mxu0
        %1413 = vmatprep.mubr.bf16.mxu0 0
        %1414 = vmatmul.mubr.bf16.gmra.mrb[0].mxu0 %v1360
        %v1415 = vpop.f32.mrb[0].mxu0
        %v1416 = vadd.f32 0.0, %v1415
        %v1417 = vpop.f32.mrb[0].mxu0
        %v1418 = vpop.f32.mrb[0].mxu0
        %v1419 = vadd.f32 0.0, %v1418
        %v1420 = vpop.f32.mrb[0].mxu0
        %1421 = vmatprep.mubr.bf16.mxu0 0
        %1422 = vmatmul.mubr.bf16.gmra.mrb[0].mxu0 %v1363
        %v1423 = vpop.f32.mrb[0].mxu0
        %v1424 = vadd.f32 0.0, %v1423
        %v1425 = vpop.f32.mrb[0].mxu0
        %v1426 = vpop.f32.mrb[0].mxu0
        %v1427 = vadd.f32 0.0, %v1426
        %v1428 = vpop.f32.mrb[0].mxu0
        %1429 = vdwg.mxu0
        %v1430 = vadd.f32 %v1325, %v1400
        %v1431 = vadd.f32 %v1326, %v1403
        %v1432 = vadd.f32 %v1327, %v1408
        %v1433 = vadd.f32 %v1328, %v1411
        %v1434 = vadd.f32 %v1329, %v1416
        %v1435 = vadd.f32 %v1330, %v1419
        %v1436 = vadd.f32 %v1331, %v1424
        %v1437 = vadd.f32 %v1332, %v1427
        %1438 = vst.msk [vmem:[%s1276] sm:$0xff] %vm541, %v1430
        %1439 = vst.msk [vmem:[%s1276 + $0x8] sm:$0xff] %vm541, %v1431
        %1440 = vst.msk [vmem:[%s1276 + $0x10] sm:$0xff] %vm541, %v1432
        %1441 = vst.msk [vmem:[%s1276 + $0x18] sm:$0xff] %vm541, %v1433
        %1442 = vst.msk [vmem:[%s1276 + $0x20] sm:$0xff] %vm541, %v1434
        %1443 = vst.msk [vmem:[%s1276 + $0x28] sm:$0xff] %vm541, %v1435
        %1444 = vst.msk [vmem:[%s1276 + $0x30] sm:$0xff] %vm541, %v1436
        %1445 = vst.msk [vmem:[%s1276 + $0x38] sm:$0xff] %vm541, %v1437
        %1446 = vst.msk [vmem:[%s1090] sm:$0xff] %vm807, %v1123
        %1447 = vst.msk [vmem:[%s1090 + $0x8] sm:$0xff] %vm807, %v1124
        %1448 = vst.msk [vmem:[%s1090 + $0x10] sm:$0xff] %vm807, %v1125
        %1449 = vst.msk [vmem:[%s1090 + $0x18] sm:$0xff] %vm807, %v1126
        %1450 = vst.msk [vmem:[%s1090 + $0x20] sm:$0xff] %vm807, %v1127
        %1451 = vst.msk [vmem:[%s1090 + $0x28] sm:$0xff] %vm807, %v1128
        %1452 = vst.msk [vmem:[%s1090 + $0x30] sm:$0xff] %vm807, %v1129
        %1453 = vst.msk [vmem:[%s1090 + $0x38] sm:$0xff] %vm807, %v1130
        // Predicated region
        $region151: #{multi_scale_attention.4} parent=133 // pred_check
          %p1454 = pneg %p451
        $region152: #{multi_scale_attention.4} parent=133 // pred_check_branch
          %1456 = sbr.rel (%p1454) target = $region154
        $region153: #{multi_scale_attention.4} parent=133 // pred_region
          %v1457 = vld [vmem:[#allocation3] sm:$0xff]
          %v1458 = vld [vmem:[#allocation3 + $0x8] sm:$0xff]
          %v1459 = vld [vmem:[#allocation3 + $0x10] sm:$0xff]
          %v1460 = vld [vmem:[#allocation3 + $0x18] sm:$0xff]
          %v1461 = vld [vmem:[#allocation3 + $0x20] sm:$0xff]
          %v1462 = vld [vmem:[#allocation3 + $0x28] sm:$0xff]
          %v1463 = vld [vmem:[#allocation3 + $0x30] sm:$0xff]
          %v1464 = vld [vmem:[#allocation3 + $0x38] sm:$0xff]
          %v1465 = vrcp.pop %v1457
          %v1466 = vrcp.pop %v1458
          %v1467 = vrcp.pop %v1459
          %v1468 = vrcp.pop %v1460
          %v1469 = vrcp.pop %v1461
          %v1470 = vrcp.pop %v1462
          %v1471 = vrcp.pop %v1463
          %v1472 = vrcp.pop %v1464
          %v1473 = vld [vmem:[#allocation4] sm:$0xff]
          %v1474 = vld [vmem:[#allocation4 + $0x8] sm:$0xff]
          %v1475 = vld [vmem:[#allocation4 + $0x10] sm:$0xff]
          %v1476 = vld [vmem:[#allocation4 + $0x18] sm:$0xff]
          %v1477 = vld [vmem:[#allocation4 + $0x20] sm:$0xff]
          %v1478 = vld [vmem:[#allocation4 + $0x28] sm:$0xff]
          %v1479 = vld [vmem:[#allocation4 + $0x30] sm:$0xff]
          %v1480 = vld [vmem:[#allocation4 + $0x38] sm:$0xff]
          %1482 = vset.pattern.permute.xlu0 0
          %1483 = vperm.xlu0 %1482, %v1465
          %v1484 = vpop.permute.xlu0 %1483
          %1487 = vset.pattern.permute.xlu0 0
          %1488 = vperm.xlu0 %1487, %v1466
          %v1489 = vpop.permute.xlu0 %1488
          %1492 = vset.pattern.permute.xlu0 0
          %1493 = vperm.xlu0 %1492, %v1467
          %v1494 = vpop.permute.xlu0 %1493
          %1497 = vset.pattern.permute.xlu0 0
          %1498 = vperm.xlu0 %1497, %v1468
          %v1499 = vpop.permute.xlu0 %1498
          %1502 = vset.pattern.permute.xlu0 0
          %1503 = vperm.xlu0 %1502, %v1469
          %v1504 = vpop.permute.xlu0 %1503
          %1507 = vset.pattern.permute.xlu0 0
          %1508 = vperm.xlu0 %1507, %v1470
          %v1509 = vpop.permute.xlu0 %1508
          %1512 = vset.pattern.permute.xlu0 0
          %1513 = vperm.xlu0 %1512, %v1471
          %v1514 = vpop.permute.xlu0 %1513
          %1517 = vset.pattern.permute.xlu0 0
          %1518 = vperm.xlu0 %1517, %v1472
          %v1519 = vpop.permute.xlu0 %1518
          %v1521 = vmul.f32 %v1473, %v1484
          %v1522 = vmul.f32 %v1474, %v1489
          %v1523 = vmul.f32 %v1475, %v1494
          %v1524 = vmul.f32 %v1476, %v1499
          %v1525 = vmul.f32 %v1477, %v1504
          %v1526 = vmul.f32 %v1478, %v1509
          %v1527 = vmul.f32 %v1479, %v1514
          %v1528 = vmul.f32 %v1480, %v1519
          %v1529 = vld [vmem:[%s1219] sm:$0xff]
          %v1530 = vld [vmem:[%s1219 + $0x8] sm:$0xff]
          %v1531 = vld [vmem:[%s1219 + $0x10] sm:$0xff]
          %v1532 = vld [vmem:[%s1219 + $0x18] sm:$0xff]
          %v1533 = vld [vmem:[%s1219 + $0x20] sm:$0xff]
          %v1534 = vld [vmem:[%s1219 + $0x28] sm:$0xff]
          %v1535 = vld [vmem:[%s1219 + $0x30] sm:$0xff]
          %v1536 = vld [vmem:[%s1219 + $0x38] sm:$0xff]
          %v1537 = vrcp.pop %v1529
          %v1538 = vrcp.pop %v1530
          %v1539 = vrcp.pop %v1531
          %v1540 = vrcp.pop %v1532
          %v1541 = vrcp.pop %v1533
          %v1542 = vrcp.pop %v1534
          %v1543 = vrcp.pop %v1535
          %v1544 = vrcp.pop %v1536
          %v1545 = vld [vmem:[%s1276] sm:$0xff]
          %v1546 = vld [vmem:[%s1276 + $0x8] sm:$0xff]
          %v1547 = vld [vmem:[%s1276 + $0x10] sm:$0xff]
          %v1548 = vld [vmem:[%s1276 + $0x18] sm:$0xff]
          %v1549 = vld [vmem:[%s1276 + $0x20] sm:$0xff]
          %v1550 = vld [vmem:[%s1276 + $0x28] sm:$0xff]
          %v1551 = vld [vmem:[%s1276 + $0x30] sm:$0xff]
          %v1552 = vld [vmem:[%s1276 + $0x38] sm:$0xff]
          %1554 = vset.pattern.permute.xlu0 0
          %1555 = vperm.xlu0 %1554, %v1537
          %v1556 = vpop.permute.xlu0 %1555
          %1559 = vset.pattern.permute.xlu0 0
          %1560 = vperm.xlu0 %1559, %v1538
          %v1561 = vpop.permute.xlu0 %1560
          %1564 = vset.pattern.permute.xlu0 0
          %1565 = vperm.xlu0 %1564, %v1539
          %v1566 = vpop.permute.xlu0 %1565
          %1569 = vset.pattern.permute.xlu0 0
          %1570 = vperm.xlu0 %1569, %v1540
          %v1571 = vpop.permute.xlu0 %1570
          %1574 = vset.pattern.permute.xlu0 0
          %1575 = vperm.xlu0 %1574, %v1541
          %v1576 = vpop.permute.xlu0 %1575
          %1579 = vset.pattern.permute.xlu0 0
          %1580 = vperm.xlu0 %1579, %v1542
          %v1581 = vpop.permute.xlu0 %1580
          %1584 = vset.pattern.permute.xlu0 0
          %1585 = vperm.xlu0 %1584, %v1543
          %v1586 = vpop.permute.xlu0 %1585
          %1589 = vset.pattern.permute.xlu0 0
          %1590 = vperm.xlu0 %1589, %v1544
          %v1591 = vpop.permute.xlu0 %1590
          %v1593 = vmul.f32 %v1545, %v1556
          %v1594 = vmul.f32 %v1546, %v1561
          %v1595 = vmul.f32 %v1547, %v1566
          %v1596 = vmul.f32 %v1548, %v1571
          %v1597 = vmul.f32 %v1549, %v1576
          %v1598 = vmul.f32 %v1550, %v1581
          %v1599 = vmul.f32 %v1551, %v1586
          %v1600 = vmul.f32 %v1552, %v1591
          %1609 = vrot.lane.b32.xlu0 %v1593, 64
          %v1610 = vpop.permute.xlu0 %1609
          %1611 = vrot.lane.b32.xlu0 %v1594, 64
          %v1612 = vpop.permute.xlu0 %1611
          %1613 = vrot.lane.b32.xlu0 %v1595, 64
          %v1614 = vpop.permute.xlu0 %1613
          %1615 = vrot.lane.b32.xlu0 %v1596, 64
          %v1616 = vpop.permute.xlu0 %1615
          %1617 = vrot.lane.b32.xlu0 %v1597, 64
          %v1618 = vpop.permute.xlu0 %1617
          %1619 = vrot.lane.b32.xlu0 %v1598, 64
          %v1620 = vpop.permute.xlu0 %1619
          %1621 = vrot.lane.b32.xlu0 %v1599, 64
          %v1622 = vpop.permute.xlu0 %1621
          %1623 = vrot.lane.b32.xlu0 %v1600, 64
          %v1624 = vpop.permute.xlu0 %1623
          %v1633 = vsel %vm541, %v1521, %v1610
          %v1634 = vsel %vm541, %v1522, %v1612
          %v1635 = vsel %vm541, %v1523, %v1614
          %v1636 = vsel %vm541, %v1524, %v1616
          %v1637 = vsel %vm541, %v1525, %v1618
          %v1638 = vsel %vm541, %v1526, %v1620
          %v1639 = vsel %vm541, %v1527, %v1622
          %v1640 = vsel %vm541, %v1528, %v1624
          %1641 = vst [vmem:[%s448] sm:$0xff] %v1633
          %1642 = vst [vmem:[%s448 + $0x8] sm:$0xff] %v1634
          %1643 = vst [vmem:[%s448 + $0x10] sm:$0xff] %v1635
          %1644 = vst [vmem:[%s448 + $0x18] sm:$0xff] %v1636
          %1645 = vst [vmem:[%s448 + $0x20] sm:$0xff] %v1637
          %1646 = vst [vmem:[%s448 + $0x28] sm:$0xff] %v1638
          %1647 = vst [vmem:[%s448 + $0x30] sm:$0xff] %v1639
          %1648 = vst [vmem:[%s448 + $0x38] sm:$0xff] %v1640
        $region154: #{multi_scale_attention.4} parent=133 // pred_fallthru
          _
        %s1649 = smul.u32 8, %s20
        %p1650 = scmp.lt.s32.totalorder %s19, 1
        %s1651 = scalar_select %p1650, %s19, 1
        %p1652 = scmp.lt.s32.totalorder %s1649, 7
        %s1653 = scalar_select %p1652, %s1649, 7
        %s1654 = smul.addr %s1651, 8
        %s1655 = sadd.s32 %s1653, %s1654
        %s1656 = smul.addr %s1655, 8
        %s1657 = scalar_lea.vmem %s3, %s1656
        // Predicated region
        $region155: #{multi_scale_attention.4} parent=133 // pred_check
          %p1658 = pneg %p137
        $region156: #{multi_scale_attention.4} parent=133 // pred_check_branch
          %1660 = sbr.rel (%p1658) target = $region158
        $region157: #{multi_scale_attention.4} parent=133 // pred_region
          %s1661 = smul.u32 8, %s20
        $region158: #{multi_scale_attention.4} parent=133 // pred_fallthru
          _
      $region134: #{multi_scale_attention.4} parent=5 // pred_fallthru
        _
      %p1662 = scmp.le.s32.totalorder 2, %s9
      // Predicated region
      $region159: #{multi_scale_attention.4} parent=5 // pred_check
        %p1663 = pneg %p1662
      $region160: #{multi_scale_attention.4} parent=5 // pred_check_branch
        %1665 = sbr.rel (%p1663) target = $region162
      $region161: #{multi_scale_attention.4} parent=5 // pred_region
        %s1666 = ssub.s32 %s9, 2
        // Predicated region
        $region163: #{multi_scale_attention.4} parent=161 // pred_check
          %p1667 = pneg %p143
        $region164: #{multi_scale_attention.4} parent=161 // pred_check_branch
          %1669 = sbr.rel (%p1667) target = $region166
        $region165: #{multi_scale_attention.4} parent=161 // pred_region
          %s1670 = smul.u32 8, %s23
          %p1671 = scmp.lt.s32.totalorder %s22, 1
          %s1672 = scalar_select %p1671, %s22, 1
          %p1673 = scmp.lt.s32.totalorder %s1670, 7
          %s1674 = scalar_select %p1673, %s1670, 7
          %s1675 = smul.addr %s1672, 8
          %s1676 = sadd.s32 %s1674, %s1675
          %s1677 = smul.addr %s1676, 8
          %s1678 = scalar_lea.vmem %s3, %s1677
        $region166: #{multi_scale_attention.4} parent=161 // pred_fallthru
          _
      $region162: #{multi_scale_attention.4} parent=5 // pred_fallthru
        _
    $region6: #{multi_scale_attention.4} parent=1 // loop_footer
      %s13 = sadd.s32 1, %s9
    $region7: #{multi_scale_attention.4} parent=1 // loop_footer_branch
      %8 = sbr.rel target = $region3
    $region8: #{multi_scale_attention.4} parent=1 // loop_exit
      _

</llo_original>
